<compile_context>
chip_gen: v5e
topology: v5e:2x2
jax: 0.10.0
libtpu: 0.0.40
codegen_flags: <defaults>
</compile_context>

<pallas_src>
import functools

import jax
import jax.numpy as jnp
from jax.experimental import pallas as pl
from jax.experimental.pallas import tpu as pltpu

NZP = 128   # fc2 / latent output channels padded to a full lane group (real: latent_dim)


# ------------------------------ small helpers --------------------------------

def _compiler_params():
    # 1-D "parallel" grid everywhere; explicit scoped-VMEM budget that is safe on
    # every generation (v7x: 64 MiB physical, v5e/v6e: 128 MiB).
    return pltpu.CompilerParams(
        dimension_semantics=("parallel",),
        vmem_limit_bytes=32 * 1024 * 1024,
    )


def _pick_batch_tile(b, max_tile=8):
    """Images per conv grid step: divides b, <= max_tile, leaves >= 2 grid steps."""
    if b <= 1:
        return max(b, 1)
    t = min(max_tile, b // 2)
    while t >= 1:
        if b % t == 0:
            return t
        t -= 1
    return 1


def _pick_m_tile(m, target, align=16):
    """Largest `align`-aligned tile <= target dividing m, preferring >= 2 steps."""
    if m <= align:
        return m
    best = None
    t = min(target, m)
    t -= t % align
    while t >= align:
        if m % t == 0:
            if best is None:
                best = t
            if m // t >= 2:
                return t
        t -= align
    return best if best is not None else m


# --------------- kernel 1: fused conv1 + ReLU + conv2 + ReLU ------------------

def _conv_stack_kernel(p1_ref, w1_ref, b1_ref, w2_ref, b2_ref, o_ref, *, bt):
    """Fused conv1(1->32, 3x3, s2, p1) + ReLU + conv2(32->64, 3x3, s2, p1) + ReLU.

    p1_ref : (bt, 196, 9) bf16   conv1 im2col patches; per image the 196 rows are
             ordered (quadrant q = 2*row_parity + col_parity, i', j') so that the
             conv1 output pixel is (h, w) = (2*i' + row_parity, 2*j' + col_parity).
    o_ref  : (bt, 49, 64) bf16   conv2 output, rows ordered (i, j), channels last.
    """
    w1 = w1_ref[...]                                   # (9, 32)   bf16
    b1 = b1_ref[...]                                   # (1, 32)   f32
    w2 = w2_ref[...]                                   # (288, 64) bf16
    b2 = b2_ref[...]                                   # (1, 64)   f32

    # ---- conv1: one GEMM over all bt images of the block ----------------------
    if bt > 1:
        p1 = jnp.concatenate([p1_ref[i] for i in range(bt)], axis=0)
    else:
        p1 = p1_ref[0]                                 # (bt*196, 9)
    h1 = jnp.dot(p1, w1, preferred_element_type=jnp.float32)
    h1 = jnp.maximum(h1 + b1, 0.0).astype(jnp.bfloat16)   # (bt*196, 32)

    # ---- conv2 im2col from the parity quadrants of h1 -------------------------
    # Quadrants per image (49 rows each, laid out (i', j'), i', j' in 0..6):
    #   EE even-row/even-col, EO even/odd, OE odd/even, OO odd/odd.
    # Output pixel (i, j) taps conv1 pixel (2i+dh-1, 2j+dw-1); in quadrant space
    # every tap is either a quadrant as-is or the quadrant shifted down by 1/7/8
    # flat rows, with rows that fall off the left image border (j == 0) masked.
    jj = jax.lax.broadcasted_iota(jnp.int32, (49, 1), 0) % 7
    mask_j0 = (jj != 0).astype(jnp.bfloat16)           # zero where j == 0
    z1 = jnp.zeros((1, 32), jnp.bfloat16)
    z7 = jnp.zeros((7, 32), jnp.bfloat16)
    z8 = jnp.zeros((8, 32), jnp.bfloat16)

    def shift(x, n, zblk):
        return jnp.concatenate([zblk, x[: 49 - n]], axis=0)

    patches = []
    for i in range(bt):
        base = i * 196
        ee = h1[base + 0:base + 49]
        eo = h1[base + 49:base + 98]
        oe = h1[base + 98:base + 147]
        oo = h1[base + 147:base + 196]
        taps = [
            shift(oo, 8, z8) * mask_j0,   # (kh=0, kw=0)
            shift(oe, 7, z7),             # (0, 1)
            shift(oo, 7, z7),             # (0, 2)
            shift(eo, 1, z1) * mask_j0,   # (1, 0)
            ee,                           # (1, 1)
            eo,                           # (1, 2)
            shift(oo, 1, z1) * mask_j0,   # (2, 0)
            oe,                           # (2, 1)
            oo,                           # (2, 2)
        ]
        patches.append(jnp.concatenate(taps, axis=-1))        # (49, 288)
    pm = jnp.concatenate(patches, axis=0) if bt > 1 else patches[0]

    # ---- conv2: single GEMM per grid step, bias + ReLU fused -------------------
    h2 = jnp.dot(pm, w2, preferred_element_type=jnp.float32)  # (bt*49, 64)
    h2 = jnp.maximum(h2 + b2, 0.0).astype(o_ref.dtype)
    for i in range(bt):
        o_ref[i] = h2[i * 49:(i + 1) * 49]


def conv_stack(p1, w1, b1, w2, b2):
    """(B, 196, 9) bf16 conv1 patches -> (B, 49, 64) bf16 conv2 activations."""
    B = p1.shape[0]
    bt = _pick_batch_tile(B)
    flops = 2 * B * 196 * 9 * 32 + 2 * B * 49 * 288 * 64
    bytes_accessed = (2 * p1.size + 2 * (w1.size + w2.size)
                      + 4 * (b1.size + b2.size) + 2 * B * 49 * 64)
    return pl.pallas_call(
        functools.partial(_conv_stack_kernel, bt=bt),
        out_shape=jax.ShapeDtypeStruct((B, 49, 64), jnp.bfloat16),
        grid=(B // bt,),
        in_specs=[
            pl.BlockSpec((bt, 196, 9), lambda m: (m, 0, 0)),
            pl.BlockSpec((9, 32), lambda m: (0, 0)),
            pl.BlockSpec((1, 32), lambda m: (0, 0)),
            pl.BlockSpec((288, 64), lambda m: (0, 0)),
            pl.BlockSpec((1, 64), lambda m: (0, 0)),
        ],
        out_specs=pl.BlockSpec((bt, 49, 64), lambda m: (m, 0, 0)),
        compiler_params=_compiler_params(),
        cost_estimate=pl.CostEstimate(flops=flops, transcendentals=0,
                                      bytes_accessed=bytes_accessed),
    )(p1, w1, b1.reshape(1, 32), w2, b2.reshape(1, 64))


# ------------------- kernel 2: fused fc1 + ReLU + fc2 -------------------------

def _mlp_head_kernel(x_ref, w1_ref, b1_ref, w2_ref, b2_ref, o_ref):
    h = jnp.dot(x_ref[...].astype(jnp.bfloat16), w1_ref[...],
                preferred_element_type=jnp.float32)
    h = jnp.maximum(h + b1_ref[...], 0.0)
    z = jnp.dot(h.astype(jnp.bfloat16), w2_ref[...],
                preferred_element_type=jnp.float32)
    o_ref[...] = (z + b2_ref[...]).astype(o_ref.dtype)


def mlp_head(x, w1, b1, w2, b2, *, m_tile=512):
    """z = relu(x @ w1 + b1) @ w2 + b2 in one pallas_call (bf16 x, f32 out)."""
    M, K = x.shape
    N1, N2 = w1.shape[1], w2.shape[1]
    tm = _pick_m_tile(M, m_tile)
    flops = 2 * M * K * N1 + 2 * M * N1 * N2
    bytes_accessed = (x.dtype.itemsize * M * K + 2 * (K * N1 + N1 * N2)
                      + 4 * (N1 + N2) + 4 * M * N2)
    return pl.pallas_call(
        _mlp_head_kernel,
        out_shape=jax.ShapeDtypeStruct((M, N2), jnp.float32),
        grid=(M // tm,),
        in_specs=[
            pl.BlockSpec((tm, K), lambda i: (i, 0)),
            pl.BlockSpec((K, N1), lambda i: (0, 0)),
            pl.BlockSpec((1, N1), lambda i: (0, 0)),
            pl.BlockSpec((N1, N2), lambda i: (0, 0)),
            pl.BlockSpec((1, N2), lambda i: (0, 0)),
        ],
        out_specs=pl.BlockSpec((tm, N2), lambda i: (i, 0)),
        compiler_params=_compiler_params(),
        cost_estimate=pl.CostEstimate(flops=flops, transcendentals=0,
                                      bytes_accessed=bytes_accessed),
    )(x, w1, b1.reshape(1, N1), w2, b2.reshape(1, N2))


# ------------------------------ parameters ------------------------------------

def init_params(key, latent_dim=2):
    """PyTorch-style uniform(-1/sqrt(fan_in), 1/sqrt(fan_in)) init.

    Linear weights are stored (in_features, out_features); a real PyTorch
    state_dict stores (out, in) and would need a transpose before prepare_params.
    """
    ks = jax.random.split(key, 8)

    def u(k, shape, fan_in):
        bound = 1.0 / jnp.sqrt(jnp.float32(fan_in))
        return jax.random.uniform(k, shape, jnp.float32, -bound, bound)

    return {
        "conv1_w": u(ks[0], (32, 1, 3, 3), 1 * 9),
        "conv1_b": u(ks[1], (32,), 1 * 9),
        "conv2_w": u(ks[2], (64, 32, 3, 3), 32 * 9),
        "conv2_b": u(ks[3], (64,), 32 * 9),
        "fc1_w": u(ks[4], (64 * 7 * 7, 256), 64 * 7 * 7),
        "fc1_b": u(ks[5], (256,), 64 * 7 * 7),
        "fc2_w": u(ks[6], (256, latent_dim), 256),
        "fc2_b": u(ks[7], (latent_dim,), 256),
    }


def prepare_params(params, latent_dim=2):
    """One-time conversion into the kernel layouts (no zero channel padding)."""
    # conv1: (32,1,3,3) -> (9, 32), rows ordered (kh, kw).
    w1 = params["conv1_w"].transpose(2, 3, 1, 0).reshape(9, 32)
    # conv2: (64,32,3,3) -> (288, 64), rows ordered (kh, kw, cin).
    w2 = params["conv2_w"].transpose(2, 3, 1, 0).reshape(9 * 32, 64)
    # fc1: PyTorch's NCHW flatten orders rows (c, h, w); permute once to the
    # (h, w, c) order produced by the conv kernel's (B, 49, 64) output.
    wf1 = params["fc1_w"].reshape(64, 7, 7, 256).transpose(1, 2, 0, 3)
    wf1 = wf1.reshape(49 * 64, 256)
    # fc2: pad the latent output to a full lane group; sliced off outside.
    wf2 = jnp.pad(params["fc2_w"], ((0, 0), (0, NZP - latent_dim)))
    bf2 = jnp.pad(params["fc2_b"], (0, NZP - latent_dim))
    return {
        "conv1_w": w1.astype(jnp.bfloat16), "conv1_b": params["conv1_b"].astype(jnp.float32),
        "conv2_w": w2.astype(jnp.bfloat16), "conv2_b": params["conv2_b"].astype(jnp.float32),
        "fc1_w": wf1.astype(jnp.bfloat16), "fc1_b": params["fc1_b"].astype(jnp.float32),
        "fc2_w": wf2.astype(jnp.bfloat16), "fc2_b": bf2.astype(jnp.float32),
    }


# -------------------------------- forward -------------------------------------

def _conv1_patches(x):
    """(B,1,28,28) f32 -> (B, 196, 9) bf16 conv1 im2col patches (quadrant-major).

    Row order per image: (q, i', j') with q = 2*row_parity + col_parity and the
    conv1 output pixel (h, w) = (2*i' + row_parity, 2*j' + col_parity); the tap
    columns are ordered (kh, kw).  Each tap is one cheap XLA strided slice of the
    padded raw image (~3.6 KB/img), so no conv1 activation ever touches HBM.
    """
    B = x.shape[0]
    xp = jnp.pad(x.reshape(B, 28, 28), ((0, 0), (1, 1), (1, 1)))     # (B, 30, 30)
    quads = []
    for ip in range(2):
        for jp in range(2):
            taps = [xp[:, 2 * ip + dh: 2 * ip + dh + 25: 4,
                        2 * jp + dw: 2 * jp + dw + 25: 4]
                    for dh in range(3) for dw in range(3)]           # 9 x (B,7,7)
            quads.append(jnp.stack(taps, axis=-1))                   # (B,7,7,9)
    p1 = jnp.stack(quads, axis=1)                                    # (B,4,7,7,9)
    return p1.reshape(B, 196, 9).astype(jnp.bfloat16)


@functools.partial(jax.jit, static_argnames=("latent_dim",))
def cnn_encoder(prepped, x, *, latent_dim=2):
    """x: (B, 1, 28, 28) float32 NCHW (PyTorch layout) -> z: (B, latent_dim) f32."""
    B = x.shape[0]
    p1 = _conv1_patches(x.astype(jnp.float32))
    h2 = conv_stack(p1, prepped["conv1_w"], prepped["conv1_b"],
                    prepped["conv2_w"], prepped["conv2_b"])          # (B, 49, 64) bf16
    h2f = h2.reshape(B, 49 * 64)                                     # (h, w, c) flatten
    z = mlp_head(h2f, prepped["fc1_w"], prepped["fc1_b"],
                 prepped["fc2_w"], prepped["fc2_b"])                 # (B, 128) f32
    return z[:, :latent_dim]


# ------------------------------ reference & main ------------------------------

def _reference_forward(params, x):
    """Pure-JAX f32 reference with the same bf16 rounding of weights and inputs."""
    r = lambda a: a.astype(jnp.bfloat16).astype(jnp.float32)
    h = jax.lax.conv_general_dilated(r(x), r(params["conv1_w"]), (2, 2),
                                     ((1, 1), (1, 1)),
                                     dimension_numbers=("NCHW", "OIHW", "NCHW"))
    h = jax.nn.relu(h + params["conv1_b"][None, :, None, None])
    h = jax.lax.conv_general_dilated(h, r(params["conv2_w"]), (2, 2),
                                     ((1, 1), (1, 1)),
                                     dimension_numbers=("NCHW", "OIHW", "NCHW"))
    h = jax.nn.relu(h + params["conv2_b"][None, :, None, None])
    h = h.reshape(x.shape[0], -1)                                    # NCHW flatten
    h = jax.nn.relu(h @ r(params["fc1_w"]) + params["fc1_b"])
    return h @ r(params["fc2_w"]) + params["fc2_b"]


if __name__ == "__main__":
    key = jax.random.PRNGKey(0)
    pkey, xkey = jax.random.split(key)
    latent_dim = 2
    params = init_params(pkey, latent_dim=latent_dim)
    prepped = prepare_params(params, latent_dim=latent_dim)
    x = jax.random.normal(xkey, (2, 1, 28, 28), dtype=jnp.float32)

    z = cnn_encoder(prepped, x, latent_dim=latent_dim)
    z = jax.block_until_ready(z)
    assert z.shape == (2, latent_dim) and z.dtype == jnp.float32

    z_ref = _reference_forward(params, x)
    assert float(jnp.max(jnp.abs(z - z_ref))) < 2e-2, "kernel output mismatch"
    print("KERNEL_OK")
</pallas_src>

<mosaic_0001>
module attributes {stable_mosaic.version = 11 : i64} {
  func.func @_conv_stack_kernel(%arg0: i32, %arg1: memref<1x196x9xbf16, #tpu.memory_space<vmem>>, %arg2: memref<9x32xbf16, #tpu.memory_space<vmem>>, %arg3: memref<1x32xf32, #tpu.memory_space<vmem>>, %arg4: memref<288x64xbf16, #tpu.memory_space<vmem>>, %arg5: memref<1x64xf32, #tpu.memory_space<vmem>>, %arg6: memref<1x49x64xbf16, #tpu.memory_space<vmem>>) attributes {dimension_semantics = [#tpu.dimension_semantics<parallel>], iteration_bounds = array<i64: 2>, scalar_prefetch = 0 : i64, scratch_operands = 0 : i64, tpu.core_type = #tpu.core_type<tc>, window_params = [{transform_indices = @transform_0, window_bounds = array<i64: 1, 196, 9>}, {pipeline_mode = #tpu.pipeline_mode<synchronous>, transform_indices = @transform_1, window_bounds = array<i64: 9, 32>}, {pipeline_mode = #tpu.pipeline_mode<synchronous>, transform_indices = @transform_2, window_bounds = array<i64: 1, 32>}, {pipeline_mode = #tpu.pipeline_mode<synchronous>, transform_indices = @transform_3, window_bounds = array<i64: 288, 64>}, {pipeline_mode = #tpu.pipeline_mode<synchronous>, transform_indices = @transform_4, window_bounds = array<i64: 1, 64>}, {transform_indices = @transform_5, window_bounds = array<i64: 1, 49, 64>}]} {
    %c0 = arith.constant 0 : index
    %c0_0 = arith.constant 0 : index
    %0 = vector.load %arg2[%c0, %c0_0] : memref<9x32xbf16, #tpu.memory_space<vmem>>, vector<9x32xbf16>
    %c0_1 = arith.constant 0 : index
    %c0_2 = arith.constant 0 : index
    %1 = vector.load %arg3[%c0_1, %c0_2] : memref<1x32xf32, #tpu.memory_space<vmem>>, vector<1x32xf32>
    %c0_3 = arith.constant 0 : index
    %c0_4 = arith.constant 0 : index
    %2 = vector.load %arg4[%c0_3, %c0_4] : memref<288x64xbf16, #tpu.memory_space<vmem>>, vector<288x64xbf16>
    %c0_5 = arith.constant 0 : index
    %c0_6 = arith.constant 0 : index
    %3 = vector.load %arg5[%c0_5, %c0_6] : memref<1x64xf32, #tpu.memory_space<vmem>>, vector<1x64xf32>
    %c0_7 = arith.constant 0 : index
    %c0_8 = arith.constant 0 : index
    %c0_9 = arith.constant 0 : index
    %4 = vector.load %arg1[%c0_7, %c0_8, %c0_9] : memref<1x196x9xbf16, #tpu.memory_space<vmem>>, vector<1x196x9xbf16>
    %5 = vector.shape_cast %4 : vector<1x196x9xbf16> to vector<196x9xbf16>
    %cst = arith.constant dense<0.000000e+00> : vector<196x32xf32>
    %6 = tpu.matmul %5, %0, %cst {dimension_numbers = #tpu.dot_dimension_numbers<[1], [0], [0], [1], [0, 0, 1, 1], [], []>} : vector<196x9xbf16>, vector<9x32xbf16>, vector<196x32xf32> -> vector<196x32xf32>
    %7 = vector.broadcast %1 : vector<1x32xf32> to vector<196x32xf32>
    %8 = arith.addf %6, %7 : vector<196x32xf32>
    %cst_10 = arith.constant 0.000000e+00 : f32
    %9 = vector.broadcast %cst_10 : f32 to vector<196x32xf32>
    %10 = arith.maximumf %8, %9 : vector<196x32xf32>
    %11 = arith.truncf %10 : vector<196x32xf32> to vector<196x32xbf16>
    %12 = tpu.iota {dimensions = array<i32: 0>} : vector<49x1xi32>
    %c7_i32 = arith.constant 7 : i32
    %c0_i32 = arith.constant 0 : i32
    %13 = arith.cmpi eq, %c7_i32, %c0_i32 : i32
    %c1_i32 = arith.constant 1 : i32
    %14 = arith.select %13, %c1_i32, %c7_i32 : i32
    %15 = vector.broadcast %14 : i32 to vector<49x1xi32>
    %16 = arith.remsi %12, %15 : vector<49x1xi32>
    %c0_i32_11 = arith.constant 0 : i32
    %17 = vector.broadcast %c0_i32_11 : i32 to vector<49x1xi32>
    %18 = arith.cmpi ne, %16, %17 : vector<49x1xi32>
    %c0_i32_12 = arith.constant 0 : i32
    %19 = vector.broadcast %c0_i32_12 : i32 to vector<49x1xi32>
    %20 = arith.cmpi slt, %16, %19 : vector<49x1xi32>
    %c0_i32_13 = arith.constant 0 : i32
    %21 = arith.cmpi slt, %14, %c0_i32_13 : i32
    %22 = vector.broadcast %21 : i1 to vector<49x1xi1>
    %23 = vector.broadcast %22 : vector<49x1xi1> to vector<49x1xi1>
    %24 = arith.xori %20, %23 : vector<49x1xi1>
    %25 = arith.andi %24, %18 : vector<49x1xi1>
    %26 = vector.broadcast %14 : i32 to vector<49x1xi32>
    %27 = arith.addi %16, %26 : vector<49x1xi32>
    %28 = arith.select %25, %27, %16 : vector<49x1xi1>, vector<49x1xi32>
    %c0_i32_14 = arith.constant 0 : i32
    %29 = vector.broadcast %c0_i32_14 : i32 to vector<49x1xi32>
    %30 = arith.cmpi ne, %28, %29 : vector<49x1xi32>
    %31 = arith.extui %30 : vector<49x1xi1> to vector<49x1xi32>
    %32 = arith.sitofp %31 : vector<49x1xi32> to vector<49x1xf32>
    %33 = arith.truncf %32 : vector<49x1xf32> to vector<49x1xbf16>
    %cst_15 = arith.constant 0.000000e+00 : bf16
    %34 = vector.broadcast %cst_15 : bf16 to vector<1x32xbf16>
    %cst_16 = arith.constant 0.000000e+00 : bf16
    %35 = vector.broadcast %cst_16 : bf16 to vector<7x32xbf16>
    %cst_17 = arith.constant 0.000000e+00 : bf16
    %36 = vector.broadcast %cst_17 : bf16 to vector<8x32xbf16>
    %37 = vector.extract_strided_slice %11 {offsets = [0, 0], sizes = [49, 32], strides = [1, 1]} : vector<196x32xbf16> to vector<49x32xbf16>
    %38 = vector.extract_strided_slice %11 {offsets = [49, 0], sizes = [49, 32], strides = [1, 1]} : vector<196x32xbf16> to vector<49x32xbf16>
    %39 = vector.extract_strided_slice %11 {offsets = [98, 0], sizes = [49, 32], strides = [1, 1]} : vector<196x32xbf16> to vector<49x32xbf16>
    %40 = vector.extract_strided_slice %11 {offsets = [147, 0], sizes = [49, 32], strides = [1, 1]} : vector<196x32xbf16> to vector<49x32xbf16>
    %41 = vector.extract_strided_slice %40 {offsets = [0, 0], sizes = [41, 32], strides = [1, 1]} : vector<49x32xbf16> to vector<41x32xbf16>
    %42 = tpu.concatenate %36, %41 in 0 : vector<8x32xbf16>, vector<41x32xbf16> -> vector<49x32xbf16>
    %43 = vector.broadcast %33 : vector<49x1xbf16> to vector<49x32xbf16>
    %44 = arith.mulf %42, %43 : vector<49x32xbf16>
    %45 = vector.extract_strided_slice %39 {offsets = [0, 0], sizes = [42, 32], strides = [1, 1]} : vector<49x32xbf16> to vector<42x32xbf16>
    %46 = tpu.concatenate %35, %45 in 0 : vector<7x32xbf16>, vector<42x32xbf16> -> vector<49x32xbf16>
    %47 = vector.extract_strided_slice %40 {offsets = [0, 0], sizes = [42, 32], strides = [1, 1]} : vector<49x32xbf16> to vector<42x32xbf16>
    %48 = tpu.concatenate %35, %47 in 0 : vector<7x32xbf16>, vector<42x32xbf16> -> vector<49x32xbf16>
    %49 = vector.extract_strided_slice %38 {offsets = [0, 0], sizes = [48, 32], strides = [1, 1]} : vector<49x32xbf16> to vector<48x32xbf16>
    %50 = tpu.concatenate %34, %49 in 0 : vector<1x32xbf16>, vector<48x32xbf16> -> vector<49x32xbf16>
    %51 = vector.broadcast %33 : vector<49x1xbf16> to vector<49x32xbf16>
    %52 = arith.mulf %50, %51 : vector<49x32xbf16>
    %53 = vector.extract_strided_slice %40 {offsets = [0, 0], sizes = [48, 32], strides = [1, 1]} : vector<49x32xbf16> to vector<48x32xbf16>
    %54 = tpu.concatenate %34, %53 in 0 : vector<1x32xbf16>, vector<48x32xbf16> -> vector<49x32xbf16>
    %55 = vector.broadcast %33 : vector<49x1xbf16> to vector<49x32xbf16>
    %56 = arith.mulf %54, %55 : vector<49x32xbf16>
    %57 = tpu.concatenate %44, %46, %48, %52, %37, %38, %56, %39, %40 in 1 : vector<49x32xbf16>, vector<49x32xbf16>, vector<49x32xbf16>, vector<49x32xbf16>, vector<49x32xbf16>, vector<49x32xbf16>, vector<49x32xbf16>, vector<49x32xbf16>, vector<49x32xbf16> -> vector<49x288xbf16>
    %cst_18 = arith.constant dense<0.000000e+00> : vector<49x64xf32>
    %58 = tpu.matmul %57, %2, %cst_18 {dimension_numbers = #tpu.dot_dimension_numbers<[1], [0], [0], [1], [0, 0, 1, 1], [], []>} : vector<49x288xbf16>, vector<288x64xbf16>, vector<49x64xf32> -> vector<49x64xf32>
    %59 = vector.broadcast %3 : vector<1x64xf32> to vector<49x64xf32>
    %60 = arith.addf %58, %59 : vector<49x64xf32>
    %cst_19 = arith.constant 0.000000e+00 : f32
    %61 = vector.broadcast %cst_19 : f32 to vector<49x64xf32>
    %62 = arith.maximumf %60, %61 : vector<49x64xf32>
    %63 = arith.truncf %62 : vector<49x64xf32> to vector<49x64xbf16>
    %c0_20 = arith.constant 0 : index
    %c0_21 = arith.constant 0 : index
    %c0_22 = arith.constant 0 : index
    %64 = vector.load %arg6[%c0_20, %c0_21, %c0_22] : memref<1x49x64xbf16, #tpu.memory_space<vmem>>, vector<1x49x64xbf16>
    %65 = vector.shape_cast %64 : vector<1x49x64xbf16> to vector<49x64xbf16>
    %66 = vector.shape_cast %63 : vector<49x64xbf16> to vector<1x49x64xbf16>
    tpu.vector_store %arg6[%c0_20, %c0_21, %c0_22], %66 {strides = array<i32>} : memref<1x49x64xbf16, #tpu.memory_space<vmem>>, vector<1x49x64xbf16>,
    return
  }
  func.func @transform_0(%arg0: i32) -> (i32, i32, i32) {
    %c0_i32 = arith.constant 0 : i32
    %c0_i32_0 = arith.constant 0 : i32
    %c0_i32_1 = arith.constant 0 : i32
    return %arg0, %c0_i32, %c0_i32_0 : i32, i32, i32
  }
  func.func @transform_1(%arg0: i32) -> (i32, i32) {
    %c0_i32 = arith.constant 0 : i32
    %c0_i32_0 = arith.constant 0 : i32
    %c0_i32_1 = arith.constant 0 : i32
    return %c0_i32, %c0_i32_0 : i32, i32
  }
  func.func @transform_2(%arg0: i32) -> (i32, i32) {
    %c0_i32 = arith.constant 0 : i32
    %c0_i32_0 = arith.constant 0 : i32
    %c0_i32_1 = arith.constant 0 : i32
    return %c0_i32, %c0_i32_0 : i32, i32
  }
  func.func @transform_3(%arg0: i32) -> (i32, i32) {
    %c0_i32 = arith.constant 0 : i32
    %c0_i32_0 = arith.constant 0 : i32
    %c0_i32_1 = arith.constant 0 : i32
    return %c0_i32, %c0_i32_0 : i32, i32
  }
  func.func @transform_4(%arg0: i32) -> (i32, i32) {
    %c0_i32 = arith.constant 0 : i32
    %c0_i32_0 = arith.constant 0 : i32
    %c0_i32_1 = arith.constant 0 : i32
    return %c0_i32, %c0_i32_0 : i32, i32
  }
  func.func @transform_5(%arg0: i32) -> (i32, i32, i32) {
    %c0_i32 = arith.constant 0 : i32
    %c0_i32_0 = arith.constant 0 : i32
    %c0_i32_1 = arith.constant 0 : i32
    return %arg0, %c0_i32, %c0_i32_0 : i32, i32, i32
  }
}

module attributes {stable_mosaic.version = 11 : i64} {
  func.func @_mlp_head_kernel(%arg0: i32, %arg1: memref<2x3136xbf16, #tpu.memory_space<vmem>>, %arg2: memref<3136x256xbf16, #tpu.memory_space<vmem>>, %arg3: memref<1x256xf32, #tpu.memory_space<vmem>>, %arg4: memref<256x128xbf16, #tpu.memory_space<vmem>>, %arg5: memref<1x128xf32, #tpu.memory_space<vmem>>, %arg6: memref<2x128xf32, #tpu.memory_space<vmem>>) attributes {dimension_semantics = [#tpu.dimension_semantics<parallel>], iteration_bounds = array<i64: 1>, scalar_prefetch = 0 : i64, scratch_operands = 0 : i64, tpu.core_type = #tpu.core_type<tc>, window_params = [{transform_indices = @transform_0, window_bounds = array<i64: 2, 3136>}, {pipeline_mode = #tpu.pipeline_mode<synchronous>, transform_indices = @transform_1, window_bounds = array<i64: 3136, 256>}, {pipeline_mode = #tpu.pipeline_mode<synchronous>, transform_indices = @transform_2, window_bounds = array<i64: 1, 256>}, {pipeline_mode = #tpu.pipeline_mode<synchronous>, transform_indices = @transform_3, window_bounds = array<i64: 256, 128>}, {pipeline_mode = #tpu.pipeline_mode<synchronous>, transform_indices = @transform_4, window_bounds = array<i64: 1, 128>}, {transform_indices = @transform_5, window_bounds = array<i64: 2, 128>}]} {
    %c0 = arith.constant 0 : index
    %c0_0 = arith.constant 0 : index
    %0 = vector.load %arg1[%c0, %c0_0] : memref<2x3136xbf16, #tpu.memory_space<vmem>>, vector<2x3136xbf16>
    %c0_1 = arith.constant 0 : index
    %c0_2 = arith.constant 0 : index
    %1 = vector.load %arg2[%c0_1, %c0_2] : memref<3136x256xbf16, #tpu.memory_space<vmem>>, vector<3136x256xbf16>
    %cst = arith.constant dense<0.000000e+00> : vector<2x256xf32>
    %2 = tpu.matmul %0, %1, %cst {dimension_numbers = #tpu.dot_dimension_numbers<[1], [0], [0], [1], [0, 0, 1, 1], [], []>} : vector<2x3136xbf16>, vector<3136x256xbf16>, vector<2x256xf32> -> vector<2x256xf32>
    %c0_3 = arith.constant 0 : index
    %c0_4 = arith.constant 0 : index
    %3 = vector.load %arg3[%c0_3, %c0_4] : memref<1x256xf32, #tpu.memory_space<vmem>>, vector<1x256xf32>
    %4 = vector.broadcast %3 : vector<1x256xf32> to vector<2x256xf32>
    %5 = arith.addf %2, %4 : vector<2x256xf32>
    %cst_5 = arith.constant 0.000000e+00 : f32
    %6 = vector.broadcast %cst_5 : f32 to vector<2x256xf32>
    %7 = arith.maximumf %5, %6 : vector<2x256xf32>
    %8 = arith.truncf %7 : vector<2x256xf32> to vector<2x256xbf16>
    %c0_6 = arith.constant 0 : index
    %c0_7 = arith.constant 0 : index
    %9 = vector.load %arg4[%c0_6, %c0_7] : memref<256x128xbf16, #tpu.memory_space<vmem>>, vector<256x128xbf16>
    %cst_8 = arith.constant dense<0.000000e+00> : vector<2x128xf32>
    %10 = tpu.matmul %8, %9, %cst_8 {dimension_numbers = #tpu.dot_dimension_numbers<[1], [0], [0], [1], [0, 0, 1, 1], [], []>} : vector<2x256xbf16>, vector<256x128xbf16>, vector<2x128xf32> -> vector<2x128xf32>
    %c0_9 = arith.constant 0 : index
    %c0_10 = arith.constant 0 : index
    %11 = vector.load %arg5[%c0_9, %c0_10] : memref<1x128xf32, #tpu.memory_space<vmem>>, vector<1x128xf32>
    %12 = vector.broadcast %11 : vector<1x128xf32> to vector<2x128xf32>
    %13 = arith.addf %10, %12 : vector<2x128xf32>
    %c0_11 = arith.constant 0 : index
    %c0_12 = arith.constant 0 : index
    %14 = vector.load %arg6[%c0_11, %c0_12] : memref<2x128xf32, #tpu.memory_space<vmem>>, vector<2x128xf32>
    tpu.vector_store %arg6[%c0_11, %c0_12], %13 {strides = array<i32>} : memref<2x128xf32, #tpu.memory_space<vmem>>, vector<2x128xf32>,
    return
  }
  func.func @transform_0(%arg0: i32) -> (i32, i32) {
    %c0_i32 = arith.constant 0 : i32
    %c0_i32_0 = arith.constant 0 : i32
    return %arg0, %c0_i32 : i32, i32
  }
  func.func @transform_1(%arg0: i32) -> (i32, i32) {
    %c0_i32 = arith.constant 0 : i32
    %c0_i32_0 = arith.constant 0 : i32
    %c0_i32_1 = arith.constant 0 : i32
    return %c0_i32, %c0_i32_0 : i32, i32
  }
  func.func @transform_2(%arg0: i32) -> (i32, i32) {
    %c0_i32 = arith.constant 0 : i32
    %c0_i32_0 = arith.constant 0 : i32
    %c0_i32_1 = arith.constant 0 : i32
    return %c0_i32, %c0_i32_0 : i32, i32
  }
  func.func @transform_3(%arg0: i32) -> (i32, i32) {
    %c0_i32 = arith.constant 0 : i32
    %c0_i32_0 = arith.constant 0 : i32
    %c0_i32_1 = arith.constant 0 : i32
    return %c0_i32, %c0_i32_0 : i32, i32
  }
  func.func @transform_4(%arg0: i32) -> (i32, i32) {
    %c0_i32 = arith.constant 0 : i32
    %c0_i32_0 = arith.constant 0 : i32
    %c0_i32_1 = arith.constant 0 : i32
    return %c0_i32, %c0_i32_0 : i32, i32
  }
  func.func @transform_5(%arg0: i32) -> (i32, i32) {
    %c0_i32 = arith.constant 0 : i32
    %c0_i32_0 = arith.constant 0 : i32
    return %arg0, %c0_i32 : i32, i32
  }
}

</mosaic_0001>

<llo_original>
// kernel: cnn_encoder.2
$region0: #{cnn_encoder.2}
  #allocation0 [shape = 'u32[]', space=smem, size = 0x4, offset = 0x4, fixed_abs, tag = 'smem constant byte address 0x4 - core index']
  #allocation1 [shape = 'u32[72,128]{1,0:T(1,128)}', space=vmem, size = 0x9000, scoped, tag = 'internal scratch']
  %s0 = inlined_call_operand.vmem [shape: bf16[2,196,9], index: 0, kind: input, shape index: {}]
  %s1 = inlined_call_operand.hbm [shape: bf16[9,32], index: 1, kind: input, shape index: {}]
  %s2 = inlined_call_operand.hbm [shape: f32[1,32], index: 2, kind: input, shape index: {}]
  %s3 = inlined_call_operand.vmem [shape: bf16[288,64], index: 3, kind: input, shape index: {}]
  %s4 = inlined_call_operand.hbm [shape: f32[1,64], index: 4, kind: input, shape index: {}]
  %s5 = inlined_call_operand.vmem [shape: bf16[2,49,64], index: 5, kind: output, shape index: {}]
  %s6 = sld [smem:[#allocation0]]
  $region65: #{cnn_encoder.2} parent=0
    _
  %s8 = ssub.s32 1, %s6
  %s9 = scalar_select 0, %s8, %s6
  $region1: #{cnn_encoder.2} parent=0
    #allocation2 [shape = 'u8[4096]{0}', space=vmem, size = 0x1000, scoped, tag = 'input window, operand 1, single buffered']
    #allocation3 [shape = 's32[2]{0}', space=sflag, size = 0x8, scoped, tag = 'scoped memory for cnn_encoder.2']
    #allocation4 [shape = 'u8[512]{0}', space=vmem, size = 0x400, scoped, tag = 'input window, operand 2, single buffered']
    #allocation5 [shape = 's32[1]{0}', space=sflag, size = 0x4, scoped, tag = 'scoped memory for cnn_encoder.2']
    #allocation6 [shape = 'u8[512]{0}', space=vmem, size = 0x400, scoped, tag = 'input window, operand 4, single buffered']
    %10 = vsyncpa [#allocation3], 0
    %11 = vsyncpa [#allocation5], 0
    loop: start=0, step=1, limit=4
    $region2: #{cnn_encoder.2} parent=1 // loop_pre_header
      _
    $region3: #{cnn_encoder.2} parent=1 // loop_header
      %s13 = sphi 0, %s17
      %p14 = scmp.ge.s32.totalorder %s13, 4
      %s23 = sphi 0, %s25
      %s26 = sphi 0, %s23
      %s27 = sphi 0, %s26
      %s43 = sphi 0, %s27
      %s47 = sphi 0, %s47
      %s49 = sphi 0, %s47
      %s50 = sphi 0, %s49
      %s64 = sphi 0, %s50
      %s68 = sphi 0, %s68
      %s70 = sphi 0, %s68
      %s71 = sphi 0, %s70
      %s85 = sphi 0, %s71
      %s89 = sphi 0, %s89
      %s91 = sphi 0, %s89
      %s92 = sphi 0, %s91
      %s106 = sphi 0, %s92
      %s110 = sphi 0, %s110
      %s112 = sphi 0, %s110
      %s113 = sphi 0, %s112
      %s127 = sphi 0, %s113
      %s133 = sphi 0, %s135
      %s136 = sphi 0, %s133
      %s137 = sphi 0, %s136
      %s153 = sphi 0, %s137
    $region4: #{cnn_encoder.2} parent=1 // loop_header_branch
      %16 = sbr.rel (%p14) target = $region8
    $region5: #{cnn_encoder.2} parent=1 // loop_body
      %s18 = ssub.s32 %s13, 1
      %s19 = ssub.s32 %s13, 2
      %s20 = sadd.s32 %s13, 1
      %s21 = ssub.s32 %s13, %s20
      %p22 = scmp.eq.s32.totalorder %s21, 0
      %s24 = sadd.s32 %s23, 1
      %s25 = scalar_select %p22, %s23, %s24
      %p28 = pneg %p22
      %p29 = scmp.eq.s32.totalorder %s13, 1
      %p30 = por %p28, %p29
      %p31 = scmp.ne.s32.totalorder %s23, %s26
      %p32 = scmp.eq.s32.totalorder %s13, 0
      %p33 = por %p31, %p32
      %p34 = scmp.ne.s32.totalorder %s23, %s26
      %p35 = scmp.eq.s32.totalorder %s18, 1
      %p36 = por %p34, %p35
      %p37 = scmp.ne.s32.totalorder %s26, %s27
      %p38 = scmp.eq.s32.totalorder %s18, 0
      %p39 = por %p37, %p38
      %p40 = scmp.ne.s32.totalorder %s26, %s27
      %p41 = scmp.eq.s32.totalorder %s19, 1
      %p42 = por %p40, %p41
      %p44 = scmp.ne.s32.totalorder %s27, %s43
      %p45 = scmp.eq.s32.totalorder %s19, 0
      %p46 = por %p44, %p45
      %s48 = sadd.s32 %s47, 1
      %p51 = scmp.eq.s32.totalorder %s13, 1
      %p52 = scmp.ne.s32.totalorder %s47, %s49
      %p53 = scmp.eq.s32.totalorder %s13, 0
      %p54 = por %p52, %p53
      %p55 = scmp.ne.s32.totalorder %s47, %s49
      %p56 = scmp.eq.s32.totalorder %s18, 1
      %p57 = por %p55, %p56
      %p58 = scmp.ne.s32.totalorder %s49, %s50
      %p59 = scmp.eq.s32.totalorder %s18, 0
      %p60 = por %p58, %p59
      %p61 = scmp.ne.s32.totalorder %s49, %s50
      %p62 = scmp.eq.s32.totalorder %s19, 1
      %p63 = por %p61, %p62
      %p65 = scmp.ne.s32.totalorder %s50, %s64
      %p66 = scmp.eq.s32.totalorder %s19, 0
      %p67 = por %p65, %p66
      %s69 = sadd.s32 %s68, 1
      %p72 = scmp.eq.s32.totalorder %s13, 1
      %p73 = scmp.ne.s32.totalorder %s68, %s70
      %p74 = scmp.eq.s32.totalorder %s13, 0
      %p75 = por %p73, %p74
      %p76 = scmp.ne.s32.totalorder %s68, %s70
      %p77 = scmp.eq.s32.totalorder %s18, 1
      %p78 = por %p76, %p77
      %p79 = scmp.ne.s32.totalorder %s70, %s71
      %p80 = scmp.eq.s32.totalorder %s18, 0
      %p81 = por %p79, %p80
      %p82 = scmp.ne.s32.totalorder %s70, %s71
      %p83 = scmp.eq.s32.totalorder %s19, 1
      %p84 = por %p82, %p83
      %p86 = scmp.ne.s32.totalorder %s71, %s85
      %p87 = scmp.eq.s32.totalorder %s19, 0
      %p88 = por %p86, %p87
      %s90 = sadd.s32 %s89, 1
      %p93 = scmp.eq.s32.totalorder %s13, 1
      %p94 = scmp.ne.s32.totalorder %s89, %s91
      %p95 = scmp.eq.s32.totalorder %s13, 0
      %p96 = por %p94, %p95
      %p97 = scmp.ne.s32.totalorder %s89, %s91
      %p98 = scmp.eq.s32.totalorder %s18, 1
      %p99 = por %p97, %p98
      %p100 = scmp.ne.s32.totalorder %s91, %s92
      %p101 = scmp.eq.s32.totalorder %s18, 0
      %p102 = por %p100, %p101
      %p103 = scmp.ne.s32.totalorder %s91, %s92
      %p104 = scmp.eq.s32.totalorder %s19, 1
      %p105 = por %p103, %p104
      %p107 = scmp.ne.s32.totalorder %s92, %s106
      %p108 = scmp.eq.s32.totalorder %s19, 0
      %p109 = por %p107, %p108
      %s111 = sadd.s32 %s110, 1
      %p114 = scmp.eq.s32.totalorder %s13, 1
      %p115 = scmp.ne.s32.totalorder %s110, %s112
      %p116 = scmp.eq.s32.totalorder %s13, 0
      %p117 = por %p115, %p116
      %p118 = scmp.ne.s32.totalorder %s110, %s112
      %p119 = scmp.eq.s32.totalorder %s18, 1
      %p120 = por %p118, %p119
      %p121 = scmp.ne.s32.totalorder %s112, %s113
      %p122 = scmp.eq.s32.totalorder %s18, 0
      %p123 = por %p121, %p122
      %p124 = scmp.ne.s32.totalorder %s112, %s113
      %p125 = scmp.eq.s32.totalorder %s19, 1
      %p126 = por %p124, %p125
      %p128 = scmp.ne.s32.totalorder %s113, %s127
      %p129 = scmp.eq.s32.totalorder %s19, 0
      %p130 = por %p128, %p129
      %s131 = ssub.s32 %s13, %s20
      %p132 = scmp.eq.s32.totalorder %s131, 0
      %s134 = sadd.s32 %s133, 1
      %s135 = scalar_select %p132, %s133, %s134
      %p138 = pneg %p132
      %p139 = scmp.eq.s32.totalorder %s13, 1
      %p140 = por %p138, %p139
      %p141 = scmp.ne.s32.totalorder %s133, %s136
      %p142 = scmp.eq.s32.totalorder %s13, 0
      %p143 = por %p141, %p142
      %p144 = scmp.ne.s32.totalorder %s133, %s136
      %p145 = scmp.eq.s32.totalorder %s18, 1
      %p146 = por %p144, %p145
      %p147 = scmp.ne.s32.totalorder %s136, %s137
      %p148 = scmp.eq.s32.totalorder %s18, 0
      %p149 = por %p147, %p148
      %p150 = scmp.ne.s32.totalorder %s136, %s137
      %p151 = scmp.eq.s32.totalorder %s19, 1
      %p152 = por %p150, %p151
      %p154 = scmp.ne.s32.totalorder %s137, %s153
      %p155 = scmp.eq.s32.totalorder %s19, 0
      %p156 = por %p154, %p155
      %p157 = scmp.le.s32.totalorder 1, %s13
      %p158 = scmp.lt.s32.totalorder %s13, 3
      %p159 = pnand %p157, %p158
      %p160 = pneg %p159
      // Predicated region
      $region9: #{cnn_encoder.2} parent=5 // pred_check
        _
      $region10: #{cnn_encoder.2} parent=5 // pred_check_branch
        %162 = sbr.rel (%p159) target = $region12
      $region11: #{cnn_encoder.2} parent=5 // pred_region
        %s163 = ssub.s32 %s13, 1
        // Predicated region
        $region13: #{cnn_encoder.2} parent=11 // pred_check
          %p164 = pneg %p60
        $region14: #{cnn_encoder.2} parent=11 // pred_check_branch
          %166 = sbr.rel (%p164) target = $region16
        $region15: #{cnn_encoder.2} parent=11 // pred_region
          %168 = vsyncadd [#allocation3], 0
          %s169 = sshll.u32 %s1, 4
          %s170 = int_to_ptr.hbm [resolvable:$true] %s169
          %s171 = sshll.u32 [#allocation2], 4
          %s172 = int_to_ptr.vmem [resolvable:$true] %s171
          %177 = dma.hbm_to_vmem [thread:$0]  %s170, 128, %s172, [#allocation3], 64, 64, 4
        $region16: #{cnn_encoder.2} parent=11 // pred_fallthru
          _
        // Predicated region
        $region17: #{cnn_encoder.2} parent=11 // pred_check
          %p178 = pneg %p81
        $region18: #{cnn_encoder.2} parent=11 // pred_check_branch
          %180 = sbr.rel (%p178) target = $region20
        $region19: #{cnn_encoder.2} parent=11 // pred_region
          %182 = vsyncadd [#allocation5], 0
          %s184 = sshll.u32 %s2, 4
          %s185 = int_to_ptr.hbm [resolvable:$true] %s184
          %s186 = sshll.u32 [#allocation4], 4
          %s187 = int_to_ptr.vmem [resolvable:$true] %s186
          %189 = dma.hbm_to_vmem [thread:$0]  %s185, 16, %s187, [#allocation5]
        $region20: #{cnn_encoder.2} parent=11 // pred_fallthru
          _
        // Predicated region
        $region21: #{cnn_encoder.2} parent=11 // pred_check
          %p190 = pneg %p102
        $region22: #{cnn_encoder.2} parent=11 // pred_check_branch
          %192 = sbr.rel (%p190) target = $region24
        $region23: #{cnn_encoder.2} parent=11 // pred_region
          _
        $region24: #{cnn_encoder.2} parent=11 // pred_fallthru
          _
        // Predicated region
        $region25: #{cnn_encoder.2} parent=11 // pred_check
          %p193 = pneg %p123
        $region26: #{cnn_encoder.2} parent=11 // pred_check_branch
          %195 = sbr.rel (%p193) target = $region28
        $region27: #{cnn_encoder.2} parent=11 // pred_region
          %197 = vsyncadd [#allocation5], 0
          %s199 = sshll.u32 %s4, 4
          %s200 = int_to_ptr.hbm [resolvable:$true] %s199
          %s201 = sshll.u32 [#allocation6], 4
          %s202 = int_to_ptr.vmem [resolvable:$true] %s201
          %204 = dma.hbm_to_vmem [thread:$0]  %s200, 16, %s202, [#allocation5]
        $region28: #{cnn_encoder.2} parent=11 // pred_fallthru
          _
      $region12: #{cnn_encoder.2} parent=5 // pred_fallthru
        _
      %p205 = scmp.lt.s32.totalorder %s13, 2
      // Predicated region
      $region29: #{cnn_encoder.2} parent=5 // pred_check
        %p206 = pneg %p205
      $region30: #{cnn_encoder.2} parent=5 // pred_check_branch
        %208 = sbr.rel (%p206) target = $region32
      $region31: #{cnn_encoder.2} parent=5 // pred_region
        // Predicated region
        $region33: #{cnn_encoder.2} parent=31 // pred_check
          %p209 = pneg %p33
        $region34: #{cnn_encoder.2} parent=31 // pred_check_branch
          %211 = sbr.rel (%p209) target = $region36
        $region35: #{cnn_encoder.2} parent=31 // pred_region
          %p212 = scmp.lt.s32.totalorder %s13, 1
          %s213 = scalar_select %p212, %s13, 1
          %s214 = smul.addr %s213, 25
          %s215 = smul.addr %s214, 4
          %s216 = scalar_lea.vmem %s0, %s215
        $region36: #{cnn_encoder.2} parent=31 // pred_fallthru
          _
      $region32: #{cnn_encoder.2} parent=5 // pred_fallthru
        _
      %p217 = scmp.le.s32.totalorder 1, %s13
      %p218 = scmp.lt.s32.totalorder %s13, 3
      %p219 = pnand %p217, %p218
      %p220 = pneg %p219
      // Predicated region
      $region37: #{cnn_encoder.2} parent=5 // pred_check
        _
      $region38: #{cnn_encoder.2} parent=5 // pred_check_branch
        %222 = sbr.rel (%p219) target = $region40
      $region39: #{cnn_encoder.2} parent=5 // pred_region
        %s223 = ssub.s32 %s13, 1
        // Predicated region
        $region41: #{cnn_encoder.2} parent=39 // pred_check
          %p224 = pneg %p60
        $region42: #{cnn_encoder.2} parent=39 // pred_check_branch
          %226 = sbr.rel (%p224) target = $region44
        $region43: #{cnn_encoder.2} parent=39 // pred_region
          %228 = dma.done [#allocation3], 128
        $region44: #{cnn_encoder.2} parent=39 // pred_fallthru
          _
        // Predicated region
        $region45: #{cnn_encoder.2} parent=39 // pred_check
          %p229 = pneg %p81
        $region46: #{cnn_encoder.2} parent=39 // pred_check_branch
          %231 = sbr.rel (%p229) target = $region48
        $region47: #{cnn_encoder.2} parent=39 // pred_region
          %233 = dma.done [#allocation5], 16
        $region48: #{cnn_encoder.2} parent=39 // pred_fallthru
          _
        // Predicated region
        $region49: #{cnn_encoder.2} parent=39 // pred_check
          %p234 = pneg %p123
        $region50: #{cnn_encoder.2} parent=39 // pred_check_branch
          %236 = sbr.rel (%p234) target = $region52
        $region51: #{cnn_encoder.2} parent=39 // pred_region
          %238 = dma.done [#allocation5], 16
        $region52: #{cnn_encoder.2} parent=39 // pred_fallthru
          _
        %p239 = scmp.lt.s32.totalorder %s18, 1
        %s240 = scalar_select %p239, %s18, 1
        %s241 = smul.addr %s240, 25
        %s242 = smul.addr %s241, 4
        %s243 = scalar_lea.vmem %s0, %s242
        %p244 = pneg %p39
        %p245 = pneg %p36
        %p246 = pneg %p60
        %p247 = pneg %p57
        %p248 = pneg %p81
        %p249 = pneg %p78
        %p250 = pneg %p102
        %p251 = pneg %p99
        %p252 = pneg %p123
        %p253 = pneg %p120
        %p254 = pneg %p149
        %p255 = pneg %p146
        %p256 = scmp.lt.s32.totalorder %s18, 1
        %s257 = scalar_select %p256, %s18, 1
        %s258 = smul.addr %s257, 7
        %s259 = smul.addr %s258, 4
        %s260 = scalar_lea.vmem %s5, %s259
        %p261 = scmp.lt.s32.totalorder %s18, 1
        %s262 = scalar_select %p261, %s18, 1
        %s263 = smul.addr %s262, 25
        %s264 = smul.addr %s263, 4
        %s265 = scalar_lea.vmem %s0, %s264
        %p266 = scmp.lt.s32.totalorder %s18, 1
        %s267 = scalar_select %p266, %s18, 1
        %s268 = smul.addr %s267, 7
        %s269 = smul.addr %s268, 4
        %s270 = scalar_lea.vmem %s5, %s269
        %v272 = vld [vmem:[#allocation2] sm:$0xf]
        %v273 = vld [vmem:[#allocation2 + $0x4] sm:$0x1]
        %v274 = vld [vmem:[#allocation4] sm:$0x1]
        %v275 = vld [vmem:[%s3] sm:$0xf]
        %v276 = vld [vmem:[%s3 + $0x4] sm:$0xf]
        %v277 = vld [vmem:[%s3 + $0x8] sm:$0xf]
        %v278 = vld [vmem:[%s3 + $0xc] sm:$0xf]
        %v279 = vld [vmem:[%s3 + $0x10] sm:$0xf]
        %v280 = vld [vmem:[%s3 + $0x14] sm:$0xf]
        %v281 = vld [vmem:[%s3 + $0x18] sm:$0xf]
        %v282 = vld [vmem:[%s3 + $0x1c] sm:$0xf]
        %v283 = vld [vmem:[%s3 + $0x20] sm:$0xf]
        %v284 = vld [vmem:[%s3 + $0x24] sm:$0xf]
        %v285 = vld [vmem:[%s3 + $0x28] sm:$0xf]
        %v286 = vld [vmem:[%s3 + $0x2c] sm:$0xf]
        %v287 = vld [vmem:[%s3 + $0x30] sm:$0xf]
        %v288 = vld [vmem:[%s3 + $0x34] sm:$0xf]
        %v289 = vld [vmem:[%s3 + $0x38] sm:$0xf]
        %v290 = vld [vmem:[%s3 + $0x3c] sm:$0xf]
        %v291 = vld [vmem:[%s3 + $0x40] sm:$0xf]
        %v292 = vld [vmem:[%s3 + $0x44] sm:$0xf]
        %v293 = vld [vmem:[%s3 + $0x48] sm:$0xf]
        %v294 = vld [vmem:[%s3 + $0x4c] sm:$0xf]
        %v295 = vld [vmem:[%s3 + $0x50] sm:$0xf]
        %v296 = vld [vmem:[%s3 + $0x54] sm:$0xf]
        %v297 = vld [vmem:[%s3 + $0x58] sm:$0xf]
        %v298 = vld [vmem:[%s3 + $0x5c] sm:$0xf]
        %v299 = vld [vmem:[%s3 + $0x60] sm:$0xf]
        %v300 = vld [vmem:[%s3 + $0x64] sm:$0xf]
        %v301 = vld [vmem:[%s3 + $0x68] sm:$0xf]
        %v302 = vld [vmem:[%s3 + $0x6c] sm:$0xf]
        %v303 = vld [vmem:[%s3 + $0x70] sm:$0xf]
        %v304 = vld [vmem:[%s3 + $0x74] sm:$0xf]
        %v305 = vld [vmem:[%s3 + $0x78] sm:$0xf]
        %v306 = vld [vmem:[%s3 + $0x7c] sm:$0xf]
        %v307 = vld [vmem:[%s3 + $0x80] sm:$0xf]
        %v308 = vld [vmem:[%s3 + $0x84] sm:$0xf]
        %v309 = vld [vmem:[%s3 + $0x88] sm:$0xf]
        %v310 = vld [vmem:[%s3 + $0x8c] sm:$0xf]
        %v311 = vld [vmem:[#allocation6] sm:$0x1]
        %v312 = vld [vmem:[%s265] sm:$0xf]
        %v313 = vld [vmem:[%s265 + $0x4] sm:$0xf]
        %v314 = vld [vmem:[%s265 + $0x8] sm:$0xf]
        %v315 = vld [vmem:[%s265 + $0xc] sm:$0xf]
        %v316 = vld [vmem:[%s265 + $0x10] sm:$0xf]
        %v317 = vld [vmem:[%s265 + $0x14] sm:$0xf]
        %v318 = vld [vmem:[%s265 + $0x18] sm:$0xf]
        %v319 = vld [vmem:[%s265 + $0x1c] sm:$0xf]
        %v320 = vld [vmem:[%s265 + $0x20] sm:$0xf]
        %v321 = vld [vmem:[%s265 + $0x24] sm:$0xf]
        %v322 = vld [vmem:[%s265 + $0x28] sm:$0xf]
        %v323 = vld [vmem:[%s265 + $0x2c] sm:$0xf]
        %v324 = vld [vmem:[%s265 + $0x30] sm:$0xf]
        %v325 = vld [vmem:[%s265 + $0x34] sm:$0xf]
        %v326 = vld [vmem:[%s265 + $0x38] sm:$0xf]
        %v327 = vld [vmem:[%s265 + $0x3c] sm:$0xf]
        %v328 = vld [vmem:[%s265 + $0x40] sm:$0xf]
        %v329 = vld [vmem:[%s265 + $0x44] sm:$0xf]
        %v330 = vld [vmem:[%s265 + $0x48] sm:$0xf]
        %v331 = vld [vmem:[%s265 + $0x4c] sm:$0xf]
        %v332 = vld [vmem:[%s265 + $0x50] sm:$0xf]
        %v333 = vld [vmem:[%s265 + $0x54] sm:$0xf]
        %v334 = vld [vmem:[%s265 + $0x58] sm:$0xf]
        %v335 = vld [vmem:[%s265 + $0x5c] sm:$0xf]
        %v336 = vld [vmem:[%s265 + $0x60] sm:$0x3]
        %v338 = vperm.slane %v274, 0
        %v365 = vunpack.c.l.b16 %v312
        %v366 = vunpack.c.l.b16 %v313
        %v367 = vunpack.c.l.b16 %v314
        %v368 = vunpack.c.l.b16 %v315
        %v369 = vunpack.c.l.b16 %v316
        %v370 = vunpack.c.l.b16 %v317
        %v371 = vunpack.c.l.b16 %v318
        %v372 = vunpack.c.l.b16 %v319
        %v373 = vunpack.c.l.b16 %v320
        %v374 = vunpack.c.l.b16 %v321
        %v375 = vunpack.c.l.b16 %v322
        %v376 = vunpack.c.l.b16 %v323
        %v377 = vunpack.c.l.b16 %v324
        %v378 = vunpack.c.l.b16 %v325
        %v379 = vunpack.c.l.b16 %v326
        %v380 = vunpack.c.l.b16 %v327
        %v381 = vunpack.c.l.b16 %v328
        %v382 = vunpack.c.l.b16 %v329
        %v383 = vunpack.c.l.b16 %v330
        %v384 = vunpack.c.l.b16 %v331
        %v385 = vunpack.c.l.b16 %v332
        %v386 = vunpack.c.l.b16 %v333
        %v387 = vunpack.c.l.b16 %v334
        %v388 = vunpack.c.l.b16 %v335
        %v389 = vunpack.c.l.b16 %v336
        %v390 = vpack.c.b16 %v366, %v365
        %v391 = vpack.c.b16 %v368, %v367
        %v392 = vpack.c.b16 %v370, %v369
        %v393 = vpack.c.b16 %v372, %v371
        %v394 = vpack.c.b16 %v374, %v373
        %v395 = vpack.c.b16 %v376, %v375
        %v396 = vpack.c.b16 %v378, %v377
        %v397 = vpack.c.b16 %v380, %v379
        %v398 = vpack.c.b16 %v382, %v381
        %v399 = vpack.c.b16 %v384, %v383
        %v400 = vpack.c.b16 %v386, %v385
        %v401 = vpack.c.b16 %v388, %v387
        %v402 = vpack.c.b16 %v389, %v389
        %v405 = vunpack.c.l.b16 %v272
        %v406 = vunpack.c.l.b16 %v273
        %v407 = vpack.c.b16 %v406, %v405
        %vm408 = vcmask 72704
        %v410 = vsel %vm408, %v390, 0
        %v413 = vsel %vm408, %v391, 0
        %v416 = vsel %vm408, %v392, 0
        %v419 = vsel %vm408, %v393, 0
        %v422 = vsel %vm408, %v394, 0
        %v425 = vsel %vm408, %v395, 0
        %v428 = vsel %vm408, %v396, 0
        %v431 = vsel %vm408, %v397, 0
        %v434 = vsel %vm408, %v398, 0
        %v437 = vsel %vm408, %v399, 0
        %v440 = vsel %vm408, %v400, 0
        %v443 = vsel %vm408, %v401, 0
        %v446 = vsel %vm408, %v402, 0
        %vm448 = vcmask 1043456
        %vm449 = vcmask 1044480
        %v450 = vsel %vm448, 4294967295, 65535
        %v451 = vsel %vm449, %v450, 0
        %v453 = vand.u32 %v407, %v451
        %455 = vmatpush.bf16.msra.mxu0 0
        %456 = vmatpush.bf16.msra.mxu0 0
        %457 = vmatpush.bf16.msra.mxu0 0
        %458 = vmatpush.bf16.msra.mxu0 0
        %459 = vmatpush.bf16.msra.mxu0 0
        %460 = vmatpush.bf16.msra.mxu0 0
        %461 = vmatpush.bf16.msra.mxu0 0
        %462 = vmatpush.bf16.msra.mxu0 %v453
        %463 = vmatmul.bf16.gmra.mxu0 %v410
        %v464 = vpop.f32.mrf.mxu0
        %v465 = vadd.f32 %v338, %v464
        %v466 = vpop.f32.mrf.mxu0
        %v467 = vadd.f32 %v338, %v466
        %468 = vmatmul.bf16.gmra.mxu0 %v413
        %v469 = vpop.f32.mrf.mxu0
        %v470 = vadd.f32 %v338, %v469
        %v471 = vpop.f32.mrf.mxu0
        %v472 = vadd.f32 %v338, %v471
        %473 = vmatmul.bf16.gmra.mxu0 %v416
        %v474 = vpop.f32.mrf.mxu0
        %v475 = vadd.f32 %v338, %v474
        %v476 = vpop.f32.mrf.mxu0
        %v477 = vadd.f32 %v338, %v476
        %478 = vmatmul.bf16.gmra.mxu0 %v419
        %v479 = vpop.f32.mrf.mxu0
        %v480 = vadd.f32 %v338, %v479
        %v481 = vpop.f32.mrf.mxu0
        %v482 = vadd.f32 %v338, %v481
        %483 = vmatmul.bf16.gmra.mxu0 %v422
        %v484 = vpop.f32.mrf.mxu0
        %v485 = vadd.f32 %v338, %v484
        %v486 = vpop.f32.mrf.mxu0
        %v487 = vadd.f32 %v338, %v486
        %488 = vmatmul.bf16.gmra.mxu0 %v425
        %v489 = vpop.f32.mrf.mxu0
        %v490 = vadd.f32 %v338, %v489
        %v491 = vpop.f32.mrf.mxu0
        %v492 = vadd.f32 %v338, %v491
        %493 = vmatmul.bf16.gmra.mxu0 %v428
        %v494 = vpop.f32.mrf.mxu0
        %v495 = vadd.f32 %v338, %v494
        %v496 = vpop.f32.mrf.mxu0
        %v497 = vadd.f32 %v338, %v496
        %498 = vmatmul.bf16.gmra.mxu0 %v431
        %v499 = vpop.f32.mrf.mxu0
        %v500 = vadd.f32 %v338, %v499
        %v501 = vpop.f32.mrf.mxu0
        %v502 = vadd.f32 %v338, %v501
        %503 = vmatmul.bf16.gmra.mxu0 %v434
        %v504 = vpop.f32.mrf.mxu0
        %v505 = vadd.f32 %v338, %v504
        %v506 = vpop.f32.mrf.mxu0
        %v507 = vadd.f32 %v338, %v506
        %508 = vmatmul.bf16.gmra.mxu0 %v437
        %v509 = vpop.f32.mrf.mxu0
        %v510 = vadd.f32 %v338, %v509
        %v511 = vpop.f32.mrf.mxu0
        %v512 = vadd.f32 %v338, %v511
        %513 = vmatmul.bf16.gmra.mxu0 %v440
        %v514 = vpop.f32.mrf.mxu0
        %v515 = vadd.f32 %v338, %v514
        %v516 = vpop.f32.mrf.mxu0
        %v517 = vadd.f32 %v338, %v516
        %518 = vmatmul.bf16.gmra.mxu0 %v443
        %v519 = vpop.f32.mrf.mxu0
        %v520 = vadd.f32 %v338, %v519
        %v521 = vpop.f32.mrf.mxu0
        %v522 = vadd.f32 %v338, %v521
        %523 = vmatmul.bf16.gmra.mxu0 %v446
        %v524 = vpop.f32.mrf.mxu0
        %v525 = vadd.f32 %v338, %v524
        %v526 = vpop.f32.mrf.mxu0
        %527 = vdwg.mxu0
        %v528 = vmax.f32 %v465, 0.0
        %v529 = vmax.f32 %v467, 0.0
        %v530 = vmax.f32 %v470, 0.0
        %v531 = vmax.f32 %v472, 0.0
        %v532 = vmax.f32 %v475, 0.0
        %v533 = vmax.f32 %v477, 0.0
        %v534 = vmax.f32 %v480, 0.0
        %v535 = vmax.f32 %v482, 0.0
        %v536 = vmax.f32 %v485, 0.0
        %v537 = vmax.f32 %v487, 0.0
        %v538 = vmax.f32 %v490, 0.0
        %v539 = vmax.f32 %v492, 0.0
        %v540 = vmax.f32 %v495, 0.0
        %v541 = vmax.f32 %v497, 0.0
        %v542 = vmax.f32 %v500, 0.0
        %v543 = vmax.f32 %v502, 0.0
        %v544 = vmax.f32 %v505, 0.0
        %v545 = vmax.f32 %v507, 0.0
        %v546 = vmax.f32 %v510, 0.0
        %v547 = vmax.f32 %v512, 0.0
        %v548 = vmax.f32 %v515, 0.0
        %v549 = vmax.f32 %v517, 0.0
        %v550 = vmax.f32 %v520, 0.0
        %v551 = vmax.f32 %v522, 0.0
        %v552 = vmax.f32 %v525, 0.0
        %v553 = vpack.c.bf16 %v528, %v528
        %v554 = vpack.c.bf16 %v529, %v529
        %v555 = vpack.c.bf16 %v530, %v530
        %v556 = vpack.c.bf16 %v531, %v531
        %v557 = vpack.c.bf16 %v532, %v532
        %v558 = vpack.c.bf16 %v533, %v533
        %v559 = vpack.c.bf16 %v534, %v534
        %v560 = vpack.c.bf16 %v535, %v535
        %v561 = vpack.c.bf16 %v536, %v536
        %v562 = vpack.c.bf16 %v537, %v537
        %v563 = vpack.c.bf16 %v538, %v538
        %v564 = vpack.c.bf16 %v539, %v539
        %v565 = vpack.c.bf16 %v540, %v540
        %v566 = vpack.c.bf16 %v541, %v541
        %v567 = vpack.c.bf16 %v542, %v542
        %v568 = vpack.c.bf16 %v543, %v543
        %v569 = vpack.c.bf16 %v544, %v544
        %v570 = vpack.c.bf16 %v545, %v545
        %v571 = vpack.c.bf16 %v546, %v546
        %v572 = vpack.c.bf16 %v547, %v547
        %v573 = vpack.c.bf16 %v548, %v548
        %v574 = vpack.c.bf16 %v549, %v549
        %v575 = vpack.c.bf16 %v550, %v550
        %v576 = vpack.c.bf16 %v551, %v551
        %v577 = vpack.c.bf16 %v552, %v552
        %v578 = vlaneseq
        %v579 = vshrl.u32 %v578, 7
        %v580 = vadd.s32 %v579, 8
        %v581 = vadd.s32 %v579, 16
        %v582 = vadd.s32 %v579, 24
        %v583 = vadd.s32 %v579, 32
        %v584 = vadd.s32 %v579, 40
        %v585 = vadd.s32 %v579, 48
        %vm586 = vcmp.lt.s32.totalorder %v579, 0
        %v587 = vsub.s32 0, %v579
        %v588 = vsel %vm586, %v587, %v579
        %v589 = vand.u32 %v588, 65535
        %v590 = vshrl.u32 %v588, 16
        %v592 = vmul.u32 %v589, 9362
        %v593 = vmul.u32 %v589, 37449
        %v594 = vmul.u32 %v590, 9362
        %v595 = vmul.u32 %v590, 37449
        %v596 = vshll.u32 %v593, 16
        %v597 = vshrl.u32 %v593, 16
        %v598 = vshll.u32 %v594, 16
        %v599 = vshrl.u32 %v594, 16
        %vm600 = vc.u32 %v592, %v596
        %v601 = vsel %vm600, 1, 0
        %v602 = vadd.s32 %v592, %v596
        %v603 = vadd.s32 %v595, %v601
        %vm604 = vc.u32 %v602, %v598
        %v605 = vsel %vm604, 1, 0
        %v606 = vadd.s32 %v602, %v598
        %v607 = vadd.s32 %v603, %v605
        %v608 = vadd.s32 %v607, %v597
        %v609 = vadd.s32 %v608, %v599
        %vm610 = vc.u32 %v606, 2454267026
        %v611 = vsel %vm610, 1, 0
        %v612 = vadd.s32 %v609, %v611
        %v613 = vshrl.u32 %v612, 2
        %v614 = vmul.u32 %v613, 7
        %v615 = vsub.s32 %v588, %v614
        %v616 = vsub.s32 0, %v615
        %v617 = vsel %vm586, %v616, %v615
        %vm618 = vcmp.lt.s32.totalorder %v580, 0
        %v619 = vsub.s32 0, %v580
        %v620 = vsel %vm618, %v619, %v580
        %v621 = vand.u32 %v620, 65535
        %v622 = vshrl.u32 %v620, 16
        %v624 = vmul.u32 %v621, 9362
        %v625 = vmul.u32 %v621, 37449
        %v626 = vmul.u32 %v622, 9362
        %v627 = vmul.u32 %v622, 37449
        %v628 = vshll.u32 %v625, 16
        %v629 = vshrl.u32 %v625, 16
        %v630 = vshll.u32 %v626, 16
        %v631 = vshrl.u32 %v626, 16
        %vm632 = vc.u32 %v624, %v628
        %v633 = vsel %vm632, 1, 0
        %v634 = vadd.s32 %v624, %v628
        %v635 = vadd.s32 %v627, %v633
        %vm636 = vc.u32 %v634, %v630
        %v637 = vsel %vm636, 1, 0
        %v638 = vadd.s32 %v634, %v630
        %v639 = vadd.s32 %v635, %v637
        %v640 = vadd.s32 %v639, %v629
        %v641 = vadd.s32 %v640, %v631
        %vm642 = vc.u32 %v638, 2454267026
        %v643 = vsel %vm642, 1, 0
        %v644 = vadd.s32 %v641, %v643
        %v645 = vshrl.u32 %v644, 2
        %v646 = vmul.u32 %v645, 7
        %v647 = vsub.s32 %v620, %v646
        %v648 = vsub.s32 0, %v647
        %v649 = vsel %vm618, %v648, %v647
        %vm650 = vcmp.lt.s32.totalorder %v581, 0
        %v651 = vsub.s32 0, %v581
        %v652 = vsel %vm650, %v651, %v581
        %v653 = vand.u32 %v652, 65535
        %v654 = vshrl.u32 %v652, 16
        %v656 = vmul.u32 %v653, 9362
        %v657 = vmul.u32 %v653, 37449
        %v658 = vmul.u32 %v654, 9362
        %v659 = vmul.u32 %v654, 37449
        %v660 = vshll.u32 %v657, 16
        %v661 = vshrl.u32 %v657, 16
        %v662 = vshll.u32 %v658, 16
        %v663 = vshrl.u32 %v658, 16
        %vm664 = vc.u32 %v656, %v660
        %v665 = vsel %vm664, 1, 0
        %v666 = vadd.s32 %v656, %v660
        %v667 = vadd.s32 %v659, %v665
        %vm668 = vc.u32 %v666, %v662
        %v669 = vsel %vm668, 1, 0
        %v670 = vadd.s32 %v666, %v662
        %v671 = vadd.s32 %v667, %v669
        %v672 = vadd.s32 %v671, %v661
        %v673 = vadd.s32 %v672, %v663
        %vm674 = vc.u32 %v670, 2454267026
        %v675 = vsel %vm674, 1, 0
        %v676 = vadd.s32 %v673, %v675
        %v677 = vshrl.u32 %v676, 2
        %v678 = vmul.u32 %v677, 7
        %v679 = vsub.s32 %v652, %v678
        %v680 = vsub.s32 0, %v679
        %v681 = vsel %vm650, %v680, %v679
        %vm682 = vcmp.lt.s32.totalorder %v582, 0
        %v683 = vsub.s32 0, %v582
        %v684 = vsel %vm682, %v683, %v582
        %v685 = vand.u32 %v684, 65535
        %v686 = vshrl.u32 %v684, 16
        %v688 = vmul.u32 %v685, 9362
        %v689 = vmul.u32 %v685, 37449
        %v690 = vmul.u32 %v686, 9362
        %v691 = vmul.u32 %v686, 37449
        %v692 = vshll.u32 %v689, 16
        %v693 = vshrl.u32 %v689, 16
        %v694 = vshll.u32 %v690, 16
        %v695 = vshrl.u32 %v690, 16
        %vm696 = vc.u32 %v688, %v692
        %v697 = vsel %vm696, 1, 0
        %v698 = vadd.s32 %v688, %v692
        %v699 = vadd.s32 %v691, %v697
        %vm700 = vc.u32 %v698, %v694
        %v701 = vsel %vm700, 1, 0
        %v702 = vadd.s32 %v698, %v694
        %v703 = vadd.s32 %v699, %v701
        %v704 = vadd.s32 %v703, %v693
        %v705 = vadd.s32 %v704, %v695
        %vm706 = vc.u32 %v702, 2454267026
        %v707 = vsel %vm706, 1, 0
        %v708 = vadd.s32 %v705, %v707
        %v709 = vshrl.u32 %v708, 2
        %v710 = vmul.u32 %v709, 7
        %v711 = vsub.s32 %v684, %v710
        %v712 = vsub.s32 0, %v711
        %v713 = vsel %vm682, %v712, %v711
        %vm714 = vcmp.lt.s32.totalorder %v583, 0
        %v715 = vsub.s32 0, %v583
        %v716 = vsel %vm714, %v715, %v583
        %v717 = vand.u32 %v716, 65535
        %v718 = vshrl.u32 %v716, 16
        %v720 = vmul.u32 %v717, 9362
        %v721 = vmul.u32 %v717, 37449
        %v722 = vmul.u32 %v718, 9362
        %v723 = vmul.u32 %v718, 37449
        %v724 = vshll.u32 %v721, 16
        %v725 = vshrl.u32 %v721, 16
        %v726 = vshll.u32 %v722, 16
        %v727 = vshrl.u32 %v722, 16
        %vm728 = vc.u32 %v720, %v724
        %v729 = vsel %vm728, 1, 0
        %v730 = vadd.s32 %v720, %v724
        %v731 = vadd.s32 %v723, %v729
        %vm732 = vc.u32 %v730, %v726
        %v733 = vsel %vm732, 1, 0
        %v734 = vadd.s32 %v730, %v726
        %v735 = vadd.s32 %v731, %v733
        %v736 = vadd.s32 %v735, %v725
        %v737 = vadd.s32 %v736, %v727
        %vm738 = vc.u32 %v734, 2454267026
        %v739 = vsel %vm738, 1, 0
        %v740 = vadd.s32 %v737, %v739
        %v741 = vshrl.u32 %v740, 2
        %v742 = vmul.u32 %v741, 7
        %v743 = vsub.s32 %v716, %v742
        %v744 = vsub.s32 0, %v743
        %v745 = vsel %vm714, %v744, %v743
        %vm746 = vcmp.lt.s32.totalorder %v584, 0
        %v747 = vsub.s32 0, %v584
        %v748 = vsel %vm746, %v747, %v584
        %v749 = vand.u32 %v748, 65535
        %v750 = vshrl.u32 %v748, 16
        %v752 = vmul.u32 %v749, 9362
        %v753 = vmul.u32 %v749, 37449
        %v754 = vmul.u32 %v750, 9362
        %v755 = vmul.u32 %v750, 37449
        %v756 = vshll.u32 %v753, 16
        %v757 = vshrl.u32 %v753, 16
        %v758 = vshll.u32 %v754, 16
        %v759 = vshrl.u32 %v754, 16
        %vm760 = vc.u32 %v752, %v756
        %v761 = vsel %vm760, 1, 0
        %v762 = vadd.s32 %v752, %v756
        %v763 = vadd.s32 %v755, %v761
        %vm764 = vc.u32 %v762, %v758
        %v765 = vsel %vm764, 1, 0
        %v766 = vadd.s32 %v762, %v758
        %v767 = vadd.s32 %v763, %v765
        %v768 = vadd.s32 %v767, %v757
        %v769 = vadd.s32 %v768, %v759
        %vm770 = vc.u32 %v766, 2454267026
        %v771 = vsel %vm770, 1, 0
        %v772 = vadd.s32 %v769, %v771
        %v773 = vshrl.u32 %v772, 2
        %v774 = vmul.u32 %v773, 7
        %v775 = vsub.s32 %v748, %v774
        %v776 = vsub.s32 0, %v775
        %v777 = vsel %vm746, %v776, %v775
        %vm778 = vcmp.lt.s32.totalorder %v585, 0
        %v779 = vsub.s32 0, %v585
        %v780 = vsel %vm778, %v779, %v585
        %v781 = vand.u32 %v780, 65535
        %v782 = vshrl.u32 %v780, 16
        %v784 = vmul.u32 %v781, 9362
        %v785 = vmul.u32 %v781, 37449
        %v786 = vmul.u32 %v782, 9362
        %v787 = vmul.u32 %v782, 37449
        %v788 = vshll.u32 %v785, 16
        %v789 = vshrl.u32 %v785, 16
        %v790 = vshll.u32 %v786, 16
        %v791 = vshrl.u32 %v786, 16
        %vm792 = vc.u32 %v784, %v788
        %v793 = vsel %vm792, 1, 0
        %v794 = vadd.s32 %v784, %v788
        %v795 = vadd.s32 %v787, %v793
        %vm796 = vc.u32 %v794, %v790
        %v797 = vsel %vm796, 1, 0
        %v798 = vadd.s32 %v794, %v790
        %v799 = vadd.s32 %v795, %v797
        %v800 = vadd.s32 %v799, %v789
        %v801 = vadd.s32 %v800, %v791
        %vm802 = vc.u32 %v798, 2454267026
        %v803 = vsel %vm802, 1, 0
        %v804 = vadd.s32 %v801, %v803
        %v805 = vshrl.u32 %v804, 2
        %v806 = vmul.u32 %v805, 7
        %v807 = vsub.s32 %v780, %v806
        %v808 = vsub.s32 0, %v807
        %v809 = vsel %vm778, %v808, %v807
        %vm810 = vcmp.ne.s32.totalorder %v617, 0
        %vm811 = vcmp.ne.s32.totalorder %v649, 0
        %vm812 = vcmp.ne.s32.totalorder %v681, 0
        %vm813 = vcmp.ne.s32.totalorder %v713, 0
        %vm814 = vcmp.ne.s32.totalorder %v745, 0
        %vm815 = vcmp.ne.s32.totalorder %v777, 0
        %vm816 = vcmp.ne.s32.totalorder %v809, 0
        %vm817 = vcmp.lt.s32.totalorder %v617, 0
        %vm818 = vcmp.lt.s32.totalorder %v649, 0
        %vm819 = vcmp.lt.s32.totalorder %v681, 0
        %vm820 = vcmp.lt.s32.totalorder %v713, 0
        %vm821 = vcmp.lt.s32.totalorder %v745, 0
        %vm822 = vcmp.lt.s32.totalorder %v777, 0
        %vm823 = vcmp.lt.s32.totalorder %v809, 0
        %vm824 = vmand %vm817, %vm810
        %vm825 = vmand %vm818, %vm811
        %vm826 = vmand %vm819, %vm812
        %vm827 = vmand %vm820, %vm813
        %vm828 = vmand %vm821, %vm814
        %vm829 = vmand %vm822, %vm815
        %vm830 = vmand %vm823, %vm816
        %v831 = vadd.s32 %v617, 7
        %v832 = vadd.s32 %v649, 7
        %v833 = vadd.s32 %v681, 7
        %v834 = vadd.s32 %v713, 7
        %v835 = vadd.s32 %v745, 7
        %v836 = vadd.s32 %v777, 7
        %v837 = vadd.s32 %v809, 7
        %v838 = vsel %vm824, %v831, %v617
        %v839 = vsel %vm825, %v832, %v649
        %v840 = vsel %vm826, %v833, %v681
        %v841 = vsel %vm827, %v834, %v713
        %v842 = vsel %vm828, %v835, %v745
        %v843 = vsel %vm829, %v836, %v777
        %v844 = vsel %vm830, %v837, %v809
        %vm845 = vcmp.ne.s32.totalorder %v838, 0
        %vm846 = vcmp.ne.s32.totalorder %v839, 0
        %vm847 = vcmp.ne.s32.totalorder %v840, 0
        %vm848 = vcmp.ne.s32.totalorder %v841, 0
        %vm849 = vcmp.ne.s32.totalorder %v842, 0
        %vm850 = vcmp.ne.s32.totalorder %v843, 0
        %vm851 = vcmp.ne.s32.totalorder %v844, 0
        %v852 = vsel %vm845, 1, 0
        %v853 = vsel %vm846, 1, 0
        %v854 = vsel %vm847, 1, 0
        %v855 = vsel %vm848, 1, 0
        %v856 = vsel %vm849, 1, 0
        %v857 = vsel %vm850, 1, 0
        %v858 = vsel %vm851, 1, 0
        %v859 = vcvt.s32.f32 %v852
        %v860 = vcvt.s32.f32 %v853
        %v861 = vcvt.s32.f32 %v854
        %v862 = vcvt.s32.f32 %v855
        %v863 = vcvt.s32.f32 %v856
        %v864 = vcvt.s32.f32 %v857
        %v865 = vcvt.s32.f32 %v858
        %v866 = vpack.c.bf16 %v859, %v859
        %v867 = vpack.c.bf16 %v860, %v860
        %v868 = vpack.c.bf16 %v861, %v861
        %v869 = vpack.c.bf16 %v862, %v862
        %v870 = vpack.c.bf16 %v863, %v863
        %v871 = vpack.c.bf16 %v864, %v864
        %v872 = vpack.c.bf16 %v865, %v865
        %v879 = vunpack.c.l.b16 %v571
        %v880 = vunpack.c.l.b16 %v572
        %v881 = vunpack.c.l.b16 %v573
        %v882 = vunpack.c.l.b16 %v574
        %v883 = vunpack.c.l.b16 %v575
        %v884 = vunpack.c.l.b16 %v576
        %v885 = vpack.c.b16 %v880, %v879
        %v886 = vpack.c.b16 %v882, %v881
        %v887 = vpack.c.b16 %v884, %v883
        %vm888 = vsmask.f32 2304
        %v890 = vshrl.u32 %v885, 16
        %v892 = vrot.slane %v890, 5
        %v893 = vshll.u32 %v885, 16
        %v895 = vrot.slane %v893, 6
        %v896 = vor.u32 %v892, %v895
        %v898 = vshrl.u32 %v886, 16
        %v900 = vrot.slane %v898, 5
        %v901 = vshll.u32 %v886, 16
        %v903 = vrot.slane %v901, 6
        %v904 = vor.u32 %v900, %v903
        %v905 = vsel %vm888, %v896, %v904
        %v907 = vshrl.u32 %v887, 16
        %v909 = vrot.slane %v907, 5
        %v910 = vshll.u32 %v887, 16
        %v912 = vrot.slane %v910, 6
        %v913 = vor.u32 %v909, %v912
        %v914 = vsel %vm888, %v904, %v913
        %v920 = vsel %vm448, 0, %v896
        %v922 = vunpack.c.l.bf16 %v920
        %v923 = vunpack.c.h.bf16 %v920
        %v924 = vunpack.c.l.bf16 %v905
        %v925 = vunpack.c.h.bf16 %v905
        %v926 = vunpack.c.l.bf16 %v914
        %v927 = vunpack.c.h.bf16 %v914
        %v928 = vunpack.c.l.bf16 %v909
        %v929 = vunpack.c.l.bf16 %v866
        %v930 = vunpack.c.l.bf16 %v867
        %v931 = vunpack.c.l.bf16 %v868
        %v932 = vunpack.c.l.bf16 %v869
        %v933 = vunpack.c.l.bf16 %v870
        %v934 = vunpack.c.l.bf16 %v871
        %v935 = vunpack.c.l.bf16 %v872
        %v936 = vmul.f32 %v922, %v929
        %v937 = vmul.f32 %v923, %v930
        %v938 = vmul.f32 %v924, %v931
        %v939 = vmul.f32 %v925, %v932
        %v940 = vmul.f32 %v926, %v933
        %v941 = vmul.f32 %v927, %v934
        %v942 = vmul.f32 %v928, %v935
        %v943 = vpack.c.bf16 %v936, %v936
        %v944 = vpack.c.bf16 %v937, %v937
        %v945 = vpack.c.bf16 %v938, %v938
        %v946 = vpack.c.bf16 %v939, %v939
        %v947 = vpack.c.bf16 %v940, %v940
        %v948 = vpack.c.bf16 %v941, %v941
        %v949 = vpack.c.bf16 %v942, %v942
        %v956 = vunpack.c.l.b16 %v565
        %v957 = vunpack.c.l.b16 %v566
        %v958 = vunpack.c.l.b16 %v567
        %v959 = vunpack.c.l.b16 %v568
        %v960 = vunpack.c.l.b16 %v569
        %v961 = vunpack.c.l.b16 %v570
        %v962 = vpack.c.b16 %v957, %v956
        %v963 = vpack.c.b16 %v959, %v958
        %v964 = vpack.c.b16 %v961, %v960
        %v966 = vshrl.u32 %v962, 16
        %v968 = vrot.slane %v966, 5
        %v969 = vshll.u32 %v962, 16
        %v971 = vrot.slane %v969, 6
        %v972 = vor.u32 %v968, %v971
        %v974 = vshrl.u32 %v963, 16
        %v976 = vrot.slane %v974, 5
        %v977 = vshll.u32 %v963, 16
        %v979 = vrot.slane %v977, 6
        %v980 = vor.u32 %v976, %v979
        %v981 = vsel %vm888, %v972, %v980
        %v983 = vshrl.u32 %v964, 16
        %v985 = vrot.slane %v983, 5
        %v986 = vshll.u32 %v964, 16
        %v988 = vrot.slane %v986, 6
        %v989 = vor.u32 %v985, %v988
        %v990 = vsel %vm888, %v980, %v989
        %vm992 = vcmask 1043456
        %vm993 = vsmask.f32 3328
        %vm994 = vmand %vm992, %vm993
        %v995 = vsel %vm994, 0, %v972
        %vm996 = vcmask 1041408
        %v997 = vrot.slane %v885, 6
        %v998 = vrot.slane %v886, 6
        %v999 = vsel %vm996, %v997, %v998
        %v1000 = vrot.slane %v887, 6
        %v1001 = vsel %vm996, %v998, %v1000
        %v1003 = vsel %vm994, 0, %v997
        %v1010 = vunpack.c.l.b16 %v559
        %v1011 = vunpack.c.l.b16 %v560
        %v1012 = vunpack.c.l.b16 %v561
        %v1013 = vunpack.c.l.b16 %v562
        %v1014 = vunpack.c.l.b16 %v563
        %v1015 = vunpack.c.l.b16 %v564
        %v1016 = vpack.c.b16 %v1011, %v1010
        %v1017 = vpack.c.b16 %v1013, %v1012
        %v1018 = vpack.c.b16 %v1015, %v1014
        %v1019 = vpack.c.b16 %v956, %v956
        %vm1024 = vcmask 1040384
        %vm1025 = vsmask.f32 256
        %vm1026 = vmand %vm1024, %vm1025
        %v1027 = vsel %vm1026, 0, %v1016
        %v1028 = vunpack.c.l.bf16 %v1027
        %v1029 = vunpack.c.h.bf16 %v1027
        %v1030 = vunpack.c.l.bf16 %v1017
        %v1031 = vunpack.c.h.bf16 %v1017
        %v1032 = vunpack.c.l.bf16 %v1018
        %v1033 = vunpack.c.h.bf16 %v1018
        %v1034 = vunpack.c.l.bf16 %v1019
        %v1035 = vmul.f32 %v1028, %v929
        %v1036 = vmul.f32 %v1029, %v930
        %v1037 = vmul.f32 %v1030, %v931
        %v1038 = vmul.f32 %v1031, %v932
        %v1039 = vmul.f32 %v1032, %v933
        %v1040 = vmul.f32 %v1033, %v934
        %v1041 = vmul.f32 %v1034, %v935
        %v1042 = vpack.c.bf16 %v1035, %v1035
        %v1043 = vpack.c.bf16 %v1036, %v1036
        %v1044 = vpack.c.bf16 %v1037, %v1037
        %v1045 = vpack.c.bf16 %v1038, %v1038
        %v1046 = vpack.c.bf16 %v1039, %v1039
        %v1047 = vpack.c.bf16 %v1040, %v1040
        %v1048 = vpack.c.bf16 %v1041, %v1041
        %v1050 = vunpack.c.l.b16 %v577
        %v1051 = vpack.c.b16 %v1050, %v1050
        %vm1052 = vcmask 1046528
        %v1053 = vrot.slane %v885, 1
        %v1054 = vrot.slane %v886, 1
        %v1055 = vsel %vm1052, %v1053, %v1054
        %v1056 = vrot.slane %v887, 1
        %v1057 = vsel %vm1052, %v1054, %v1056
        %v1058 = vrot.slane %v1051, 1
        %v1059 = vsel %vm1052, %v1056, %v1058
        %v1064 = vsel %vm1026, 0, %v1055
        %v1065 = vunpack.c.l.bf16 %v1064
        %v1066 = vunpack.c.h.bf16 %v1064
        %v1067 = vunpack.c.l.bf16 %v1057
        %v1068 = vunpack.c.h.bf16 %v1057
        %v1069 = vunpack.c.l.bf16 %v1059
        %v1070 = vunpack.c.h.bf16 %v1059
        %v1071 = vunpack.c.l.bf16 %v1058
        %v1072 = vmul.f32 %v1065, %v929
        %v1073 = vmul.f32 %v1066, %v930
        %v1074 = vmul.f32 %v1067, %v931
        %v1075 = vmul.f32 %v1068, %v932
        %v1076 = vmul.f32 %v1069, %v933
        %v1077 = vmul.f32 %v1070, %v934
        %v1078 = vmul.f32 %v1071, %v935
        %v1079 = vpack.c.bf16 %v1072, %v1072
        %v1080 = vpack.c.bf16 %v1073, %v1073
        %v1081 = vpack.c.bf16 %v1074, %v1074
        %v1082 = vpack.c.bf16 %v1075, %v1075
        %v1083 = vpack.c.bf16 %v1076, %v1076
        %v1084 = vpack.c.bf16 %v1077, %v1077
        %v1085 = vpack.c.bf16 %v1078, %v1078
        %v1093 = vunpack.c.l.b16 %v943
        %v1094 = vunpack.c.l.b16 %v944
        %v1095 = vunpack.c.l.b16 %v945
        %v1096 = vunpack.c.l.b16 %v946
        %v1097 = vunpack.c.l.b16 %v947
        %v1098 = vunpack.c.l.b16 %v948
        %v1099 = vunpack.c.l.b16 %v949
        %v1100 = vpack.c.b16 %v1094, %v1093
        %v1101 = vpack.c.b16 %v1096, %v1095
        %v1102 = vpack.c.b16 %v1098, %v1097
        %v1103 = vpack.c.b16 %v1099, %v1099
        %1105 = vrot.lane.b32.xlu0 %v995, 32
        %v1106 = vpop.permute.xlu0 %1105
        %1107 = vrot.lane.b32.xlu0 %v981, 32
        %v1108 = vpop.permute.xlu0 %1107
        %1109 = vrot.lane.b32.xlu0 %v990, 32
        %v1110 = vpop.permute.xlu0 %1109
        %1111 = vrot.lane.b32.xlu0 %v985, 32
        %v1112 = vpop.permute.xlu0 %1111
        %1114 = vrot.lane.b32.xlu0 %v1003, 64
        %v1115 = vpop.permute.xlu0 %1114
        %1116 = vrot.lane.b32.xlu0 %v999, 64
        %v1117 = vpop.permute.xlu0 %1116
        %1118 = vrot.lane.b32.xlu0 %v1001, 64
        %v1119 = vpop.permute.xlu0 %1118
        %1120 = vrot.lane.b32.xlu0 %v1000, 64
        %v1121 = vpop.permute.xlu0 %1120
        %v1129 = vunpack.c.l.b16 %v1042
        %v1130 = vunpack.c.l.b16 %v1043
        %v1131 = vunpack.c.l.b16 %v1044
        %v1132 = vunpack.c.l.b16 %v1045
        %v1133 = vunpack.c.l.b16 %v1046
        %v1134 = vunpack.c.l.b16 %v1047
        %v1135 = vunpack.c.l.b16 %v1048
        %v1136 = vpack.c.b16 %v1130, %v1129
        %v1137 = vpack.c.b16 %v1132, %v1131
        %v1138 = vpack.c.b16 %v1134, %v1133
        %v1139 = vpack.c.b16 %v1135, %v1135
        %1140 = vrot.lane.b32.xlu0 %v1136, 96
        %v1141 = vpop.permute.xlu0 %1140
        %1142 = vrot.lane.b32.xlu0 %v1137, 96
        %v1143 = vpop.permute.xlu0 %1142
        %1144 = vrot.lane.b32.xlu0 %v1138, 96
        %v1145 = vpop.permute.xlu0 %1144
        %1146 = vrot.lane.b32.xlu0 %v1139, 96
        %v1147 = vpop.permute.xlu0 %1146
        %v1154 = vunpack.c.l.b16 %v553
        %v1155 = vunpack.c.l.b16 %v554
        %v1156 = vunpack.c.l.b16 %v555
        %v1157 = vunpack.c.l.b16 %v556
        %v1158 = vunpack.c.l.b16 %v557
        %v1159 = vunpack.c.l.b16 %v558
        %v1160 = vpack.c.b16 %v1155, %v1154
        %v1161 = vpack.c.b16 %v1157, %v1156
        %v1162 = vpack.c.b16 %v1159, %v1158
        %v1163 = vpack.c.b16 %v1010, %v1010
        %vm1164 = vsmask.f32 7424
        %v1166 = vshrl.u32 %v1016, 16
        %v1168 = vshll.u32 %v1016, 16
        %v1170 = vrot.slane %v1168, 1
        %v1171 = vor.u32 %v1166, %v1170
        %v1173 = vshll.u32 %v1017, 16
        %v1175 = vrot.slane %v1173, 1
        %v1176 = vsel %vm1164, %v1171, %v1175
        %v1177 = vshrl.u32 %v1017, 16
        %v1179 = vor.u32 %v1177, %v1175
        %v1181 = vshll.u32 %v1018, 16
        %v1183 = vrot.slane %v1181, 1
        %v1184 = vsel %vm1164, %v1179, %v1183
        %v1185 = vshrl.u32 %v1018, 16
        %v1187 = vor.u32 %v1185, %v1183
        %v1189 = vshll.u32 %v1019, 16
        %v1191 = vrot.slane %v1189, 1
        %v1192 = vsel %vm1164, %v1187, %v1191
        %v1193 = vshrl.u32 %v1019, 16
        %1195 = vrot.lane.b32.xlu0 %v1176, 32
        %v1196 = vpop.permute.xlu0 %1195
        %1197 = vrot.lane.b32.xlu0 %v1184, 32
        %v1198 = vpop.permute.xlu0 %1197
        %1199 = vrot.lane.b32.xlu0 %v1192, 32
        %v1200 = vpop.permute.xlu0 %1199
        %1201 = vrot.lane.b32.xlu0 %v1193, 32
        %v1202 = vpop.permute.xlu0 %1201
        %v1210 = vunpack.c.l.b16 %v1079
        %v1211 = vunpack.c.l.b16 %v1080
        %v1212 = vunpack.c.l.b16 %v1081
        %v1213 = vunpack.c.l.b16 %v1082
        %v1214 = vunpack.c.l.b16 %v1083
        %v1215 = vunpack.c.l.b16 %v1084
        %v1216 = vunpack.c.l.b16 %v1085
        %v1217 = vpack.c.b16 %v1211, %v1210
        %v1218 = vpack.c.b16 %v1213, %v1212
        %v1219 = vpack.c.b16 %v1215, %v1214
        %v1220 = vpack.c.b16 %v1216, %v1216
        %1221 = vrot.lane.b32.xlu0 %v1217, 64
        %v1222 = vpop.permute.xlu0 %1221
        %1223 = vrot.lane.b32.xlu0 %v1218, 64
        %v1224 = vpop.permute.xlu0 %1223
        %1225 = vrot.lane.b32.xlu0 %v1219, 64
        %v1226 = vpop.permute.xlu0 %1225
        %1227 = vrot.lane.b32.xlu0 %v1220, 64
        %v1228 = vpop.permute.xlu0 %1227
        %v1229 = vpack.c.b16 %v879, %v879
        %v1230 = vrot.slane %v962, 1
        %v1231 = vrot.slane %v963, 1
        %v1232 = vsel %vm1052, %v1230, %v1231
        %v1233 = vrot.slane %v964, 1
        %v1234 = vsel %vm1052, %v1231, %v1233
        %v1235 = vrot.slane %v1229, 1
        %v1236 = vsel %vm1052, %v1233, %v1235
        %1237 = vrot.lane.b32.xlu0 %v1232, 96
        %v1238 = vpop.permute.xlu0 %1237
        %1239 = vrot.lane.b32.xlu0 %v1234, 96
        %v1240 = vpop.permute.xlu0 %1239
        %1241 = vrot.lane.b32.xlu0 %v1236, 96
        %v1242 = vpop.permute.xlu0 %1241
        %1243 = vrot.lane.b32.xlu0 %v1235, 96
        %v1244 = vpop.permute.xlu0 %1243
        %vm1245 = vsmask.f32 6400
        %v1246 = vrot.slane %v890, 1
        %v1247 = vrot.slane %v893, 2
        %v1248 = vor.u32 %v1246, %v1247
        %v1249 = vrot.slane %v898, 1
        %v1250 = vrot.slane %v901, 2
        %v1251 = vor.u32 %v1249, %v1250
        %v1252 = vsel %vm1245, %v1248, %v1251
        %v1253 = vrot.slane %v907, 1
        %v1254 = vrot.slane %v910, 2
        %v1255 = vor.u32 %v1253, %v1254
        %v1256 = vsel %vm1245, %v1251, %v1255
        %v1258 = vshrl.u32 %v1051, 16
        %v1260 = vrot.slane %v1258, 1
        %v1261 = vshll.u32 %v1051, 16
        %v1263 = vrot.slane %v1261, 2
        %v1264 = vor.u32 %v1260, %v1263
        %v1265 = vsel %vm1245, %v1255, %v1264
        %vm1266 = vcmask 261120
        %v1269 = vsel %vm1266, %v1100, %v1106
        %v1272 = vsel %vm1266, %v1101, %v1108
        %v1275 = vsel %vm1266, %v1102, %v1110
        %v1278 = vsel %vm1266, %v1103, %v1112
        %vm1279 = vcmask 523264
        %v1281 = vsel %vm1279, %v1269, %v1115
        %v1283 = vsel %vm1279, %v1272, %v1117
        %v1285 = vsel %vm1279, %v1275, %v1119
        %v1287 = vsel %vm1279, %v1278, %v1121
        %vm1288 = vcmask 785408
        %v1290 = vsel %vm1288, %v1281, %v1141
        %v1293 = vsel %vm1288, %v1283, %v1143
        %v1296 = vsel %vm1288, %v1285, %v1145
        %v1299 = vsel %vm1288, %v1287, %v1147
        %v1303 = vsel %vm1266, %v1160, %v1196
        %v1306 = vsel %vm1266, %v1161, %v1198
        %v1309 = vsel %vm1266, %v1162, %v1200
        %v1312 = vsel %vm1266, %v1163, %v1202
        %v1314 = vsel %vm1279, %v1303, %v1222
        %v1316 = vsel %vm1279, %v1306, %v1224
        %v1318 = vsel %vm1279, %v1309, %v1226
        %v1320 = vsel %vm1279, %v1312, %v1228
        %v1322 = vsel %vm1288, %v1314, %v1238
        %v1325 = vsel %vm1288, %v1316, %v1240
        %v1328 = vsel %vm1288, %v1318, %v1242
        %v1331 = vsel %vm1288, %v1320, %v1244
        %v1334 = vperm.slane %v311, 0
        %v1372 = vunpack.c.l.b16 %v275
        %v1373 = vunpack.c.l.b16 %v276
        %v1374 = vunpack.c.l.b16 %v277
        %v1375 = vunpack.c.l.b16 %v278
        %v1376 = vunpack.c.l.b16 %v279
        %v1377 = vunpack.c.l.b16 %v280
        %v1378 = vunpack.c.l.b16 %v281
        %v1379 = vunpack.c.l.b16 %v282
        %v1380 = vunpack.c.l.b16 %v283
        %v1381 = vunpack.c.l.b16 %v284
        %v1382 = vunpack.c.l.b16 %v285
        %v1383 = vunpack.c.l.b16 %v286
        %v1384 = vunpack.c.l.b16 %v287
        %v1385 = vunpack.c.l.b16 %v288
        %v1386 = vunpack.c.l.b16 %v289
        %v1387 = vunpack.c.l.b16 %v290
        %v1388 = vunpack.c.l.b16 %v291
        %v1389 = vunpack.c.l.b16 %v292
        %v1390 = vunpack.c.l.b16 %v293
        %v1391 = vunpack.c.l.b16 %v294
        %v1392 = vunpack.c.l.b16 %v295
        %v1393 = vunpack.c.l.b16 %v296
        %v1394 = vunpack.c.l.b16 %v297
        %v1395 = vunpack.c.l.b16 %v298
        %v1396 = vunpack.c.l.b16 %v299
        %v1397 = vunpack.c.l.b16 %v300
        %v1398 = vunpack.c.l.b16 %v301
        %v1399 = vunpack.c.l.b16 %v302
        %v1400 = vunpack.c.l.b16 %v303
        %v1401 = vunpack.c.l.b16 %v304
        %v1402 = vunpack.c.l.b16 %v305
        %v1403 = vunpack.c.l.b16 %v306
        %v1404 = vunpack.c.l.b16 %v307
        %v1405 = vunpack.c.l.b16 %v308
        %v1406 = vunpack.c.l.b16 %v309
        %v1407 = vunpack.c.l.b16 %v310
        %v1408 = vpack.c.b16 %v1373, %v1372
        %v1409 = vpack.c.b16 %v1375, %v1374
        %v1410 = vpack.c.b16 %v1377, %v1376
        %v1411 = vpack.c.b16 %v1379, %v1378
        %v1412 = vpack.c.b16 %v1381, %v1380
        %v1413 = vpack.c.b16 %v1383, %v1382
        %v1414 = vpack.c.b16 %v1385, %v1384
        %v1415 = vpack.c.b16 %v1387, %v1386
        %v1416 = vpack.c.b16 %v1389, %v1388
        %v1417 = vpack.c.b16 %v1391, %v1390
        %v1418 = vpack.c.b16 %v1393, %v1392
        %v1419 = vpack.c.b16 %v1395, %v1394
        %v1420 = vpack.c.b16 %v1397, %v1396
        %v1421 = vpack.c.b16 %v1399, %v1398
        %v1422 = vpack.c.b16 %v1401, %v1400
        %v1423 = vpack.c.b16 %v1403, %v1402
        %v1424 = vpack.c.b16 %v1405, %v1404
        %v1425 = vpack.c.b16 %v1407, %v1406
        %v1445 = vsel %vm1266, %v1252, 0
        %v1448 = vsel %vm1266, %v1256, 0
        %v1451 = vsel %vm1266, %v1265, 0
        %v1454 = vsel %vm1266, %v1260, 0
        %1456 = vmatpush.bf16.msra.mxu0 %v1415
        %1457 = vmatpush.bf16.msra.mxu0 %v1414
        %1458 = vmatpush.bf16.msra.mxu0 %v1413
        %1459 = vmatpush.bf16.msra.mxu0 %v1412
        %1460 = vmatpush.bf16.msra.mxu0 %v1411
        %1461 = vmatpush.bf16.msra.mxu0 %v1410
        %1462 = vmatpush.bf16.msra.mxu0 %v1409
        %1463 = vmatpush.bf16.msra.mxu0 %v1408
        %1464 = vmatmul.bf16.gmra.mxu0 %v1290
        %v1465 = vpop.f32.mrf.mxu0
        %v1466 = vadd.f32 %v1334, %v1465
        %v1467 = vpop.f32.mrf.mxu0
        %v1468 = vadd.f32 %v1334, %v1467
        %1469 = vmatmul.bf16.gmra.mxu0 %v1293
        %v1470 = vpop.f32.mrf.mxu0
        %v1471 = vadd.f32 %v1334, %v1470
        %v1472 = vpop.f32.mrf.mxu0
        %v1473 = vadd.f32 %v1334, %v1472
        %1474 = vmatmul.bf16.gmra.mxu0 %v1296
        %v1475 = vpop.f32.mrf.mxu0
        %v1476 = vadd.f32 %v1334, %v1475
        %v1477 = vpop.f32.mrf.mxu0
        %v1478 = vadd.f32 %v1334, %v1477
        %1479 = vmatmul.bf16.gmra.mxu0 %v1299
        %v1480 = vpop.f32.mrf.mxu0
        %v1481 = vadd.f32 %v1334, %v1480
        %v1482 = vpop.f32.mrf.mxu0
        %1483 = vdwg.mxu0
        %1484 = vmatpush.bf16.msra.mxu0 %v1423
        %1485 = vmatpush.bf16.msra.mxu0 %v1422
        %1486 = vmatpush.bf16.msra.mxu0 %v1421
        %1487 = vmatpush.bf16.msra.mxu0 %v1420
        %1488 = vmatpush.bf16.msra.mxu0 %v1419
        %1489 = vmatpush.bf16.msra.mxu0 %v1418
        %1490 = vmatpush.bf16.msra.mxu0 %v1417
        %1491 = vmatpush.bf16.msra.mxu0 %v1416
        %1492 = vmatmul.bf16.gmra.mxu0 %v1322
        %v1493 = vpop.f32.mrf.mxu0
        %v1494 = vadd.f32 %v1466, %v1493
        %v1495 = vpop.f32.mrf.mxu0
        %v1496 = vadd.f32 %v1468, %v1495
        %1497 = vmatmul.bf16.gmra.mxu0 %v1325
        %v1498 = vpop.f32.mrf.mxu0
        %v1499 = vadd.f32 %v1471, %v1498
        %v1500 = vpop.f32.mrf.mxu0
        %v1501 = vadd.f32 %v1473, %v1500
        %1502 = vmatmul.bf16.gmra.mxu0 %v1328
        %v1503 = vpop.f32.mrf.mxu0
        %v1504 = vadd.f32 %v1476, %v1503
        %v1505 = vpop.f32.mrf.mxu0
        %v1506 = vadd.f32 %v1478, %v1505
        %1507 = vmatmul.bf16.gmra.mxu0 %v1331
        %v1508 = vpop.f32.mrf.mxu0
        %v1509 = vadd.f32 %v1481, %v1508
        %v1510 = vpop.f32.mrf.mxu0
        %1511 = vdwg.mxu0
        %1512 = vmatpush.bf16.msra.mxu0 0
        %1513 = vmatpush.bf16.msra.mxu0 0
        %1514 = vmatpush.bf16.msra.mxu0 0
        %1515 = vmatpush.bf16.msra.mxu0 0
        %1516 = vmatpush.bf16.msra.mxu0 0
        %1517 = vmatpush.bf16.msra.mxu0 0
        %1518 = vmatpush.bf16.msra.mxu0 %v1425
        %1519 = vmatpush.bf16.msra.mxu0 %v1424
        %1520 = vmatmul.bf16.gmra.mxu0 %v1445
        %v1521 = vpop.f32.mrf.mxu0
        %v1522 = vadd.f32 %v1494, %v1521
        %v1523 = vpop.f32.mrf.mxu0
        %v1524 = vadd.f32 %v1496, %v1523
        %1525 = vmatmul.bf16.gmra.mxu0 %v1448
        %v1526 = vpop.f32.mrf.mxu0
        %v1527 = vadd.f32 %v1499, %v1526
        %v1528 = vpop.f32.mrf.mxu0
        %v1529 = vadd.f32 %v1501, %v1528
        %1530 = vmatmul.bf16.gmra.mxu0 %v1451
        %v1531 = vpop.f32.mrf.mxu0
        %v1532 = vadd.f32 %v1504, %v1531
        %v1533 = vpop.f32.mrf.mxu0
        %v1534 = vadd.f32 %v1506, %v1533
        %1535 = vmatmul.bf16.gmra.mxu0 %v1454
        %v1536 = vpop.f32.mrf.mxu0
        %v1537 = vadd.f32 %v1509, %v1536
        %v1538 = vpop.f32.mrf.mxu0
        %1539 = vdwg.mxu0
        %v1540 = vmax.f32 %v1522, 0.0
        %v1541 = vmax.f32 %v1524, 0.0
        %v1542 = vmax.f32 %v1527, 0.0
        %v1543 = vmax.f32 %v1529, 0.0
        %v1544 = vmax.f32 %v1532, 0.0
        %v1545 = vmax.f32 %v1534, 0.0
        %v1546 = vmax.f32 %v1537, 0.0
        %v1547 = vpack.c.bf16 %v1540, %v1540
        %v1548 = vpack.c.bf16 %v1541, %v1541
        %v1549 = vpack.c.bf16 %v1542, %v1542
        %v1550 = vpack.c.bf16 %v1543, %v1543
        %v1551 = vpack.c.bf16 %v1544, %v1544
        %v1552 = vpack.c.bf16 %v1545, %v1545
        %v1553 = vpack.c.bf16 %v1546, %v1546
        %vm1554 = vcmask 519168
        %1555 = vst.msk [vmem:[%s270] sm:$0xf] %vm1554, %v1547
        %1556 = vst.msk [vmem:[%s270 + $0x4] sm:$0xf] %vm1554, %v1548
        %1557 = vst.msk [vmem:[%s270 + $0x8] sm:$0xf] %vm1554, %v1549
        %1558 = vst.msk [vmem:[%s270 + $0xc] sm:$0xf] %vm1554, %v1550
        %1559 = vst.msk [vmem:[%s270 + $0x10] sm:$0xf] %vm1554, %v1551
        %1560 = vst.msk [vmem:[%s270 + $0x14] sm:$0xf] %vm1554, %v1552
        %vm1561 = vcmask 516096
        %vm1562 = vmand %vm1561, %vm1025
        %v1563 = vld [vmem:[%s270 + $0x18] sm:$0x1]
        %v1564 = vsel %vm1562, %v1553, %v1563
        %1565 = vst [vmem:[%s270 + $0x18] sm:$0x1] %v1564
        %p1566 = scmp.lt.s32.totalorder %s18, 1
        %s1567 = scalar_select %p1566, %s18, 1
        %s1568 = smul.addr %s1567, 7
        %s1569 = smul.addr %s1568, 4
        %s1570 = scalar_lea.vmem %s5, %s1569
        // Predicated region
        $region53: #{cnn_encoder.2} parent=39 // pred_check
          %p1571 = pneg %p146
        $region54: #{cnn_encoder.2} parent=39 // pred_check_branch
          %1573 = sbr.rel (%p1571) target = $region56
        $region55: #{cnn_encoder.2} parent=39 // pred_region
          _
        $region56: #{cnn_encoder.2} parent=39 // pred_fallthru
          _
      $region40: #{cnn_encoder.2} parent=5 // pred_fallthru
        _
      %p1574 = scmp.le.s32.totalorder 2, %s13
      // Predicated region
      $region57: #{cnn_encoder.2} parent=5 // pred_check
        %p1575 = pneg %p1574
      $region58: #{cnn_encoder.2} parent=5 // pred_check_branch
        %1577 = sbr.rel (%p1575) target = $region60
      $region59: #{cnn_encoder.2} parent=5 // pred_region
        %s1578 = ssub.s32 %s13, 2
        // Predicated region
        $region61: #{cnn_encoder.2} parent=59 // pred_check
          %p1579 = pneg %p152
        $region62: #{cnn_encoder.2} parent=59 // pred_check_branch
          %1581 = sbr.rel (%p1579) target = $region64
        $region63: #{cnn_encoder.2} parent=59 // pred_region
          %p1582 = scmp.lt.s32.totalorder %s19, 1
          %s1583 = scalar_select %p1582, %s19, 1
          %s1584 = smul.addr %s1583, 7
          %s1585 = smul.addr %s1584, 4
          %s1586 = scalar_lea.vmem %s5, %s1585
        $region64: #{cnn_encoder.2} parent=59 // pred_fallthru
          _
      $region60: #{cnn_encoder.2} parent=5 // pred_fallthru
        _
    $region6: #{cnn_encoder.2} parent=1 // loop_footer
      %s17 = sadd.s32 1, %s13
    $region7: #{cnn_encoder.2} parent=1 // loop_footer_branch
      %12 = sbr.rel target = $region3
    $region8: #{cnn_encoder.2} parent=1 // loop_exit
      _
    %1587 = vsyncpa [#allocation3], 1
    %s1588 = scalar_lea.sflag [#allocation3], 1
    %1589 = vsyncpa %s1588, 1
    %1590 = vsyncpa [#allocation5], 1

// kernel: cnn_encoder.3
$region0: #{cnn_encoder.3}
  #allocation0 [shape = 'u32[]', space=smem, size = 0x4, offset = 0x4, fixed_abs, tag = 'smem constant byte address 0x4 - core index']
  #allocation1 [shape = 'u32[72,128]{1,0:T(1,128)}', space=vmem, size = 0x9000, scoped, tag = 'internal scratch']
  %s0 = inlined_call_operand.vmem [shape: bf16[2,3136], index: 0, kind: input, shape index: {}]
  %s1 = inlined_call_operand.hbm [shape: bf16[3136,256], index: 1, kind: input, shape index: {}]
  %s2 = inlined_call_operand.hbm [shape: f32[1,256], index: 2, kind: input, shape index: {}]
  %s3 = inlined_call_operand.hbm [shape: bf16[256,128], index: 3, kind: input, shape index: {}]
  %s4 = inlined_call_operand.hbm [shape: f32[1,128], index: 4, kind: input, shape index: {}]
  %s5 = inlined_call_operand.hbm [shape: f32[2,128], index: 5, kind: output, shape index: {}]
  %s6 = sld [smem:[#allocation0]]
  $region46: #{cnn_encoder.3} parent=0
    _
  %s8 = ssub.s32 1, %s6
  %s9 = scalar_select 0, %s8, %s6
  $region1: #{cnn_encoder.3} parent=0
    #allocation2 [shape = 'u8[1605632]{0}', space=vmem, size = 0x188000, scoped, tag = 'input window, operand 1, single buffered']
    #allocation3 [shape = 's32[1]{0}', space=sflag, size = 0x4, scoped, tag = 'scoped memory for cnn_encoder.3']
    #allocation4 [shape = 's32[1]{0}', space=sflag, size = 0x4, scoped, tag = 'scoped memory for cnn_encoder.3']
    #allocation5 [shape = 'u8[1024]{0}', space=vmem, size = 0x400, scoped, tag = 'input window, operand 2, single buffered']
    #allocation6 [shape = 's32[1]{0}', space=sflag, size = 0x4, scoped, tag = 'scoped memory for cnn_encoder.3']
    #allocation7 [shape = 'u8[65536]{0}', space=vmem, size = 0x10000, scoped, tag = 'input window, operand 3, single buffered']
    #allocation8 [shape = 'u8[512]{0}', space=vmem, size = 0x400, scoped, tag = 'input window, operand 4, single buffered']
    #allocation9 [shape = 's32[1]{0}', space=sflag, size = 0x4, scoped, tag = 'scoped memory for cnn_encoder.3']
    #allocation10 [shape = 'u8[1024]{0}', space=vmem, size = 0x400, scoped, tag = 'output window, operand 0, single buffered']
    %10 = vsyncpa [#allocation3], 0
    %11 = vsyncpa [#allocation6], 0
    %12 = vsyncpa [#allocation9], 0
    %13 = vsyncpa [#allocation4], 0
    // Predicated region
    $region2: #{cnn_encoder.3} parent=1 // pred_check
      _
    $region3: #{cnn_encoder.3} parent=1 // pred_check_branch
      %15 = sbr.rel (0) target = $region5
    $region4: #{cnn_encoder.3} parent=1 // pred_region
      _
    $region5: #{cnn_encoder.3} parent=1 // pred_fallthru
      _
    // Predicated region
    $region6: #{cnn_encoder.3} parent=1 // pred_check
      _
    $region7: #{cnn_encoder.3} parent=1 // pred_check_branch
      %17 = sbr.rel (0) target = $region9
    $region8: #{cnn_encoder.3} parent=1 // pred_region
      %19 = vsyncadd [#allocation3], 0
      %s20 = sshll.u32 %s1, 4
      %s21 = int_to_ptr.hbm [resolvable:$true] %s20
      %s22 = sshll.u32 [#allocation2], 4
      %s23 = int_to_ptr.vmem [resolvable:$true] %s22
      %28 = dma.hbm_to_vmem [thread:$0]  %s21, 50176, %s23, [#allocation3], 128, 128, 8
    $region9: #{cnn_encoder.3} parent=1 // pred_fallthru
      _
    // Predicated region
    $region10: #{cnn_encoder.3} parent=1 // pred_check
      _
    $region11: #{cnn_encoder.3} parent=1 // pred_check_branch
      %30 = sbr.rel (0) target = $region13
    $region12: #{cnn_encoder.3} parent=1 // pred_region
      %32 = vsyncadd [#allocation6], 0
      %s34 = sshll.u32 %s2, 4
      %s35 = int_to_ptr.hbm [resolvable:$true] %s34
      %s36 = sshll.u32 [#allocation5], 4
      %s37 = int_to_ptr.vmem [resolvable:$true] %s36
      %39 = dma.hbm_to_vmem [thread:$0]  %s35, 32, %s37, [#allocation6]
    $region13: #{cnn_encoder.3} parent=1 // pred_fallthru
      _
    // Predicated region
    $region14: #{cnn_encoder.3} parent=1 // pred_check
      _
    $region15: #{cnn_encoder.3} parent=1 // pred_check_branch
      %41 = sbr.rel (0) target = $region17
    $region16: #{cnn_encoder.3} parent=1 // pred_region
      %43 = vsyncadd [#allocation6], 0
      %s44 = sshll.u32 %s3, 4
      %s45 = int_to_ptr.hbm [resolvable:$true] %s44
      %s46 = sshll.u32 [#allocation7], 4
      %s47 = int_to_ptr.vmem [resolvable:$true] %s46
      %52 = dma.hbm_to_vmem [thread:$0]  %s45, 2048, %s47, [#allocation6], 64, 64, 4
    $region17: #{cnn_encoder.3} parent=1 // pred_fallthru
      _
    // Predicated region
    $region18: #{cnn_encoder.3} parent=1 // pred_check
      _
    $region19: #{cnn_encoder.3} parent=1 // pred_check_branch
      %54 = sbr.rel (0) target = $region21
    $region20: #{cnn_encoder.3} parent=1 // pred_region
      %56 = vsyncadd [#allocation9], 0
      %s58 = sshll.u32 %s4, 4
      %s59 = int_to_ptr.hbm [resolvable:$true] %s58
      %s60 = sshll.u32 [#allocation8], 4
      %s61 = int_to_ptr.vmem [resolvable:$true] %s60
      %63 = dma.hbm_to_vmem [thread:$0]  %s59, 16, %s61, [#allocation9]
    $region21: #{cnn_encoder.3} parent=1 // pred_fallthru
      _
    // Predicated region
    $region22: #{cnn_encoder.3} parent=1 // pred_check
      _
    $region23: #{cnn_encoder.3} parent=1 // pred_check_branch
      %65 = sbr.rel (0) target = $region25
    $region24: #{cnn_encoder.3} parent=1 // pred_region
      %67 = dma.done [#allocation3], 50176
    $region25: #{cnn_encoder.3} parent=1 // pred_fallthru
      _
    // Predicated region
    $region26: #{cnn_encoder.3} parent=1 // pred_check
      _
    $region27: #{cnn_encoder.3} parent=1 // pred_check_branch
      %69 = sbr.rel (0) target = $region29
    $region28: #{cnn_encoder.3} parent=1 // pred_region
      %71 = dma.done [#allocation6], 32
    $region29: #{cnn_encoder.3} parent=1 // pred_fallthru
      _
    // Predicated region
    $region30: #{cnn_encoder.3} parent=1 // pred_check
      _
    $region31: #{cnn_encoder.3} parent=1 // pred_check_branch
      %73 = sbr.rel (0) target = $region33
    $region32: #{cnn_encoder.3} parent=1 // pred_region
      %75 = dma.done [#allocation6], 2048
    $region33: #{cnn_encoder.3} parent=1 // pred_fallthru
      _
    // Predicated region
    $region34: #{cnn_encoder.3} parent=1 // pred_check
      _
    $region35: #{cnn_encoder.3} parent=1 // pred_check_branch
      %77 = sbr.rel (0) target = $region37
    $region36: #{cnn_encoder.3} parent=1 // pred_region
      %79 = dma.done [#allocation9], 16
    $region37: #{cnn_encoder.3} parent=1 // pred_fallthru
      _
    %v81 = vld [vmem:[%s0] sm:$0xff]
    %v82 = vld [vmem:[%s0 + $0x8] sm:$0xff]
    %v83 = vld [vmem:[%s0 + $0x10] sm:$0xff]
    %v84 = vld [vmem:[%s0 + $0x18] sm:$0x1]
    %v85 = vld [vmem:[#allocation2] sm:$0xff]
    %v86 = vld [vmem:[#allocation2 + $0x8] sm:$0xff]
    %v87 = vld [vmem:[#allocation2 + $0x10] sm:$0xff]
    %v88 = vld [vmem:[#allocation2 + $0x18] sm:$0xff]
    %v89 = vld [vmem:[#allocation2 + $0x20] sm:$0xff]
    %v90 = vld [vmem:[#allocation2 + $0x28] sm:$0xff]
    %v91 = vld [vmem:[#allocation2 + $0x30] sm:$0xff]
    %v92 = vld [vmem:[#allocation2 + $0x38] sm:$0xff]
    %v93 = vld [vmem:[#allocation2 + $0x40] sm:$0xff]
    %v94 = vld [vmem:[#allocation2 + $0x48] sm:$0xff]
    %v95 = vld [vmem:[#allocation2 + $0x50] sm:$0xff]
    %v96 = vld [vmem:[#allocation2 + $0x58] sm:$0xff]
    %v97 = vld [vmem:[#allocation2 + $0x60] sm:$0xff]
    %v98 = vld [vmem:[#allocation2 + $0x68] sm:$0xff]
    %v99 = vld [vmem:[#allocation2 + $0x70] sm:$0xff]
    %v100 = vld [vmem:[#allocation2 + $0x78] sm:$0xff]
    %v101 = vld [vmem:[#allocation2 + $0x80] sm:$0xff]
    %v102 = vld [vmem:[#allocation2 + $0x88] sm:$0xff]
    %v103 = vld [vmem:[#allocation2 + $0x90] sm:$0xff]
    %v104 = vld [vmem:[#allocation2 + $0x98] sm:$0xff]
    %v105 = vld [vmem:[#allocation2 + $0xa0] sm:$0xff]
    %v106 = vld [vmem:[#allocation2 + $0xa8] sm:$0xff]
    %v107 = vld [vmem:[#allocation2 + $0xb0] sm:$0xff]
    %v108 = vld [vmem:[#allocation2 + $0xb8] sm:$0xff]
    %v109 = vld [vmem:[#allocation2 + $0xc0] sm:$0xff]
    %v110 = vld [vmem:[#allocation2 + $0xc8] sm:$0xff]
    %v111 = vld [vmem:[#allocation2 + $0xd0] sm:$0xff]
    %v112 = vld [vmem:[#allocation2 + $0xd8] sm:$0xff]
    %v113 = vld [vmem:[#allocation2 + $0xe0] sm:$0xff]
    %v114 = vld [vmem:[#allocation2 + $0xe8] sm:$0xff]
    %v115 = vld [vmem:[#allocation2 + $0xf0] sm:$0xff]
    %v116 = vld [vmem:[#allocation2 + $0xf8] sm:$0xff]
    %v117 = vld [vmem:[#allocation2 + $0x100] sm:$0xff]
    %v118 = vld [vmem:[#allocation2 + $0x108] sm:$0xff]
    %v119 = vld [vmem:[#allocation2 + $0x110] sm:$0xff]
    %v120 = vld [vmem:[#allocation2 + $0x118] sm:$0xff]
    %v121 = vld [vmem:[#allocation2 + $0x120] sm:$0xff]
    %v122 = vld [vmem:[#allocation2 + $0x128] sm:$0xff]
    %v123 = vld [vmem:[#allocation2 + $0x130] sm:$0xff]
    %v124 = vld [vmem:[#allocation2 + $0x138] sm:$0xff]
    %v125 = vld [vmem:[#allocation2 + $0x140] sm:$0xff]
    %v126 = vld [vmem:[#allocation2 + $0x148] sm:$0xff]
    %v127 = vld [vmem:[#allocation2 + $0x150] sm:$0xff]
    %v128 = vld [vmem:[#allocation2 + $0x158] sm:$0xff]
    %v129 = vld [vmem:[#allocation2 + $0x160] sm:$0xff]
    %v130 = vld [vmem:[#allocation2 + $0x168] sm:$0xff]
    %v131 = vld [vmem:[#allocation2 + $0x170] sm:$0xff]
    %v132 = vld [vmem:[#allocation2 + $0x178] sm:$0xff]
    %v133 = vld [vmem:[#allocation2 + $0x180] sm:$0xff]
    %v134 = vld [vmem:[#allocation2 + $0x188] sm:$0xff]
    %v135 = vld [vmem:[#allocation2 + $0x190] sm:$0xff]
    %v136 = vld [vmem:[#allocation2 + $0x198] sm:$0xff]
    %v137 = vld [vmem:[#allocation2 + $0x1a0] sm:$0xff]
    %v138 = vld [vmem:[#allocation2 + $0x1a8] sm:$0xff]
    %v139 = vld [vmem:[#allocation2 + $0x1b0] sm:$0xff]
    %v140 = vld [vmem:[#allocation2 + $0x1b8] sm:$0xff]
    %v141 = vld [vmem:[#allocation2 + $0x1c0] sm:$0xff]
    %v142 = vld [vmem:[#allocation2 + $0x1c8] sm:$0xff]
    %v143 = vld [vmem:[#allocation2 + $0x1d0] sm:$0xff]
    %v144 = vld [vmem:[#allocation2 + $0x1d8] sm:$0xff]
    %v145 = vld [vmem:[#allocation2 + $0x1e0] sm:$0xff]
    %v146 = vld [vmem:[#allocation2 + $0x1e8] sm:$0xff]
    %v147 = vld [vmem:[#allocation2 + $0x1f0] sm:$0xff]
    %v148 = vld [vmem:[#allocation2 + $0x1f8] sm:$0xff]
    %v149 = vld [vmem:[#allocation2 + $0x200] sm:$0xff]
    %v150 = vld [vmem:[#allocation2 + $0x208] sm:$0xff]
    %v151 = vld [vmem:[#allocation2 + $0x210] sm:$0xff]
    %v152 = vld [vmem:[#allocation2 + $0x218] sm:$0xff]
    %v153 = vld [vmem:[#allocation2 + $0x220] sm:$0xff]
    %v154 = vld [vmem:[#allocation2 + $0x228] sm:$0xff]
    %v155 = vld [vmem:[#allocation2 + $0x230] sm:$0xff]
    %v156 = vld [vmem:[#allocation2 + $0x238] sm:$0xff]
    %v157 = vld [vmem:[#allocation2 + $0x240] sm:$0xff]
    %v158 = vld [vmem:[#allocation2 + $0x248] sm:$0xff]
    %v159 = vld [vmem:[#allocation2 + $0x250] sm:$0xff]
    %v160 = vld [vmem:[#allocation2 + $0x258] sm:$0xff]
    %v161 = vld [vmem:[#allocation2 + $0x260] sm:$0xff]
    %v162 = vld [vmem:[#allocation2 + $0x268] sm:$0xff]
    %v163 = vld [vmem:[#allocation2 + $0x270] sm:$0xff]
    %v164 = vld [vmem:[#allocation2 + $0x278] sm:$0xff]
    %v165 = vld [vmem:[#allocation2 + $0x280] sm:$0xff]
    %v166 = vld [vmem:[#allocation2 + $0x288] sm:$0xff]
    %v167 = vld [vmem:[#allocation2 + $0x290] sm:$0xff]
    %v168 = vld [vmem:[#allocation2 + $0x298] sm:$0xff]
    %v169 = vld [vmem:[#allocation2 + $0x2a0] sm:$0xff]
    %v170 = vld [vmem:[#allocation2 + $0x2a8] sm:$0xff]
    %v171 = vld [vmem:[#allocation2 + $0x2b0] sm:$0xff]
    %v172 = vld [vmem:[#allocation2 + $0x2b8] sm:$0xff]
    %v173 = vld [vmem:[#allocation2 + $0x2c0] sm:$0xff]
    %v174 = vld [vmem:[#allocation2 + $0x2c8] sm:$0xff]
    %v175 = vld [vmem:[#allocation2 + $0x2d0] sm:$0xff]
    %v176 = vld [vmem:[#allocation2 + $0x2d8] sm:$0xff]
    %v177 = vld [vmem:[#allocation2 + $0x2e0] sm:$0xff]
    %v178 = vld [vmem:[#allocation2 + $0x2e8] sm:$0xff]
    %v179 = vld [vmem:[#allocation2 + $0x2f0] sm:$0xff]
    %v180 = vld [vmem:[#allocation2 + $0x2f8] sm:$0xff]
    %v181 = vld [vmem:[#allocation2 + $0x300] sm:$0xff]
    %v182 = vld [vmem:[#allocation2 + $0x308] sm:$0xff]
    %v183 = vld [vmem:[#allocation2 + $0x310] sm:$0xff]
    %v184 = vld [vmem:[#allocation2 + $0x318] sm:$0xff]
    %v185 = vld [vmem:[#allocation2 + $0x320] sm:$0xff]
    %v186 = vld [vmem:[#allocation2 + $0x328] sm:$0xff]
    %v187 = vld [vmem:[#allocation2 + $0x330] sm:$0xff]
    %v188 = vld [vmem:[#allocation2 + $0x338] sm:$0xff]
    %v189 = vld [vmem:[#allocation2 + $0x340] sm:$0xff]
    %v190 = vld [vmem:[#allocation2 + $0x348] sm:$0xff]
    %v191 = vld [vmem:[#allocation2 + $0x350] sm:$0xff]
    %v192 = vld [vmem:[#allocation2 + $0x358] sm:$0xff]
    %v193 = vld [vmem:[#allocation2 + $0x360] sm:$0xff]
    %v194 = vld [vmem:[#allocation2 + $0x368] sm:$0xff]
    %v195 = vld [vmem:[#allocation2 + $0x370] sm:$0xff]
    %v196 = vld [vmem:[#allocation2 + $0x378] sm:$0xff]
    %v197 = vld [vmem:[#allocation2 + $0x380] sm:$0xff]
    %v198 = vld [vmem:[#allocation2 + $0x388] sm:$0xff]
    %v199 = vld [vmem:[#allocation2 + $0x390] sm:$0xff]
    %v200 = vld [vmem:[#allocation2 + $0x398] sm:$0xff]
    %v201 = vld [vmem:[#allocation2 + $0x3a0] sm:$0xff]
    %v202 = vld [vmem:[#allocation2 + $0x3a8] sm:$0xff]
    %v203 = vld [vmem:[#allocation2 + $0x3b0] sm:$0xff]
    %v204 = vld [vmem:[#allocation2 + $0x3b8] sm:$0xff]
    %v205 = vld [vmem:[#allocation2 + $0x3c0] sm:$0xff]
    %v206 = vld [vmem:[#allocation2 + $0x3c8] sm:$0xff]
    %v207 = vld [vmem:[#allocation2 + $0x3d0] sm:$0xff]
    %v208 = vld [vmem:[#allocation2 + $0x3d8] sm:$0xff]
    %v209 = vld [vmem:[#allocation2 + $0x3e0] sm:$0xff]
    %v210 = vld [vmem:[#allocation2 + $0x3e8] sm:$0xff]
    %v211 = vld [vmem:[#allocation2 + $0x3f0] sm:$0xff]
    %v212 = vld [vmem:[#allocation2 + $0x3f8] sm:$0xff]
    %v213 = vld [vmem:[#allocation2 + $0x400] sm:$0xff]
    %v214 = vld [vmem:[#allocation2 + $0x408] sm:$0xff]
    %v215 = vld [vmem:[#allocation2 + $0x410] sm:$0xff]
    %v216 = vld [vmem:[#allocation2 + $0x418] sm:$0xff]
    %v217 = vld [vmem:[#allocation2 + $0x420] sm:$0xff]
    %v218 = vld [vmem:[#allocation2 + $0x428] sm:$0xff]
    %v219 = vld [vmem:[#allocation2 + $0x430] sm:$0xff]
    %v220 = vld [vmem:[#allocation2 + $0x438] sm:$0xff]
    %v221 = vld [vmem:[#allocation2 + $0x440] sm:$0xff]
    %v222 = vld [vmem:[#allocation2 + $0x448] sm:$0xff]
    %v223 = vld [vmem:[#allocation2 + $0x450] sm:$0xff]
    %v224 = vld [vmem:[#allocation2 + $0x458] sm:$0xff]
    %v225 = vld [vmem:[#allocation2 + $0x460] sm:$0xff]
    %v226 = vld [vmem:[#allocation2 + $0x468] sm:$0xff]
    %v227 = vld [vmem:[#allocation2 + $0x470] sm:$0xff]
    %v228 = vld [vmem:[#allocation2 + $0x478] sm:$0xff]
    %v229 = vld [vmem:[#allocation2 + $0x480] sm:$0xff]
    %v230 = vld [vmem:[#allocation2 + $0x488] sm:$0xff]
    %v231 = vld [vmem:[#allocation2 + $0x490] sm:$0xff]
    %v232 = vld [vmem:[#allocation2 + $0x498] sm:$0xff]
    %v233 = vld [vmem:[#allocation2 + $0x4a0] sm:$0xff]
    %v234 = vld [vmem:[#allocation2 + $0x4a8] sm:$0xff]
    %v235 = vld [vmem:[#allocation2 + $0x4b0] sm:$0xff]
    %v236 = vld [vmem:[#allocation2 + $0x4b8] sm:$0xff]
    %v237 = vld [vmem:[#allocation2 + $0x4c0] sm:$0xff]
    %v238 = vld [vmem:[#allocation2 + $0x4c8] sm:$0xff]
    %v239 = vld [vmem:[#allocation2 + $0x4d0] sm:$0xff]
    %v240 = vld [vmem:[#allocation2 + $0x4d8] sm:$0xff]
    %v241 = vld [vmem:[#allocation2 + $0x4e0] sm:$0xff]
    %v242 = vld [vmem:[#allocation2 + $0x4e8] sm:$0xff]
    %v243 = vld [vmem:[#allocation2 + $0x4f0] sm:$0xff]
    %v244 = vld [vmem:[#allocation2 + $0x4f8] sm:$0xff]
    %v245 = vld [vmem:[#allocation2 + $0x500] sm:$0xff]
    %v246 = vld [vmem:[#allocation2 + $0x508] sm:$0xff]
    %v247 = vld [vmem:[#allocation2 + $0x510] sm:$0xff]
    %v248 = vld [vmem:[#allocation2 + $0x518] sm:$0xff]
    %v249 = vld [vmem:[#allocation2 + $0x520] sm:$0xff]
    %v250 = vld [vmem:[#allocation2 + $0x528] sm:$0xff]
    %v251 = vld [vmem:[#allocation2 + $0x530] sm:$0xff]
    %v252 = vld [vmem:[#allocation2 + $0x538] sm:$0xff]
    %v253 = vld [vmem:[#allocation2 + $0x540] sm:$0xff]
    %v254 = vld [vmem:[#allocation2 + $0x548] sm:$0xff]
    %v255 = vld [vmem:[#allocation2 + $0x550] sm:$0xff]
    %v256 = vld [vmem:[#allocation2 + $0x558] sm:$0xff]
    %v257 = vld [vmem:[#allocation2 + $0x560] sm:$0xff]
    %v258 = vld [vmem:[#allocation2 + $0x568] sm:$0xff]
    %v259 = vld [vmem:[#allocation2 + $0x570] sm:$0xff]
    %v260 = vld [vmem:[#allocation2 + $0x578] sm:$0xff]
    %v261 = vld [vmem:[#allocation2 + $0x580] sm:$0xff]
    %v262 = vld [vmem:[#allocation2 + $0x588] sm:$0xff]
    %v263 = vld [vmem:[#allocation2 + $0x590] sm:$0xff]
    %v264 = vld [vmem:[#allocation2 + $0x598] sm:$0xff]
    %v265 = vld [vmem:[#allocation2 + $0x5a0] sm:$0xff]
    %v266 = vld [vmem:[#allocation2 + $0x5a8] sm:$0xff]
    %v267 = vld [vmem:[#allocation2 + $0x5b0] sm:$0xff]
    %v268 = vld [vmem:[#allocation2 + $0x5b8] sm:$0xff]
    %v269 = vld [vmem:[#allocation2 + $0x5c0] sm:$0xff]
    %v270 = vld [vmem:[#allocation2 + $0x5c8] sm:$0xff]
    %v271 = vld [vmem:[#allocation2 + $0x5d0] sm:$0xff]
    %v272 = vld [vmem:[#allocation2 + $0x5d8] sm:$0xff]
    %v273 = vld [vmem:[#allocation2 + $0x5e0] sm:$0xff]
    %v274 = vld [vmem:[#allocation2 + $0x5e8] sm:$0xff]
    %v275 = vld [vmem:[#allocation2 + $0x5f0] sm:$0xff]
    %v276 = vld [vmem:[#allocation2 + $0x5f8] sm:$0xff]
    %v277 = vld [vmem:[#allocation2 + $0x600] sm:$0xff]
    %v278 = vld [vmem:[#allocation2 + $0x608] sm:$0xff]
    %v279 = vld [vmem:[#allocation2 + $0x610] sm:$0xff]
    %v280 = vld [vmem:[#allocation2 + $0x618] sm:$0xff]
    %v281 = vld [vmem:[#allocation2 + $0x620] sm:$0xff]
    %v282 = vld [vmem:[#allocation2 + $0x628] sm:$0xff]
    %v283 = vld [vmem:[#allocation2 + $0x630] sm:$0xff]
    %v284 = vld [vmem:[#allocation2 + $0x638] sm:$0xff]
    %v285 = vld [vmem:[#allocation2 + $0x640] sm:$0xff]
    %v286 = vld [vmem:[#allocation2 + $0x648] sm:$0xff]
    %v287 = vld [vmem:[#allocation2 + $0x650] sm:$0xff]
    %v288 = vld [vmem:[#allocation2 + $0x658] sm:$0xff]
    %v289 = vld [vmem:[#allocation2 + $0x660] sm:$0xff]
    %v290 = vld [vmem:[#allocation2 + $0x668] sm:$0xff]
    %v291 = vld [vmem:[#allocation2 + $0x670] sm:$0xff]
    %v292 = vld [vmem:[#allocation2 + $0x678] sm:$0xff]
    %v293 = vld [vmem:[#allocation2 + $0x680] sm:$0xff]
    %v294 = vld [vmem:[#allocation2 + $0x688] sm:$0xff]
    %v295 = vld [vmem:[#allocation2 + $0x690] sm:$0xff]
    %v296 = vld [vmem:[#allocation2 + $0x698] sm:$0xff]
    %v297 = vld [vmem:[#allocation2 + $0x6a0] sm:$0xff]
    %v298 = vld [vmem:[#allocation2 + $0x6a8] sm:$0xff]
    %v299 = vld [vmem:[#allocation2 + $0x6b0] sm:$0xff]
    %v300 = vld [vmem:[#allocation2 + $0x6b8] sm:$0xff]
    %v301 = vld [vmem:[#allocation2 + $0x6c0] sm:$0xff]
    %v302 = vld [vmem:[#allocation2 + $0x6c8] sm:$0xff]
    %v303 = vld [vmem:[#allocation2 + $0x6d0] sm:$0xff]
    %v304 = vld [vmem:[#allocation2 + $0x6d8] sm:$0xff]
    %v305 = vld [vmem:[#allocation2 + $0x6e0] sm:$0xff]
    %v306 = vld [vmem:[#allocation2 + $0x6e8] sm:$0xff]
    %v307 = vld [vmem:[#allocation2 + $0x6f0] sm:$0xff]
    %v308 = vld [vmem:[#allocation2 + $0x6f8] sm:$0xff]
    %v309 = vld [vmem:[#allocation2 + $0x700] sm:$0xff]
    %v310 = vld [vmem:[#allocation2 + $0x708] sm:$0xff]
    %v311 = vld [vmem:[#allocation2 + $0x710] sm:$0xff]
    %v312 = vld [vmem:[#allocation2 + $0x718] sm:$0xff]
    %v313 = vld [vmem:[#allocation2 + $0x720] sm:$0xff]
    %v314 = vld [vmem:[#allocation2 + $0x728] sm:$0xff]
    %v315 = vld [vmem:[#allocation2 + $0x730] sm:$0xff]
    %v316 = vld [vmem:[#allocation2 + $0x738] sm:$0xff]
    %v317 = vld [vmem:[#allocation2 + $0x740] sm:$0xff]
    %v318 = vld [vmem:[#allocation2 + $0x748] sm:$0xff]
    %v319 = vld [vmem:[#allocation2 + $0x750] sm:$0xff]
    %v320 = vld [vmem:[#allocation2 + $0x758] sm:$0xff]
    %v321 = vld [vmem:[#allocation2 + $0x760] sm:$0xff]
    %v322 = vld [vmem:[#allocation2 + $0x768] sm:$0xff]
    %v323 = vld [vmem:[#allocation2 + $0x770] sm:$0xff]
    %v324 = vld [vmem:[#allocation2 + $0x778] sm:$0xff]
    %v325 = vld [vmem:[#allocation2 + $0x780] sm:$0xff]
    %v326 = vld [vmem:[#allocation2 + $0x788] sm:$0xff]
    %v327 = vld [vmem:[#allocation2 + $0x790] sm:$0xff]
    %v328 = vld [vmem:[#allocation2 + $0x798] sm:$0xff]
    %v329 = vld [vmem:[#allocation2 + $0x7a0] sm:$0xff]
    %v330 = vld [vmem:[#allocation2 + $0x7a8] sm:$0xff]
    %v331 = vld [vmem:[#allocation2 + $0x7b0] sm:$0xff]
    %v332 = vld [vmem:[#allocation2 + $0x7b8] sm:$0xff]
    %v333 = vld [vmem:[#allocation2 + $0x7c0] sm:$0xff]
    %v334 = vld [vmem:[#allocation2 + $0x7c8] sm:$0xff]
    %v335 = vld [vmem:[#allocation2 + $0x7d0] sm:$0xff]
    %v336 = vld [vmem:[#allocation2 + $0x7d8] sm:$0xff]
    %v337 = vld [vmem:[#allocation2 + $0x7e0] sm:$0xff]
    %v338 = vld [vmem:[#allocation2 + $0x7e8] sm:$0xff]
    %v339 = vld [vmem:[#allocation2 + $0x7f0] sm:$0xff]
    %v340 = vld [vmem:[#allocation2 + $0x7f8] sm:$0xff]
    %v341 = vld [vmem:[#allocation2 + $0x800] sm:$0xff]
    %v342 = vld [vmem:[#allocation2 + $0x808] sm:$0xff]
    %v343 = vld [vmem:[#allocation2 + $0x810] sm:$0xff]
    %v344 = vld [vmem:[#allocation2 + $0x818] sm:$0xff]
    %v345 = vld [vmem:[#allocation2 + $0x820] sm:$0xff]
    %v346 = vld [vmem:[#allocation2 + $0x828] sm:$0xff]
    %v347 = vld [vmem:[#allocation2 + $0x830] sm:$0xff]
    %v348 = vld [vmem:[#allocation2 + $0x838] sm:$0xff]
    %v349 = vld [vmem:[#allocation2 + $0x840] sm:$0xff]
    %v350 = vld [vmem:[#allocation2 + $0x848] sm:$0xff]
    %v351 = vld [vmem:[#allocation2 + $0x850] sm:$0xff]
    %v352 = vld [vmem:[#allocation2 + $0x858] sm:$0xff]
    %v353 = vld [vmem:[#allocation2 + $0x860] sm:$0xff]
    %v354 = vld [vmem:[#allocation2 + $0x868] sm:$0xff]
    %v355 = vld [vmem:[#allocation2 + $0x870] sm:$0xff]
    %v356 = vld [vmem:[#allocation2 + $0x878] sm:$0xff]
    %v357 = vld [vmem:[#allocation2 + $0x880] sm:$0xff]
    %v358 = vld [vmem:[#allocation2 + $0x888] sm:$0xff]
    %v359 = vld [vmem:[#allocation2 + $0x890] sm:$0xff]
    %v360 = vld [vmem:[#allocation2 + $0x898] sm:$0xff]
    %v361 = vld [vmem:[#allocation2 + $0x8a0] sm:$0xff]
    %v362 = vld [vmem:[#allocation2 + $0x8a8] sm:$0xff]
    %v363 = vld [vmem:[#allocation2 + $0x8b0] sm:$0xff]
    %v364 = vld [vmem:[#allocation2 + $0x8b8] sm:$0xff]
    %v365 = vld [vmem:[#allocation2 + $0x8c0] sm:$0xff]
    %v366 = vld [vmem:[#allocation2 + $0x8c8] sm:$0xff]
    %v367 = vld [vmem:[#allocation2 + $0x8d0] sm:$0xff]
    %v368 = vld [vmem:[#allocation2 + $0x8d8] sm:$0xff]
    %v369 = vld [vmem:[#allocation2 + $0x8e0] sm:$0xff]
    %v370 = vld [vmem:[#allocation2 + $0x8e8] sm:$0xff]
    %v371 = vld [vmem:[#allocation2 + $0x8f0] sm:$0xff]
    %v372 = vld [vmem:[#allocation2 + $0x8f8] sm:$0xff]
    %v373 = vld [vmem:[#allocation2 + $0x900] sm:$0xff]
    %v374 = vld [vmem:[#allocation2 + $0x908] sm:$0xff]
    %v375 = vld [vmem:[#allocation2 + $0x910] sm:$0xff]
    %v376 = vld [vmem:[#allocation2 + $0x918] sm:$0xff]
    %v377 = vld [vmem:[#allocation2 + $0x920] sm:$0xff]
    %v378 = vld [vmem:[#allocation2 + $0x928] sm:$0xff]
    %v379 = vld [vmem:[#allocation2 + $0x930] sm:$0xff]
    %v380 = vld [vmem:[#allocation2 + $0x938] sm:$0xff]
    %v381 = vld [vmem:[#allocation2 + $0x940] sm:$0xff]
    %v382 = vld [vmem:[#allocation2 + $0x948] sm:$0xff]
    %v383 = vld [vmem:[#allocation2 + $0x950] sm:$0xff]
    %v384 = vld [vmem:[#allocation2 + $0x958] sm:$0xff]
    %v385 = vld [vmem:[#allocation2 + $0x960] sm:$0xff]
    %v386 = vld [vmem:[#allocation2 + $0x968] sm:$0xff]
    %v387 = vld [vmem:[#allocation2 + $0x970] sm:$0xff]
    %v388 = vld [vmem:[#allocation2 + $0x978] sm:$0xff]
    %v389 = vld [vmem:[#allocation2 + $0x980] sm:$0xff]
    %v390 = vld [vmem:[#allocation2 + $0x988] sm:$0xff]
    %v391 = vld [vmem:[#allocation2 + $0x990] sm:$0xff]
    %v392 = vld [vmem:[#allocation2 + $0x998] sm:$0xff]
    %v393 = vld [vmem:[#allocation2 + $0x9a0] sm:$0xff]
    %v394 = vld [vmem:[#allocation2 + $0x9a8] sm:$0xff]
    %v395 = vld [vmem:[#allocation2 + $0x9b0] sm:$0xff]
    %v396 = vld [vmem:[#allocation2 + $0x9b8] sm:$0xff]
    %v397 = vld [vmem:[#allocation2 + $0x9c0] sm:$0xff]
    %v398 = vld [vmem:[#allocation2 + $0x9c8] sm:$0xff]
    %v399 = vld [vmem:[#allocation2 + $0x9d0] sm:$0xff]
    %v400 = vld [vmem:[#allocation2 + $0x9d8] sm:$0xff]
    %v401 = vld [vmem:[#allocation2 + $0x9e0] sm:$0xff]
    %v402 = vld [vmem:[#allocation2 + $0x9e8] sm:$0xff]
    %v403 = vld [vmem:[#allocation2 + $0x9f0] sm:$0xff]
    %v404 = vld [vmem:[#allocation2 + $0x9f8] sm:$0xff]
    %v405 = vld [vmem:[#allocation2 + $0xa00] sm:$0xff]
    %v406 = vld [vmem:[#allocation2 + $0xa08] sm:$0xff]
    %v407 = vld [vmem:[#allocation2 + $0xa10] sm:$0xff]
    %v408 = vld [vmem:[#allocation2 + $0xa18] sm:$0xff]
    %v409 = vld [vmem:[#allocation2 + $0xa20] sm:$0xff]
    %v410 = vld [vmem:[#allocation2 + $0xa28] sm:$0xff]
    %v411 = vld [vmem:[#allocation2 + $0xa30] sm:$0xff]
    %v412 = vld [vmem:[#allocation2 + $0xa38] sm:$0xff]
    %v413 = vld [vmem:[#allocation2 + $0xa40] sm:$0xff]
    %v414 = vld [vmem:[#allocation2 + $0xa48] sm:$0xff]
    %v415 = vld [vmem:[#allocation2 + $0xa50] sm:$0xff]
    %v416 = vld [vmem:[#allocation2 + $0xa58] sm:$0xff]
    %v417 = vld [vmem:[#allocation2 + $0xa60] sm:$0xff]
    %v418 = vld [vmem:[#allocation2 + $0xa68] sm:$0xff]
    %v419 = vld [vmem:[#allocation2 + $0xa70] sm:$0xff]
    %v420 = vld [vmem:[#allocation2 + $0xa78] sm:$0xff]
    %v421 = vld [vmem:[#allocation2 + $0xa80] sm:$0xff]
    %v422 = vld [vmem:[#allocation2 + $0xa88] sm:$0xff]
    %v423 = vld [vmem:[#allocation2 + $0xa90] sm:$0xff]
    %v424 = vld [vmem:[#allocation2 + $0xa98] sm:$0xff]
    %v425 = vld [vmem:[#allocation2 + $0xaa0] sm:$0xff]
    %v426 = vld [vmem:[#allocation2 + $0xaa8] sm:$0xff]
    %v427 = vld [vmem:[#allocation2 + $0xab0] sm:$0xff]
    %v428 = vld [vmem:[#allocation2 + $0xab8] sm:$0xff]
    %v429 = vld [vmem:[#allocation2 + $0xac0] sm:$0xff]
    %v430 = vld [vmem:[#allocation2 + $0xac8] sm:$0xff]
    %v431 = vld [vmem:[#allocation2 + $0xad0] sm:$0xff]
    %v432 = vld [vmem:[#allocation2 + $0xad8] sm:$0xff]
    %v433 = vld [vmem:[#allocation2 + $0xae0] sm:$0xff]
    %v434 = vld [vmem:[#allocation2 + $0xae8] sm:$0xff]
    %v435 = vld [vmem:[#allocation2 + $0xaf0] sm:$0xff]
    %v436 = vld [vmem:[#allocation2 + $0xaf8] sm:$0xff]
    %v437 = vld [vmem:[#allocation2 + $0xb00] sm:$0xff]
    %v438 = vld [vmem:[#allocation2 + $0xb08] sm:$0xff]
    %v439 = vld [vmem:[#allocation2 + $0xb10] sm:$0xff]
    %v440 = vld [vmem:[#allocation2 + $0xb18] sm:$0xff]
    %v441 = vld [vmem:[#allocation2 + $0xb20] sm:$0xff]
    %v442 = vld [vmem:[#allocation2 + $0xb28] sm:$0xff]
    %v443 = vld [vmem:[#allocation2 + $0xb30] sm:$0xff]
    %v444 = vld [vmem:[#allocation2 + $0xb38] sm:$0xff]
    %v445 = vld [vmem:[#allocation2 + $0xb40] sm:$0xff]
    %v446 = vld [vmem:[#allocation2 + $0xb48] sm:$0xff]
    %v447 = vld [vmem:[#allocation2 + $0xb50] sm:$0xff]
    %v448 = vld [vmem:[#allocation2 + $0xb58] sm:$0xff]
    %v449 = vld [vmem:[#allocation2 + $0xb60] sm:$0xff]
    %v450 = vld [vmem:[#allocation2 + $0xb68] sm:$0xff]
    %v451 = vld [vmem:[#allocation2 + $0xb70] sm:$0xff]
    %v452 = vld [vmem:[#allocation2 + $0xb78] sm:$0xff]
    %v453 = vld [vmem:[#allocation2 + $0xb80] sm:$0xff]
    %v454 = vld [vmem:[#allocation2 + $0xb88] sm:$0xff]
    %v455 = vld [vmem:[#allocation2 + $0xb90] sm:$0xff]
    %v456 = vld [vmem:[#allocation2 + $0xb98] sm:$0xff]
    %v457 = vld [vmem:[#allocation2 + $0xba0] sm:$0xff]
    %v458 = vld [vmem:[#allocation2 + $0xba8] sm:$0xff]
    %v459 = vld [vmem:[#allocation2 + $0xbb0] sm:$0xff]
    %v460 = vld [vmem:[#allocation2 + $0xbb8] sm:$0xff]
    %v461 = vld [vmem:[#allocation2 + $0xbc0] sm:$0xff]
    %v462 = vld [vmem:[#allocation2 + $0xbc8] sm:$0xff]
    %v463 = vld [vmem:[#allocation2 + $0xbd0] sm:$0xff]
    %v464 = vld [vmem:[#allocation2 + $0xbd8] sm:$0xff]
    %v465 = vld [vmem:[#allocation2 + $0xbe0] sm:$0xff]
    %v466 = vld [vmem:[#allocation2 + $0xbe8] sm:$0xff]
    %v467 = vld [vmem:[#allocation2 + $0xbf0] sm:$0xff]
    %v468 = vld [vmem:[#allocation2 + $0xbf8] sm:$0xff]
    %v469 = vld [vmem:[#allocation2 + $0xc00] sm:$0xff]
    %v470 = vld [vmem:[#allocation2 + $0xc08] sm:$0xff]
    %v471 = vld [vmem:[#allocation2 + $0xc10] sm:$0xff]
    %v472 = vld [vmem:[#allocation2 + $0xc18] sm:$0xff]
    %v473 = vld [vmem:[#allocation2 + $0xc20] sm:$0xff]
    %v474 = vld [vmem:[#allocation2 + $0xc28] sm:$0xff]
    %v475 = vld [vmem:[#allocation2 + $0xc30] sm:$0xff]
    %v476 = vld [vmem:[#allocation2 + $0xc38] sm:$0xff]
    %v477 = vld [vmem:[#allocation5] sm:$0x3]
    %v479 = vperm.slane %v477, 0
    %v480 = vperm.slane %v477, 1
    %484 = vst [vmem:[#allocation1] ss:$9 sm:$0xff] %v81
    %v485 = vld [vmem:[#allocation1] sm:$0xff]
    %v486 = vld [vmem:[#allocation1 + $0x9] sm:$0xff]
    %v487 = vld [vmem:[#allocation1 + $0x12] sm:$0xff]
    %v488 = vld [vmem:[#allocation1 + $0x1b] sm:$0xff]
    %v489 = vld [vmem:[#allocation1 + $0x24] sm:$0xff]
    %v490 = vld [vmem:[#allocation1 + $0x2d] sm:$0xff]
    %v491 = vld [vmem:[#allocation1 + $0x36] sm:$0xff]
    %v492 = vld [vmem:[#allocation1 + $0x3f] sm:$0xff]
    %494 = vst [vmem:[#allocation1] ss:$9 sm:$0xff] %v82
    %v495 = vld [vmem:[#allocation1] sm:$0xff]
    %v496 = vld [vmem:[#allocation1 + $0x9] sm:$0xff]
    %v497 = vld [vmem:[#allocation1 + $0x12] sm:$0xff]
    %v498 = vld [vmem:[#allocation1 + $0x1b] sm:$0xff]
    %v499 = vld [vmem:[#allocation1 + $0x24] sm:$0xff]
    %v500 = vld [vmem:[#allocation1 + $0x2d] sm:$0xff]
    %v501 = vld [vmem:[#allocation1 + $0x36] sm:$0xff]
    %v502 = vld [vmem:[#allocation1 + $0x3f] sm:$0xff]
    %504 = vst [vmem:[#allocation1] ss:$9 sm:$0xff] %v83
    %v505 = vld [vmem:[#allocation1] sm:$0xff]
    %v506 = vld [vmem:[#allocation1 + $0x9] sm:$0xff]
    %v507 = vld [vmem:[#allocation1 + $0x12] sm:$0xff]
    %v508 = vld [vmem:[#allocation1 + $0x1b] sm:$0xff]
    %v509 = vld [vmem:[#allocation1 + $0x24] sm:$0xff]
    %v510 = vld [vmem:[#allocation1 + $0x2d] sm:$0xff]
    %v511 = vld [vmem:[#allocation1 + $0x36] sm:$0xff]
    %v512 = vld [vmem:[#allocation1 + $0x3f] sm:$0xff]
    %514 = vst [vmem:[#allocation1] ss:$9 sm:$0xff] %v84
    %v515 = vld [vmem:[#allocation1] sm:$0xff]
    %v932 = vunpack.c.l.b16 %v85
    %v933 = vunpack.c.h.b16 %v85
    %v934 = vunpack.c.l.b16 %v86
    %v935 = vunpack.c.h.b16 %v86
    %v936 = vunpack.c.l.b16 %v87
    %v937 = vunpack.c.h.b16 %v87
    %v938 = vunpack.c.l.b16 %v88
    %v939 = vunpack.c.h.b16 %v88
    %v940 = vunpack.c.l.b16 %v89
    %v941 = vunpack.c.h.b16 %v89
    %v942 = vunpack.c.l.b16 %v90
    %v943 = vunpack.c.h.b16 %v90
    %v944 = vunpack.c.l.b16 %v91
    %v945 = vunpack.c.h.b16 %v91
    %v946 = vunpack.c.l.b16 %v92
    %v947 = vunpack.c.h.b16 %v92
    %v948 = vunpack.c.l.b16 %v93
    %v949 = vunpack.c.h.b16 %v93
    %v950 = vunpack.c.l.b16 %v94
    %v951 = vunpack.c.h.b16 %v94
    %v952 = vunpack.c.l.b16 %v95
    %v953 = vunpack.c.h.b16 %v95
    %v954 = vunpack.c.l.b16 %v96
    %v955 = vunpack.c.h.b16 %v96
    %v956 = vunpack.c.l.b16 %v97
    %v957 = vunpack.c.h.b16 %v97
    %v958 = vunpack.c.l.b16 %v98
    %v959 = vunpack.c.h.b16 %v98
    %v960 = vunpack.c.l.b16 %v99
    %v961 = vunpack.c.h.b16 %v99
    %v962 = vunpack.c.l.b16 %v100
    %v963 = vunpack.c.h.b16 %v100
    %v964 = vunpack.c.l.b16 %v101
    %v965 = vunpack.c.h.b16 %v101
    %v966 = vunpack.c.l.b16 %v102
    %v967 = vunpack.c.h.b16 %v102
    %v968 = vunpack.c.l.b16 %v103
    %v969 = vunpack.c.h.b16 %v103
    %v970 = vunpack.c.l.b16 %v104
    %v971 = vunpack.c.h.b16 %v104
    %v972 = vunpack.c.l.b16 %v105
    %v973 = vunpack.c.h.b16 %v105
    %v974 = vunpack.c.l.b16 %v106
    %v975 = vunpack.c.h.b16 %v106
    %v976 = vunpack.c.l.b16 %v107
    %v977 = vunpack.c.h.b16 %v107
    %v978 = vunpack.c.l.b16 %v108
    %v979 = vunpack.c.h.b16 %v108
    %v980 = vunpack.c.l.b16 %v109
    %v981 = vunpack.c.h.b16 %v109
    %v982 = vunpack.c.l.b16 %v110
    %v983 = vunpack.c.h.b16 %v110
    %v984 = vunpack.c.l.b16 %v111
    %v985 = vunpack.c.h.b16 %v111
    %v986 = vunpack.c.l.b16 %v112
    %v987 = vunpack.c.h.b16 %v112
    %v988 = vunpack.c.l.b16 %v113
    %v989 = vunpack.c.h.b16 %v113
    %v990 = vunpack.c.l.b16 %v114
    %v991 = vunpack.c.h.b16 %v114
    %v992 = vunpack.c.l.b16 %v115
    %v993 = vunpack.c.h.b16 %v115
    %v994 = vunpack.c.l.b16 %v116
    %v995 = vunpack.c.h.b16 %v116
    %v996 = vunpack.c.l.b16 %v117
    %v997 = vunpack.c.h.b16 %v117
    %v998 = vunpack.c.l.b16 %v118
    %v999 = vunpack.c.h.b16 %v118
    %v1000 = vunpack.c.l.b16 %v119
    %v1001 = vunpack.c.h.b16 %v119
    %v1002 = vunpack.c.l.b16 %v120
    %v1003 = vunpack.c.h.b16 %v120
    %v1004 = vunpack.c.l.b16 %v121
    %v1005 = vunpack.c.h.b16 %v121
    %v1006 = vunpack.c.l.b16 %v122
    %v1007 = vunpack.c.h.b16 %v122
    %v1008 = vunpack.c.l.b16 %v123
    %v1009 = vunpack.c.h.b16 %v123
    %v1010 = vunpack.c.l.b16 %v124
    %v1011 = vunpack.c.h.b16 %v124
    %v1012 = vunpack.c.l.b16 %v125
    %v1013 = vunpack.c.h.b16 %v125
    %v1014 = vunpack.c.l.b16 %v126
    %v1015 = vunpack.c.h.b16 %v126
    %v1016 = vunpack.c.l.b16 %v127
    %v1017 = vunpack.c.h.b16 %v127
    %v1018 = vunpack.c.l.b16 %v128
    %v1019 = vunpack.c.h.b16 %v128
    %v1020 = vunpack.c.l.b16 %v129
    %v1021 = vunpack.c.h.b16 %v129
    %v1022 = vunpack.c.l.b16 %v130
    %v1023 = vunpack.c.h.b16 %v130
    %v1024 = vunpack.c.l.b16 %v131
    %v1025 = vunpack.c.h.b16 %v131
    %v1026 = vunpack.c.l.b16 %v132
    %v1027 = vunpack.c.h.b16 %v132
    %v1028 = vunpack.c.l.b16 %v133
    %v1029 = vunpack.c.h.b16 %v133
    %v1030 = vunpack.c.l.b16 %v134
    %v1031 = vunpack.c.h.b16 %v134
    %v1032 = vunpack.c.l.b16 %v135
    %v1033 = vunpack.c.h.b16 %v135
    %v1034 = vunpack.c.l.b16 %v136
    %v1035 = vunpack.c.h.b16 %v136
    %v1036 = vunpack.c.l.b16 %v137
    %v1037 = vunpack.c.h.b16 %v137
    %v1038 = vunpack.c.l.b16 %v138
    %v1039 = vunpack.c.h.b16 %v138
    %v1040 = vunpack.c.l.b16 %v139
    %v1041 = vunpack.c.h.b16 %v139
    %v1042 = vunpack.c.l.b16 %v140
    %v1043 = vunpack.c.h.b16 %v140
    %v1044 = vunpack.c.l.b16 %v141
    %v1045 = vunpack.c.h.b16 %v141
    %v1046 = vunpack.c.l.b16 %v142
    %v1047 = vunpack.c.h.b16 %v142
    %v1048 = vunpack.c.l.b16 %v143
    %v1049 = vunpack.c.h.b16 %v143
    %v1050 = vunpack.c.l.b16 %v144
    %v1051 = vunpack.c.h.b16 %v144
    %v1052 = vunpack.c.l.b16 %v145
    %v1053 = vunpack.c.h.b16 %v145
    %v1054 = vunpack.c.l.b16 %v146
    %v1055 = vunpack.c.h.b16 %v146
    %v1056 = vunpack.c.l.b16 %v147
    %v1057 = vunpack.c.h.b16 %v147
    %v1058 = vunpack.c.l.b16 %v148
    %v1059 = vunpack.c.h.b16 %v148
    %v1060 = vunpack.c.l.b16 %v149
    %v1061 = vunpack.c.h.b16 %v149
    %v1062 = vunpack.c.l.b16 %v150
    %v1063 = vunpack.c.h.b16 %v150
    %v1064 = vunpack.c.l.b16 %v151
    %v1065 = vunpack.c.h.b16 %v151
    %v1066 = vunpack.c.l.b16 %v152
    %v1067 = vunpack.c.h.b16 %v152
    %v1068 = vunpack.c.l.b16 %v153
    %v1069 = vunpack.c.h.b16 %v153
    %v1070 = vunpack.c.l.b16 %v154
    %v1071 = vunpack.c.h.b16 %v154
    %v1072 = vunpack.c.l.b16 %v155
    %v1073 = vunpack.c.h.b16 %v155
    %v1074 = vunpack.c.l.b16 %v156
    %v1075 = vunpack.c.h.b16 %v156
    %v1076 = vunpack.c.l.b16 %v157
    %v1077 = vunpack.c.h.b16 %v157
    %v1078 = vunpack.c.l.b16 %v158
    %v1079 = vunpack.c.h.b16 %v158
    %v1080 = vunpack.c.l.b16 %v159
    %v1081 = vunpack.c.h.b16 %v159
    %v1082 = vunpack.c.l.b16 %v160
    %v1083 = vunpack.c.h.b16 %v160
    %v1084 = vunpack.c.l.b16 %v161
    %v1085 = vunpack.c.h.b16 %v161
    %v1086 = vunpack.c.l.b16 %v162
    %v1087 = vunpack.c.h.b16 %v162
    %v1088 = vunpack.c.l.b16 %v163
    %v1089 = vunpack.c.h.b16 %v163
    %v1090 = vunpack.c.l.b16 %v164
    %v1091 = vunpack.c.h.b16 %v164
    %v1092 = vunpack.c.l.b16 %v165
    %v1093 = vunpack.c.h.b16 %v165
    %v1094 = vunpack.c.l.b16 %v166
    %v1095 = vunpack.c.h.b16 %v166
    %v1096 = vunpack.c.l.b16 %v167
    %v1097 = vunpack.c.h.b16 %v167
    %v1098 = vunpack.c.l.b16 %v168
    %v1099 = vunpack.c.h.b16 %v168
    %v1100 = vunpack.c.l.b16 %v169
    %v1101 = vunpack.c.h.b16 %v169
    %v1102 = vunpack.c.l.b16 %v170
    %v1103 = vunpack.c.h.b16 %v170
    %v1104 = vunpack.c.l.b16 %v171
    %v1105 = vunpack.c.h.b16 %v171
    %v1106 = vunpack.c.l.b16 %v172
    %v1107 = vunpack.c.h.b16 %v172
    %v1108 = vunpack.c.l.b16 %v173
    %v1109 = vunpack.c.h.b16 %v173
    %v1110 = vunpack.c.l.b16 %v174
    %v1111 = vunpack.c.h.b16 %v174
    %v1112 = vunpack.c.l.b16 %v175
    %v1113 = vunpack.c.h.b16 %v175
    %v1114 = vunpack.c.l.b16 %v176
    %v1115 = vunpack.c.h.b16 %v176
    %v1116 = vunpack.c.l.b16 %v177
    %v1117 = vunpack.c.h.b16 %v177
    %v1118 = vunpack.c.l.b16 %v178
    %v1119 = vunpack.c.h.b16 %v178
    %v1120 = vunpack.c.l.b16 %v179
    %v1121 = vunpack.c.h.b16 %v179
    %v1122 = vunpack.c.l.b16 %v180
    %v1123 = vunpack.c.h.b16 %v180
    %v1124 = vunpack.c.l.b16 %v181
    %v1125 = vunpack.c.h.b16 %v181
    %v1126 = vunpack.c.l.b16 %v182
    %v1127 = vunpack.c.h.b16 %v182
    %v1128 = vunpack.c.l.b16 %v183
    %v1129 = vunpack.c.h.b16 %v183
    %v1130 = vunpack.c.l.b16 %v184
    %v1131 = vunpack.c.h.b16 %v184
    %v1132 = vunpack.c.l.b16 %v185
    %v1133 = vunpack.c.h.b16 %v185
    %v1134 = vunpack.c.l.b16 %v186
    %v1135 = vunpack.c.h.b16 %v186
    %v1136 = vunpack.c.l.b16 %v187
    %v1137 = vunpack.c.h.b16 %v187
    %v1138 = vunpack.c.l.b16 %v188
    %v1139 = vunpack.c.h.b16 %v188
    %v1140 = vunpack.c.l.b16 %v189
    %v1141 = vunpack.c.h.b16 %v189
    %v1142 = vunpack.c.l.b16 %v190
    %v1143 = vunpack.c.h.b16 %v190
    %v1144 = vunpack.c.l.b16 %v191
    %v1145 = vunpack.c.h.b16 %v191
    %v1146 = vunpack.c.l.b16 %v192
    %v1147 = vunpack.c.h.b16 %v192
    %v1148 = vunpack.c.l.b16 %v193
    %v1149 = vunpack.c.h.b16 %v193
    %v1150 = vunpack.c.l.b16 %v194
    %v1151 = vunpack.c.h.b16 %v194
    %v1152 = vunpack.c.l.b16 %v195
    %v1153 = vunpack.c.h.b16 %v195
    %v1154 = vunpack.c.l.b16 %v196
    %v1155 = vunpack.c.h.b16 %v196
    %v1156 = vunpack.c.l.b16 %v197
    %v1157 = vunpack.c.h.b16 %v197
    %v1158 = vunpack.c.l.b16 %v198
    %v1159 = vunpack.c.h.b16 %v198
    %v1160 = vunpack.c.l.b16 %v199
    %v1161 = vunpack.c.h.b16 %v199
    %v1162 = vunpack.c.l.b16 %v200
    %v1163 = vunpack.c.h.b16 %v200
    %v1164 = vunpack.c.l.b16 %v201
    %v1165 = vunpack.c.h.b16 %v201
    %v1166 = vunpack.c.l.b16 %v202
    %v1167 = vunpack.c.h.b16 %v202
    %v1168 = vunpack.c.l.b16 %v203
    %v1169 = vunpack.c.h.b16 %v203
    %v1170 = vunpack.c.l.b16 %v204
    %v1171 = vunpack.c.h.b16 %v204
    %v1172 = vunpack.c.l.b16 %v205
    %v1173 = vunpack.c.h.b16 %v205
    %v1174 = vunpack.c.l.b16 %v206
    %v1175 = vunpack.c.h.b16 %v206
    %v1176 = vunpack.c.l.b16 %v207
    %v1177 = vunpack.c.h.b16 %v207
    %v1178 = vunpack.c.l.b16 %v208
    %v1179 = vunpack.c.h.b16 %v208
    %v1180 = vunpack.c.l.b16 %v209
    %v1181 = vunpack.c.h.b16 %v209
    %v1182 = vunpack.c.l.b16 %v210
    %v1183 = vunpack.c.h.b16 %v210
    %v1184 = vunpack.c.l.b16 %v211
    %v1185 = vunpack.c.h.b16 %v211
    %v1186 = vunpack.c.l.b16 %v212
    %v1187 = vunpack.c.h.b16 %v212
    %v1188 = vunpack.c.l.b16 %v213
    %v1189 = vunpack.c.h.b16 %v213
    %v1190 = vunpack.c.l.b16 %v214
    %v1191 = vunpack.c.h.b16 %v214
    %v1192 = vunpack.c.l.b16 %v215
    %v1193 = vunpack.c.h.b16 %v215
    %v1194 = vunpack.c.l.b16 %v216
    %v1195 = vunpack.c.h.b16 %v216
    %v1196 = vunpack.c.l.b16 %v217
    %v1197 = vunpack.c.h.b16 %v217
    %v1198 = vunpack.c.l.b16 %v218
    %v1199 = vunpack.c.h.b16 %v218
    %v1200 = vunpack.c.l.b16 %v219
    %v1201 = vunpack.c.h.b16 %v219
    %v1202 = vunpack.c.l.b16 %v220
    %v1203 = vunpack.c.h.b16 %v220
    %v1204 = vunpack.c.l.b16 %v221
    %v1205 = vunpack.c.h.b16 %v221
    %v1206 = vunpack.c.l.b16 %v222
    %v1207 = vunpack.c.h.b16 %v222
    %v1208 = vunpack.c.l.b16 %v223
    %v1209 = vunpack.c.h.b16 %v223
    %v1210 = vunpack.c.l.b16 %v224
    %v1211 = vunpack.c.h.b16 %v224
    %v1212 = vunpack.c.l.b16 %v225
    %v1213 = vunpack.c.h.b16 %v225
    %v1214 = vunpack.c.l.b16 %v226
    %v1215 = vunpack.c.h.b16 %v226
    %v1216 = vunpack.c.l.b16 %v227
    %v1217 = vunpack.c.h.b16 %v227
    %v1218 = vunpack.c.l.b16 %v228
    %v1219 = vunpack.c.h.b16 %v228
    %v1220 = vunpack.c.l.b16 %v229
    %v1221 = vunpack.c.h.b16 %v229
    %v1222 = vunpack.c.l.b16 %v230
    %v1223 = vunpack.c.h.b16 %v230
    %v1224 = vunpack.c.l.b16 %v231
    %v1225 = vunpack.c.h.b16 %v231
    %v1226 = vunpack.c.l.b16 %v232
    %v1227 = vunpack.c.h.b16 %v232
    %v1228 = vunpack.c.l.b16 %v233
    %v1229 = vunpack.c.h.b16 %v233
    %v1230 = vunpack.c.l.b16 %v234
    %v1231 = vunpack.c.h.b16 %v234
    %v1232 = vunpack.c.l.b16 %v235
    %v1233 = vunpack.c.h.b16 %v235
    %v1234 = vunpack.c.l.b16 %v236
    %v1235 = vunpack.c.h.b16 %v236
    %v1236 = vunpack.c.l.b16 %v237
    %v1237 = vunpack.c.h.b16 %v237
    %v1238 = vunpack.c.l.b16 %v238
    %v1239 = vunpack.c.h.b16 %v238
    %v1240 = vunpack.c.l.b16 %v239
    %v1241 = vunpack.c.h.b16 %v239
    %v1242 = vunpack.c.l.b16 %v240
    %v1243 = vunpack.c.h.b16 %v240
    %v1244 = vunpack.c.l.b16 %v241
    %v1245 = vunpack.c.h.b16 %v241
    %v1246 = vunpack.c.l.b16 %v242
    %v1247 = vunpack.c.h.b16 %v242
    %v1248 = vunpack.c.l.b16 %v243
    %v1249 = vunpack.c.h.b16 %v243
    %v1250 = vunpack.c.l.b16 %v244
    %v1251 = vunpack.c.h.b16 %v244
    %v1252 = vunpack.c.l.b16 %v245
    %v1253 = vunpack.c.h.b16 %v245
    %v1254 = vunpack.c.l.b16 %v246
    %v1255 = vunpack.c.h.b16 %v246
    %v1256 = vunpack.c.l.b16 %v247
    %v1257 = vunpack.c.h.b16 %v247
    %v1258 = vunpack.c.l.b16 %v248
    %v1259 = vunpack.c.h.b16 %v248
    %v1260 = vunpack.c.l.b16 %v249
    %v1261 = vunpack.c.h.b16 %v249
    %v1262 = vunpack.c.l.b16 %v250
    %v1263 = vunpack.c.h.b16 %v250
    %v1264 = vunpack.c.l.b16 %v251
    %v1265 = vunpack.c.h.b16 %v251
    %v1266 = vunpack.c.l.b16 %v252
    %v1267 = vunpack.c.h.b16 %v252
    %v1268 = vunpack.c.l.b16 %v253
    %v1269 = vunpack.c.h.b16 %v253
    %v1270 = vunpack.c.l.b16 %v254
    %v1271 = vunpack.c.h.b16 %v254
    %v1272 = vunpack.c.l.b16 %v255
    %v1273 = vunpack.c.h.b16 %v255
    %v1274 = vunpack.c.l.b16 %v256
    %v1275 = vunpack.c.h.b16 %v256
    %v1276 = vunpack.c.l.b16 %v257
    %v1277 = vunpack.c.h.b16 %v257
    %v1278 = vunpack.c.l.b16 %v258
    %v1279 = vunpack.c.h.b16 %v258
    %v1280 = vunpack.c.l.b16 %v259
    %v1281 = vunpack.c.h.b16 %v259
    %v1282 = vunpack.c.l.b16 %v260
    %v1283 = vunpack.c.h.b16 %v260
    %v1284 = vunpack.c.l.b16 %v261
    %v1285 = vunpack.c.h.b16 %v261
    %v1286 = vunpack.c.l.b16 %v262
    %v1287 = vunpack.c.h.b16 %v262
    %v1288 = vunpack.c.l.b16 %v263
    %v1289 = vunpack.c.h.b16 %v263
    %v1290 = vunpack.c.l.b16 %v264
    %v1291 = vunpack.c.h.b16 %v264
    %v1292 = vunpack.c.l.b16 %v265
    %v1293 = vunpack.c.h.b16 %v265
    %v1294 = vunpack.c.l.b16 %v266
    %v1295 = vunpack.c.h.b16 %v266
    %v1296 = vunpack.c.l.b16 %v267
    %v1297 = vunpack.c.h.b16 %v267
    %v1298 = vunpack.c.l.b16 %v268
    %v1299 = vunpack.c.h.b16 %v268
    %v1300 = vunpack.c.l.b16 %v269
    %v1301 = vunpack.c.h.b16 %v269
    %v1302 = vunpack.c.l.b16 %v270
    %v1303 = vunpack.c.h.b16 %v270
    %v1304 = vunpack.c.l.b16 %v271
    %v1305 = vunpack.c.h.b16 %v271
    %v1306 = vunpack.c.l.b16 %v272
    %v1307 = vunpack.c.h.b16 %v272
    %v1308 = vunpack.c.l.b16 %v273
    %v1309 = vunpack.c.h.b16 %v273
    %v1310 = vunpack.c.l.b16 %v274
    %v1311 = vunpack.c.h.b16 %v274
    %v1312 = vunpack.c.l.b16 %v275
    %v1313 = vunpack.c.h.b16 %v275
    %v1314 = vunpack.c.l.b16 %v276
    %v1315 = vunpack.c.h.b16 %v276
    %v1316 = vunpack.c.l.b16 %v277
    %v1317 = vunpack.c.h.b16 %v277
    %v1318 = vunpack.c.l.b16 %v278
    %v1319 = vunpack.c.h.b16 %v278
    %v1320 = vunpack.c.l.b16 %v279
    %v1321 = vunpack.c.h.b16 %v279
    %v1322 = vunpack.c.l.b16 %v280
    %v1323 = vunpack.c.h.b16 %v280
    %v1324 = vunpack.c.l.b16 %v281
    %v1325 = vunpack.c.h.b16 %v281
    %v1326 = vunpack.c.l.b16 %v282
    %v1327 = vunpack.c.h.b16 %v282
    %v1328 = vunpack.c.l.b16 %v283
    %v1329 = vunpack.c.h.b16 %v283
    %v1330 = vunpack.c.l.b16 %v284
    %v1331 = vunpack.c.h.b16 %v284
    %v1332 = vunpack.c.l.b16 %v285
    %v1333 = vunpack.c.h.b16 %v285
    %v1334 = vunpack.c.l.b16 %v286
    %v1335 = vunpack.c.h.b16 %v286
    %v1336 = vunpack.c.l.b16 %v287
    %v1337 = vunpack.c.h.b16 %v287
    %v1338 = vunpack.c.l.b16 %v288
    %v1339 = vunpack.c.h.b16 %v288
    %v1340 = vunpack.c.l.b16 %v289
    %v1341 = vunpack.c.h.b16 %v289
    %v1342 = vunpack.c.l.b16 %v290
    %v1343 = vunpack.c.h.b16 %v290
    %v1344 = vunpack.c.l.b16 %v291
    %v1345 = vunpack.c.h.b16 %v291
    %v1346 = vunpack.c.l.b16 %v292
    %v1347 = vunpack.c.h.b16 %v292
    %v1348 = vunpack.c.l.b16 %v293
    %v1349 = vunpack.c.h.b16 %v293
    %v1350 = vunpack.c.l.b16 %v294
    %v1351 = vunpack.c.h.b16 %v294
    %v1352 = vunpack.c.l.b16 %v295
    %v1353 = vunpack.c.h.b16 %v295
    %v1354 = vunpack.c.l.b16 %v296
    %v1355 = vunpack.c.h.b16 %v296
    %v1356 = vunpack.c.l.b16 %v297
    %v1357 = vunpack.c.h.b16 %v297
    %v1358 = vunpack.c.l.b16 %v298
    %v1359 = vunpack.c.h.b16 %v298
    %v1360 = vunpack.c.l.b16 %v299
    %v1361 = vunpack.c.h.b16 %v299
    %v1362 = vunpack.c.l.b16 %v300
    %v1363 = vunpack.c.h.b16 %v300
    %v1364 = vunpack.c.l.b16 %v301
    %v1365 = vunpack.c.h.b16 %v301
    %v1366 = vunpack.c.l.b16 %v302
    %v1367 = vunpack.c.h.b16 %v302
    %v1368 = vunpack.c.l.b16 %v303
    %v1369 = vunpack.c.h.b16 %v303
    %v1370 = vunpack.c.l.b16 %v304
    %v1371 = vunpack.c.h.b16 %v304
    %v1372 = vunpack.c.l.b16 %v305
    %v1373 = vunpack.c.h.b16 %v305
    %v1374 = vunpack.c.l.b16 %v306
    %v1375 = vunpack.c.h.b16 %v306
    %v1376 = vunpack.c.l.b16 %v307
    %v1377 = vunpack.c.h.b16 %v307
    %v1378 = vunpack.c.l.b16 %v308
    %v1379 = vunpack.c.h.b16 %v308
    %v1380 = vunpack.c.l.b16 %v309
    %v1381 = vunpack.c.h.b16 %v309
    %v1382 = vunpack.c.l.b16 %v310
    %v1383 = vunpack.c.h.b16 %v310
    %v1384 = vunpack.c.l.b16 %v311
    %v1385 = vunpack.c.h.b16 %v311
    %v1386 = vunpack.c.l.b16 %v312
    %v1387 = vunpack.c.h.b16 %v312
    %v1388 = vunpack.c.l.b16 %v313
    %v1389 = vunpack.c.h.b16 %v313
    %v1390 = vunpack.c.l.b16 %v314
    %v1391 = vunpack.c.h.b16 %v314
    %v1392 = vunpack.c.l.b16 %v315
    %v1393 = vunpack.c.h.b16 %v315
    %v1394 = vunpack.c.l.b16 %v316
    %v1395 = vunpack.c.h.b16 %v316
    %v1396 = vunpack.c.l.b16 %v317
    %v1397 = vunpack.c.h.b16 %v317
    %v1398 = vunpack.c.l.b16 %v318
    %v1399 = vunpack.c.h.b16 %v318
    %v1400 = vunpack.c.l.b16 %v319
    %v1401 = vunpack.c.h.b16 %v319
    %v1402 = vunpack.c.l.b16 %v320
    %v1403 = vunpack.c.h.b16 %v320
    %v1404 = vunpack.c.l.b16 %v321
    %v1405 = vunpack.c.h.b16 %v321
    %v1406 = vunpack.c.l.b16 %v322
    %v1407 = vunpack.c.h.b16 %v322
    %v1408 = vunpack.c.l.b16 %v323
    %v1409 = vunpack.c.h.b16 %v323
    %v1410 = vunpack.c.l.b16 %v324
    %v1411 = vunpack.c.h.b16 %v324
    %v1412 = vunpack.c.l.b16 %v325
    %v1413 = vunpack.c.h.b16 %v325
    %v1414 = vunpack.c.l.b16 %v326
    %v1415 = vunpack.c.h.b16 %v326
    %v1416 = vunpack.c.l.b16 %v327
    %v1417 = vunpack.c.h.b16 %v327
    %v1418 = vunpack.c.l.b16 %v328
    %v1419 = vunpack.c.h.b16 %v328
    %v1420 = vunpack.c.l.b16 %v329
    %v1421 = vunpack.c.h.b16 %v329
    %v1422 = vunpack.c.l.b16 %v330
    %v1423 = vunpack.c.h.b16 %v330
    %v1424 = vunpack.c.l.b16 %v331
    %v1425 = vunpack.c.h.b16 %v331
    %v1426 = vunpack.c.l.b16 %v332
    %v1427 = vunpack.c.h.b16 %v332
    %v1428 = vunpack.c.l.b16 %v333
    %v1429 = vunpack.c.h.b16 %v333
    %v1430 = vunpack.c.l.b16 %v334
    %v1431 = vunpack.c.h.b16 %v334
    %v1432 = vunpack.c.l.b16 %v335
    %v1433 = vunpack.c.h.b16 %v335
    %v1434 = vunpack.c.l.b16 %v336
    %v1435 = vunpack.c.h.b16 %v336
    %v1436 = vunpack.c.l.b16 %v337
    %v1437 = vunpack.c.h.b16 %v337
    %v1438 = vunpack.c.l.b16 %v338
    %v1439 = vunpack.c.h.b16 %v338
    %v1440 = vunpack.c.l.b16 %v339
    %v1441 = vunpack.c.h.b16 %v339
    %v1442 = vunpack.c.l.b16 %v340
    %v1443 = vunpack.c.h.b16 %v340
    %v1444 = vunpack.c.l.b16 %v341
    %v1445 = vunpack.c.h.b16 %v341
    %v1446 = vunpack.c.l.b16 %v342
    %v1447 = vunpack.c.h.b16 %v342
    %v1448 = vunpack.c.l.b16 %v343
    %v1449 = vunpack.c.h.b16 %v343
    %v1450 = vunpack.c.l.b16 %v344
    %v1451 = vunpack.c.h.b16 %v344
    %v1452 = vunpack.c.l.b16 %v345
    %v1453 = vunpack.c.h.b16 %v345
    %v1454 = vunpack.c.l.b16 %v346
    %v1455 = vunpack.c.h.b16 %v346
    %v1456 = vunpack.c.l.b16 %v347
    %v1457 = vunpack.c.h.b16 %v347
    %v1458 = vunpack.c.l.b16 %v348
    %v1459 = vunpack.c.h.b16 %v348
    %v1460 = vunpack.c.l.b16 %v349
    %v1461 = vunpack.c.h.b16 %v349
    %v1462 = vunpack.c.l.b16 %v350
    %v1463 = vunpack.c.h.b16 %v350
    %v1464 = vunpack.c.l.b16 %v351
    %v1465 = vunpack.c.h.b16 %v351
    %v1466 = vunpack.c.l.b16 %v352
    %v1467 = vunpack.c.h.b16 %v352
    %v1468 = vunpack.c.l.b16 %v353
    %v1469 = vunpack.c.h.b16 %v353
    %v1470 = vunpack.c.l.b16 %v354
    %v1471 = vunpack.c.h.b16 %v354
    %v1472 = vunpack.c.l.b16 %v355
    %v1473 = vunpack.c.h.b16 %v355
    %v1474 = vunpack.c.l.b16 %v356
    %v1475 = vunpack.c.h.b16 %v356
    %v1476 = vunpack.c.l.b16 %v357
    %v1477 = vunpack.c.h.b16 %v357
    %v1478 = vunpack.c.l.b16 %v358
    %v1479 = vunpack.c.h.b16 %v358
    %v1480 = vunpack.c.l.b16 %v359
    %v1481 = vunpack.c.h.b16 %v359
    %v1482 = vunpack.c.l.b16 %v360
    %v1483 = vunpack.c.h.b16 %v360
    %v1484 = vunpack.c.l.b16 %v361
    %v1485 = vunpack.c.h.b16 %v361
    %v1486 = vunpack.c.l.b16 %v362
    %v1487 = vunpack.c.h.b16 %v362
    %v1488 = vunpack.c.l.b16 %v363
    %v1489 = vunpack.c.h.b16 %v363
    %v1490 = vunpack.c.l.b16 %v364
    %v1491 = vunpack.c.h.b16 %v364
    %v1492 = vunpack.c.l.b16 %v365
    %v1493 = vunpack.c.h.b16 %v365
    %v1494 = vunpack.c.l.b16 %v366
    %v1495 = vunpack.c.h.b16 %v366
    %v1496 = vunpack.c.l.b16 %v367
    %v1497 = vunpack.c.h.b16 %v367
    %v1498 = vunpack.c.l.b16 %v368
    %v1499 = vunpack.c.h.b16 %v368
    %v1500 = vunpack.c.l.b16 %v369
    %v1501 = vunpack.c.h.b16 %v369
    %v1502 = vunpack.c.l.b16 %v370
    %v1503 = vunpack.c.h.b16 %v370
    %v1504 = vunpack.c.l.b16 %v371
    %v1505 = vunpack.c.h.b16 %v371
    %v1506 = vunpack.c.l.b16 %v372
    %v1507 = vunpack.c.h.b16 %v372
    %v1508 = vunpack.c.l.b16 %v373
    %v1509 = vunpack.c.h.b16 %v373
    %v1510 = vunpack.c.l.b16 %v374
    %v1511 = vunpack.c.h.b16 %v374
    %v1512 = vunpack.c.l.b16 %v375
    %v1513 = vunpack.c.h.b16 %v375
    %v1514 = vunpack.c.l.b16 %v376
    %v1515 = vunpack.c.h.b16 %v376
    %v1516 = vunpack.c.l.b16 %v377
    %v1517 = vunpack.c.h.b16 %v377
    %v1518 = vunpack.c.l.b16 %v378
    %v1519 = vunpack.c.h.b16 %v378
    %v1520 = vunpack.c.l.b16 %v379
    %v1521 = vunpack.c.h.b16 %v379
    %v1522 = vunpack.c.l.b16 %v380
    %v1523 = vunpack.c.h.b16 %v380
    %v1524 = vunpack.c.l.b16 %v381
    %v1525 = vunpack.c.h.b16 %v381
    %v1526 = vunpack.c.l.b16 %v382
    %v1527 = vunpack.c.h.b16 %v382
    %v1528 = vunpack.c.l.b16 %v383
    %v1529 = vunpack.c.h.b16 %v383
    %v1530 = vunpack.c.l.b16 %v384
    %v1531 = vunpack.c.h.b16 %v384
    %v1532 = vunpack.c.l.b16 %v385
    %v1533 = vunpack.c.h.b16 %v385
    %v1534 = vunpack.c.l.b16 %v386
    %v1535 = vunpack.c.h.b16 %v386
    %v1536 = vunpack.c.l.b16 %v387
    %v1537 = vunpack.c.h.b16 %v387
    %v1538 = vunpack.c.l.b16 %v388
    %v1539 = vunpack.c.h.b16 %v388
    %v1540 = vunpack.c.l.b16 %v389
    %v1541 = vunpack.c.h.b16 %v389
    %v1542 = vunpack.c.l.b16 %v390
    %v1543 = vunpack.c.h.b16 %v390
    %v1544 = vunpack.c.l.b16 %v391
    %v1545 = vunpack.c.h.b16 %v391
    %v1546 = vunpack.c.l.b16 %v392
    %v1547 = vunpack.c.h.b16 %v392
    %v1548 = vunpack.c.l.b16 %v393
    %v1549 = vunpack.c.h.b16 %v393
    %v1550 = vunpack.c.l.b16 %v394
    %v1551 = vunpack.c.h.b16 %v394
    %v1552 = vunpack.c.l.b16 %v395
    %v1553 = vunpack.c.h.b16 %v395
    %v1554 = vunpack.c.l.b16 %v396
    %v1555 = vunpack.c.h.b16 %v396
    %v1556 = vunpack.c.l.b16 %v397
    %v1557 = vunpack.c.h.b16 %v397
    %v1558 = vunpack.c.l.b16 %v398
    %v1559 = vunpack.c.h.b16 %v398
    %v1560 = vunpack.c.l.b16 %v399
    %v1561 = vunpack.c.h.b16 %v399
    %v1562 = vunpack.c.l.b16 %v400
    %v1563 = vunpack.c.h.b16 %v400
    %v1564 = vunpack.c.l.b16 %v401
    %v1565 = vunpack.c.h.b16 %v401
    %v1566 = vunpack.c.l.b16 %v402
    %v1567 = vunpack.c.h.b16 %v402
    %v1568 = vunpack.c.l.b16 %v403
    %v1569 = vunpack.c.h.b16 %v403
    %v1570 = vunpack.c.l.b16 %v404
    %v1571 = vunpack.c.h.b16 %v404
    %v1572 = vunpack.c.l.b16 %v405
    %v1573 = vunpack.c.h.b16 %v405
    %v1574 = vunpack.c.l.b16 %v406
    %v1575 = vunpack.c.h.b16 %v406
    %v1576 = vunpack.c.l.b16 %v407
    %v1577 = vunpack.c.h.b16 %v407
    %v1578 = vunpack.c.l.b16 %v408
    %v1579 = vunpack.c.h.b16 %v408
    %v1580 = vunpack.c.l.b16 %v409
    %v1581 = vunpack.c.h.b16 %v409
    %v1582 = vunpack.c.l.b16 %v410
    %v1583 = vunpack.c.h.b16 %v410
    %v1584 = vunpack.c.l.b16 %v411
    %v1585 = vunpack.c.h.b16 %v411
    %v1586 = vunpack.c.l.b16 %v412
    %v1587 = vunpack.c.h.b16 %v412
    %v1588 = vunpack.c.l.b16 %v413
    %v1589 = vunpack.c.h.b16 %v413
    %v1590 = vunpack.c.l.b16 %v414
    %v1591 = vunpack.c.h.b16 %v414
    %v1592 = vunpack.c.l.b16 %v415
    %v1593 = vunpack.c.h.b16 %v415
    %v1594 = vunpack.c.l.b16 %v416
    %v1595 = vunpack.c.h.b16 %v416
    %v1596 = vunpack.c.l.b16 %v417
    %v1597 = vunpack.c.h.b16 %v417
    %v1598 = vunpack.c.l.b16 %v418
    %v1599 = vunpack.c.h.b16 %v418
    %v1600 = vunpack.c.l.b16 %v419
    %v1601 = vunpack.c.h.b16 %v419
    %v1602 = vunpack.c.l.b16 %v420
    %v1603 = vunpack.c.h.b16 %v420
    %v1604 = vunpack.c.l.b16 %v421
    %v1605 = vunpack.c.h.b16 %v421
    %v1606 = vunpack.c.l.b16 %v422
    %v1607 = vunpack.c.h.b16 %v422
    %v1608 = vunpack.c.l.b16 %v423
    %v1609 = vunpack.c.h.b16 %v423
    %v1610 = vunpack.c.l.b16 %v424
    %v1611 = vunpack.c.h.b16 %v424
    %v1612 = vunpack.c.l.b16 %v425
    %v1613 = vunpack.c.h.b16 %v425
    %v1614 = vunpack.c.l.b16 %v426
    %v1615 = vunpack.c.h.b16 %v426
    %v1616 = vunpack.c.l.b16 %v427
    %v1617 = vunpack.c.h.b16 %v427
    %v1618 = vunpack.c.l.b16 %v428
    %v1619 = vunpack.c.h.b16 %v428
    %v1620 = vunpack.c.l.b16 %v429
    %v1621 = vunpack.c.h.b16 %v429
    %v1622 = vunpack.c.l.b16 %v430
    %v1623 = vunpack.c.h.b16 %v430
    %v1624 = vunpack.c.l.b16 %v431
    %v1625 = vunpack.c.h.b16 %v431
    %v1626 = vunpack.c.l.b16 %v432
    %v1627 = vunpack.c.h.b16 %v432
    %v1628 = vunpack.c.l.b16 %v433
    %v1629 = vunpack.c.h.b16 %v433
    %v1630 = vunpack.c.l.b16 %v434
    %v1631 = vunpack.c.h.b16 %v434
    %v1632 = vunpack.c.l.b16 %v435
    %v1633 = vunpack.c.h.b16 %v435
    %v1634 = vunpack.c.l.b16 %v436
    %v1635 = vunpack.c.h.b16 %v436
    %v1636 = vunpack.c.l.b16 %v437
    %v1637 = vunpack.c.h.b16 %v437
    %v1638 = vunpack.c.l.b16 %v438
    %v1639 = vunpack.c.h.b16 %v438
    %v1640 = vunpack.c.l.b16 %v439
    %v1641 = vunpack.c.h.b16 %v439
    %v1642 = vunpack.c.l.b16 %v440
    %v1643 = vunpack.c.h.b16 %v440
    %v1644 = vunpack.c.l.b16 %v441
    %v1645 = vunpack.c.h.b16 %v441
    %v1646 = vunpack.c.l.b16 %v442
    %v1647 = vunpack.c.h.b16 %v442
    %v1648 = vunpack.c.l.b16 %v443
    %v1649 = vunpack.c.h.b16 %v443
    %v1650 = vunpack.c.l.b16 %v444
    %v1651 = vunpack.c.h.b16 %v444
    %v1652 = vunpack.c.l.b16 %v445
    %v1653 = vunpack.c.h.b16 %v445
    %v1654 = vunpack.c.l.b16 %v446
    %v1655 = vunpack.c.h.b16 %v446
    %v1656 = vunpack.c.l.b16 %v447
    %v1657 = vunpack.c.h.b16 %v447
    %v1658 = vunpack.c.l.b16 %v448
    %v1659 = vunpack.c.h.b16 %v448
    %v1660 = vunpack.c.l.b16 %v449
    %v1661 = vunpack.c.h.b16 %v449
    %v1662 = vunpack.c.l.b16 %v450
    %v1663 = vunpack.c.h.b16 %v450
    %v1664 = vunpack.c.l.b16 %v451
    %v1665 = vunpack.c.h.b16 %v451
    %v1666 = vunpack.c.l.b16 %v452
    %v1667 = vunpack.c.h.b16 %v452
    %v1668 = vunpack.c.l.b16 %v453
    %v1669 = vunpack.c.h.b16 %v453
    %v1670 = vunpack.c.l.b16 %v454
    %v1671 = vunpack.c.h.b16 %v454
    %v1672 = vunpack.c.l.b16 %v455
    %v1673 = vunpack.c.h.b16 %v455
    %v1674 = vunpack.c.l.b16 %v456
    %v1675 = vunpack.c.h.b16 %v456
    %v1676 = vunpack.c.l.b16 %v457
    %v1677 = vunpack.c.h.b16 %v457
    %v1678 = vunpack.c.l.b16 %v458
    %v1679 = vunpack.c.h.b16 %v458
    %v1680 = vunpack.c.l.b16 %v459
    %v1681 = vunpack.c.h.b16 %v459
    %v1682 = vunpack.c.l.b16 %v460
    %v1683 = vunpack.c.h.b16 %v460
    %v1684 = vunpack.c.l.b16 %v461
    %v1685 = vunpack.c.h.b16 %v461
    %v1686 = vunpack.c.l.b16 %v462
    %v1687 = vunpack.c.h.b16 %v462
    %v1688 = vunpack.c.l.b16 %v463
    %v1689 = vunpack.c.h.b16 %v463
    %v1690 = vunpack.c.l.b16 %v464
    %v1691 = vunpack.c.h.b16 %v464
    %v1692 = vunpack.c.l.b16 %v465
    %v1693 = vunpack.c.h.b16 %v465
    %v1694 = vunpack.c.l.b16 %v466
    %v1695 = vunpack.c.h.b16 %v466
    %v1696 = vunpack.c.l.b16 %v467
    %v1697 = vunpack.c.h.b16 %v467
    %v1698 = vunpack.c.l.b16 %v468
    %v1699 = vunpack.c.h.b16 %v468
    %v1700 = vunpack.c.l.b16 %v469
    %v1701 = vunpack.c.h.b16 %v469
    %v1702 = vunpack.c.l.b16 %v470
    %v1703 = vunpack.c.h.b16 %v470
    %v1704 = vunpack.c.l.b16 %v471
    %v1705 = vunpack.c.h.b16 %v471
    %v1706 = vunpack.c.l.b16 %v472
    %v1707 = vunpack.c.h.b16 %v472
    %v1708 = vunpack.c.l.b16 %v473
    %v1709 = vunpack.c.h.b16 %v473
    %v1710 = vunpack.c.l.b16 %v474
    %v1711 = vunpack.c.h.b16 %v474
    %v1712 = vunpack.c.l.b16 %v475
    %v1713 = vunpack.c.h.b16 %v475
    %v1714 = vunpack.c.l.b16 %v476
    %v1715 = vunpack.c.h.b16 %v476
    %v1716 = vpack.c.b16 %v934, %v932
    %v1717 = vpack.c.b16 %v935, %v933
    %v1718 = vpack.c.b16 %v938, %v936
    %v1719 = vpack.c.b16 %v939, %v937
    %v1720 = vpack.c.b16 %v942, %v940
    %v1721 = vpack.c.b16 %v943, %v941
    %v1722 = vpack.c.b16 %v946, %v944
    %v1723 = vpack.c.b16 %v947, %v945
    %v1724 = vpack.c.b16 %v950, %v948
    %v1725 = vpack.c.b16 %v951, %v949
    %v1726 = vpack.c.b16 %v954, %v952
    %v1727 = vpack.c.b16 %v955, %v953
    %v1728 = vpack.c.b16 %v958, %v956
    %v1729 = vpack.c.b16 %v959, %v957
    %v1730 = vpack.c.b16 %v962, %v960
    %v1731 = vpack.c.b16 %v963, %v961
    %v1732 = vpack.c.b16 %v966, %v964
    %v1733 = vpack.c.b16 %v967, %v965
    %v1734 = vpack.c.b16 %v970, %v968
    %v1735 = vpack.c.b16 %v971, %v969
    %v1736 = vpack.c.b16 %v974, %v972
    %v1737 = vpack.c.b16 %v975, %v973
    %v1738 = vpack.c.b16 %v978, %v976
    %v1739 = vpack.c.b16 %v979, %v977
    %v1740 = vpack.c.b16 %v982, %v980
    %v1741 = vpack.c.b16 %v983, %v981
    %v1742 = vpack.c.b16 %v986, %v984
    %v1743 = vpack.c.b16 %v987, %v985
    %v1744 = vpack.c.b16 %v990, %v988
    %v1745 = vpack.c.b16 %v991, %v989
    %v1746 = vpack.c.b16 %v994, %v992
    %v1747 = vpack.c.b16 %v995, %v993
    %v1748 = vpack.c.b16 %v998, %v996
    %v1749 = vpack.c.b16 %v999, %v997
    %v1750 = vpack.c.b16 %v1002, %v1000
    %v1751 = vpack.c.b16 %v1003, %v1001
    %v1752 = vpack.c.b16 %v1006, %v1004
    %v1753 = vpack.c.b16 %v1007, %v1005
    %v1754 = vpack.c.b16 %v1010, %v1008
    %v1755 = vpack.c.b16 %v1011, %v1009
    %v1756 = vpack.c.b16 %v1014, %v1012
    %v1757 = vpack.c.b16 %v1015, %v1013
    %v1758 = vpack.c.b16 %v1018, %v1016
    %v1759 = vpack.c.b16 %v1019, %v1017
    %v1760 = vpack.c.b16 %v1022, %v1020
    %v1761 = vpack.c.b16 %v1023, %v1021
    %v1762 = vpack.c.b16 %v1026, %v1024
    %v1763 = vpack.c.b16 %v1027, %v1025
    %v1764 = vpack.c.b16 %v1030, %v1028
    %v1765 = vpack.c.b16 %v1031, %v1029
    %v1766 = vpack.c.b16 %v1034, %v1032
    %v1767 = vpack.c.b16 %v1035, %v1033
    %v1768 = vpack.c.b16 %v1038, %v1036
    %v1769 = vpack.c.b16 %v1039, %v1037
    %v1770 = vpack.c.b16 %v1042, %v1040
    %v1771 = vpack.c.b16 %v1043, %v1041
    %v1772 = vpack.c.b16 %v1046, %v1044
    %v1773 = vpack.c.b16 %v1047, %v1045
    %v1774 = vpack.c.b16 %v1050, %v1048
    %v1775 = vpack.c.b16 %v1051, %v1049
    %v1776 = vpack.c.b16 %v1054, %v1052
    %v1777 = vpack.c.b16 %v1055, %v1053
    %v1778 = vpack.c.b16 %v1058, %v1056
    %v1779 = vpack.c.b16 %v1059, %v1057
    %v1780 = vpack.c.b16 %v1062, %v1060
    %v1781 = vpack.c.b16 %v1063, %v1061
    %v1782 = vpack.c.b16 %v1066, %v1064
    %v1783 = vpack.c.b16 %v1067, %v1065
    %v1784 = vpack.c.b16 %v1070, %v1068
    %v1785 = vpack.c.b16 %v1071, %v1069
    %v1786 = vpack.c.b16 %v1074, %v1072
    %v1787 = vpack.c.b16 %v1075, %v1073
    %v1788 = vpack.c.b16 %v1078, %v1076
    %v1789 = vpack.c.b16 %v1079, %v1077
    %v1790 = vpack.c.b16 %v1082, %v1080
    %v1791 = vpack.c.b16 %v1083, %v1081
    %v1792 = vpack.c.b16 %v1086, %v1084
    %v1793 = vpack.c.b16 %v1087, %v1085
    %v1794 = vpack.c.b16 %v1090, %v1088
    %v1795 = vpack.c.b16 %v1091, %v1089
    %v1796 = vpack.c.b16 %v1094, %v1092
    %v1797 = vpack.c.b16 %v1095, %v1093
    %v1798 = vpack.c.b16 %v1098, %v1096
    %v1799 = vpack.c.b16 %v1099, %v1097
    %v1800 = vpack.c.b16 %v1102, %v1100
    %v1801 = vpack.c.b16 %v1103, %v1101
    %v1802 = vpack.c.b16 %v1106, %v1104
    %v1803 = vpack.c.b16 %v1107, %v1105
    %v1804 = vpack.c.b16 %v1110, %v1108
    %v1805 = vpack.c.b16 %v1111, %v1109
    %v1806 = vpack.c.b16 %v1114, %v1112
    %v1807 = vpack.c.b16 %v1115, %v1113
    %v1808 = vpack.c.b16 %v1118, %v1116
    %v1809 = vpack.c.b16 %v1119, %v1117
    %v1810 = vpack.c.b16 %v1122, %v1120
    %v1811 = vpack.c.b16 %v1123, %v1121
    %v1812 = vpack.c.b16 %v1126, %v1124
    %v1813 = vpack.c.b16 %v1127, %v1125
    %v1814 = vpack.c.b16 %v1130, %v1128
    %v1815 = vpack.c.b16 %v1131, %v1129
    %v1816 = vpack.c.b16 %v1134, %v1132
    %v1817 = vpack.c.b16 %v1135, %v1133
    %v1818 = vpack.c.b16 %v1138, %v1136
    %v1819 = vpack.c.b16 %v1139, %v1137
    %v1820 = vpack.c.b16 %v1142, %v1140
    %v1821 = vpack.c.b16 %v1143, %v1141
    %v1822 = vpack.c.b16 %v1146, %v1144
    %v1823 = vpack.c.b16 %v1147, %v1145
    %v1824 = vpack.c.b16 %v1150, %v1148
    %v1825 = vpack.c.b16 %v1151, %v1149
    %v1826 = vpack.c.b16 %v1154, %v1152
    %v1827 = vpack.c.b16 %v1155, %v1153
    %v1828 = vpack.c.b16 %v1158, %v1156
    %v1829 = vpack.c.b16 %v1159, %v1157
    %v1830 = vpack.c.b16 %v1162, %v1160
    %v1831 = vpack.c.b16 %v1163, %v1161
    %v1832 = vpack.c.b16 %v1166, %v1164
    %v1833 = vpack.c.b16 %v1167, %v1165
    %v1834 = vpack.c.b16 %v1170, %v1168
    %v1835 = vpack.c.b16 %v1171, %v1169
    %v1836 = vpack.c.b16 %v1174, %v1172
    %v1837 = vpack.c.b16 %v1175, %v1173
    %v1838 = vpack.c.b16 %v1178, %v1176
    %v1839 = vpack.c.b16 %v1179, %v1177
    %v1840 = vpack.c.b16 %v1182, %v1180
    %v1841 = vpack.c.b16 %v1183, %v1181
    %v1842 = vpack.c.b16 %v1186, %v1184
    %v1843 = vpack.c.b16 %v1187, %v1185
    %v1844 = vpack.c.b16 %v1190, %v1188
    %v1845 = vpack.c.b16 %v1191, %v1189
    %v1846 = vpack.c.b16 %v1194, %v1192
    %v1847 = vpack.c.b16 %v1195, %v1193
    %v1848 = vpack.c.b16 %v1198, %v1196
    %v1849 = vpack.c.b16 %v1199, %v1197
    %v1850 = vpack.c.b16 %v1202, %v1200
    %v1851 = vpack.c.b16 %v1203, %v1201
    %v1852 = vpack.c.b16 %v1206, %v1204
    %v1853 = vpack.c.b16 %v1207, %v1205
    %v1854 = vpack.c.b16 %v1210, %v1208
    %v1855 = vpack.c.b16 %v1211, %v1209
    %v1856 = vpack.c.b16 %v1214, %v1212
    %v1857 = vpack.c.b16 %v1215, %v1213
    %v1858 = vpack.c.b16 %v1218, %v1216
    %v1859 = vpack.c.b16 %v1219, %v1217
    %v1860 = vpack.c.b16 %v1222, %v1220
    %v1861 = vpack.c.b16 %v1223, %v1221
    %v1862 = vpack.c.b16 %v1226, %v1224
    %v1863 = vpack.c.b16 %v1227, %v1225
    %v1864 = vpack.c.b16 %v1230, %v1228
    %v1865 = vpack.c.b16 %v1231, %v1229
    %v1866 = vpack.c.b16 %v1234, %v1232
    %v1867 = vpack.c.b16 %v1235, %v1233
    %v1868 = vpack.c.b16 %v1238, %v1236
    %v1869 = vpack.c.b16 %v1239, %v1237
    %v1870 = vpack.c.b16 %v1242, %v1240
    %v1871 = vpack.c.b16 %v1243, %v1241
    %v1872 = vpack.c.b16 %v1246, %v1244
    %v1873 = vpack.c.b16 %v1247, %v1245
    %v1874 = vpack.c.b16 %v1250, %v1248
    %v1875 = vpack.c.b16 %v1251, %v1249
    %v1876 = vpack.c.b16 %v1254, %v1252
    %v1877 = vpack.c.b16 %v1255, %v1253
    %v1878 = vpack.c.b16 %v1258, %v1256
    %v1879 = vpack.c.b16 %v1259, %v1257
    %v1880 = vpack.c.b16 %v1262, %v1260
    %v1881 = vpack.c.b16 %v1263, %v1261
    %v1882 = vpack.c.b16 %v1266, %v1264
    %v1883 = vpack.c.b16 %v1267, %v1265
    %v1884 = vpack.c.b16 %v1270, %v1268
    %v1885 = vpack.c.b16 %v1271, %v1269
    %v1886 = vpack.c.b16 %v1274, %v1272
    %v1887 = vpack.c.b16 %v1275, %v1273
    %v1888 = vpack.c.b16 %v1278, %v1276
    %v1889 = vpack.c.b16 %v1279, %v1277
    %v1890 = vpack.c.b16 %v1282, %v1280
    %v1891 = vpack.c.b16 %v1283, %v1281
    %v1892 = vpack.c.b16 %v1286, %v1284
    %v1893 = vpack.c.b16 %v1287, %v1285
    %v1894 = vpack.c.b16 %v1290, %v1288
    %v1895 = vpack.c.b16 %v1291, %v1289
    %v1896 = vpack.c.b16 %v1294, %v1292
    %v1897 = vpack.c.b16 %v1295, %v1293
    %v1898 = vpack.c.b16 %v1298, %v1296
    %v1899 = vpack.c.b16 %v1299, %v1297
    %v1900 = vpack.c.b16 %v1302, %v1300
    %v1901 = vpack.c.b16 %v1303, %v1301
    %v1902 = vpack.c.b16 %v1306, %v1304
    %v1903 = vpack.c.b16 %v1307, %v1305
    %v1904 = vpack.c.b16 %v1310, %v1308
    %v1905 = vpack.c.b16 %v1311, %v1309
    %v1906 = vpack.c.b16 %v1314, %v1312
    %v1907 = vpack.c.b16 %v1315, %v1313
    %v1908 = vpack.c.b16 %v1318, %v1316
    %v1909 = vpack.c.b16 %v1319, %v1317
    %v1910 = vpack.c.b16 %v1322, %v1320
    %v1911 = vpack.c.b16 %v1323, %v1321
    %v1912 = vpack.c.b16 %v1326, %v1324
    %v1913 = vpack.c.b16 %v1327, %v1325
    %v1914 = vpack.c.b16 %v1330, %v1328
    %v1915 = vpack.c.b16 %v1331, %v1329
    %v1916 = vpack.c.b16 %v1334, %v1332
    %v1917 = vpack.c.b16 %v1335, %v1333
    %v1918 = vpack.c.b16 %v1338, %v1336
    %v1919 = vpack.c.b16 %v1339, %v1337
    %v1920 = vpack.c.b16 %v1342, %v1340
    %v1921 = vpack.c.b16 %v1343, %v1341
    %v1922 = vpack.c.b16 %v1346, %v1344
    %v1923 = vpack.c.b16 %v1347, %v1345
    %v1924 = vpack.c.b16 %v1350, %v1348
    %v1925 = vpack.c.b16 %v1351, %v1349
    %v1926 = vpack.c.b16 %v1354, %v1352
    %v1927 = vpack.c.b16 %v1355, %v1353
    %v1928 = vpack.c.b16 %v1358, %v1356
    %v1929 = vpack.c.b16 %v1359, %v1357
    %v1930 = vpack.c.b16 %v1362, %v1360
    %v1931 = vpack.c.b16 %v1363, %v1361
    %v1932 = vpack.c.b16 %v1366, %v1364
    %v1933 = vpack.c.b16 %v1367, %v1365
    %v1934 = vpack.c.b16 %v1370, %v1368
    %v1935 = vpack.c.b16 %v1371, %v1369
    %v1936 = vpack.c.b16 %v1374, %v1372
    %v1937 = vpack.c.b16 %v1375, %v1373
    %v1938 = vpack.c.b16 %v1378, %v1376
    %v1939 = vpack.c.b16 %v1379, %v1377
    %v1940 = vpack.c.b16 %v1382, %v1380
    %v1941 = vpack.c.b16 %v1383, %v1381
    %v1942 = vpack.c.b16 %v1386, %v1384
    %v1943 = vpack.c.b16 %v1387, %v1385
    %v1944 = vpack.c.b16 %v1390, %v1388
    %v1945 = vpack.c.b16 %v1391, %v1389
    %v1946 = vpack.c.b16 %v1394, %v1392
    %v1947 = vpack.c.b16 %v1395, %v1393
    %v1948 = vpack.c.b16 %v1398, %v1396
    %v1949 = vpack.c.b16 %v1399, %v1397
    %v1950 = vpack.c.b16 %v1402, %v1400
    %v1951 = vpack.c.b16 %v1403, %v1401
    %v1952 = vpack.c.b16 %v1406, %v1404
    %v1953 = vpack.c.b16 %v1407, %v1405
    %v1954 = vpack.c.b16 %v1410, %v1408
    %v1955 = vpack.c.b16 %v1411, %v1409
    %v1956 = vpack.c.b16 %v1414, %v1412
    %v1957 = vpack.c.b16 %v1415, %v1413
    %v1958 = vpack.c.b16 %v1418, %v1416
    %v1959 = vpack.c.b16 %v1419, %v1417
    %v1960 = vpack.c.b16 %v1422, %v1420
    %v1961 = vpack.c.b16 %v1423, %v1421
    %v1962 = vpack.c.b16 %v1426, %v1424
    %v1963 = vpack.c.b16 %v1427, %v1425
    %v1964 = vpack.c.b16 %v1430, %v1428
    %v1965 = vpack.c.b16 %v1431, %v1429
    %v1966 = vpack.c.b16 %v1434, %v1432
    %v1967 = vpack.c.b16 %v1435, %v1433
    %v1968 = vpack.c.b16 %v1438, %v1436
    %v1969 = vpack.c.b16 %v1439, %v1437
    %v1970 = vpack.c.b16 %v1442, %v1440
    %v1971 = vpack.c.b16 %v1443, %v1441
    %v1972 = vpack.c.b16 %v1446, %v1444
    %v1973 = vpack.c.b16 %v1447, %v1445
    %v1974 = vpack.c.b16 %v1450, %v1448
    %v1975 = vpack.c.b16 %v1451, %v1449
    %v1976 = vpack.c.b16 %v1454, %v1452
    %v1977 = vpack.c.b16 %v1455, %v1453
    %v1978 = vpack.c.b16 %v1458, %v1456
    %v1979 = vpack.c.b16 %v1459, %v1457
    %v1980 = vpack.c.b16 %v1462, %v1460
    %v1981 = vpack.c.b16 %v1463, %v1461
    %v1982 = vpack.c.b16 %v1466, %v1464
    %v1983 = vpack.c.b16 %v1467, %v1465
    %v1984 = vpack.c.b16 %v1470, %v1468
    %v1985 = vpack.c.b16 %v1471, %v1469
    %v1986 = vpack.c.b16 %v1474, %v1472
    %v1987 = vpack.c.b16 %v1475, %v1473
    %v1988 = vpack.c.b16 %v1478, %v1476
    %v1989 = vpack.c.b16 %v1479, %v1477
    %v1990 = vpack.c.b16 %v1482, %v1480
    %v1991 = vpack.c.b16 %v1483, %v1481
    %v1992 = vpack.c.b16 %v1486, %v1484
    %v1993 = vpack.c.b16 %v1487, %v1485
    %v1994 = vpack.c.b16 %v1490, %v1488
    %v1995 = vpack.c.b16 %v1491, %v1489
    %v1996 = vpack.c.b16 %v1494, %v1492
    %v1997 = vpack.c.b16 %v1495, %v1493
    %v1998 = vpack.c.b16 %v1498, %v1496
    %v1999 = vpack.c.b16 %v1499, %v1497
    %v2000 = vpack.c.b16 %v1502, %v1500
    %v2001 = vpack.c.b16 %v1503, %v1501
    %v2002 = vpack.c.b16 %v1506, %v1504
    %v2003 = vpack.c.b16 %v1507, %v1505
    %v2004 = vpack.c.b16 %v1510, %v1508
    %v2005 = vpack.c.b16 %v1511, %v1509
    %v2006 = vpack.c.b16 %v1514, %v1512
    %v2007 = vpack.c.b16 %v1515, %v1513
    %v2008 = vpack.c.b16 %v1518, %v1516
    %v2009 = vpack.c.b16 %v1519, %v1517
    %v2010 = vpack.c.b16 %v1522, %v1520
    %v2011 = vpack.c.b16 %v1523, %v1521
    %v2012 = vpack.c.b16 %v1526, %v1524
    %v2013 = vpack.c.b16 %v1527, %v1525
    %v2014 = vpack.c.b16 %v1530, %v1528
    %v2015 = vpack.c.b16 %v1531, %v1529
    %v2016 = vpack.c.b16 %v1534, %v1532
    %v2017 = vpack.c.b16 %v1535, %v1533
    %v2018 = vpack.c.b16 %v1538, %v1536
    %v2019 = vpack.c.b16 %v1539, %v1537
    %v2020 = vpack.c.b16 %v1542, %v1540
    %v2021 = vpack.c.b16 %v1543, %v1541
    %v2022 = vpack.c.b16 %v1546, %v1544
    %v2023 = vpack.c.b16 %v1547, %v1545
    %v2024 = vpack.c.b16 %v1550, %v1548
    %v2025 = vpack.c.b16 %v1551, %v1549
    %v2026 = vpack.c.b16 %v1554, %v1552
    %v2027 = vpack.c.b16 %v1555, %v1553
    %v2028 = vpack.c.b16 %v1558, %v1556
    %v2029 = vpack.c.b16 %v1559, %v1557
    %v2030 = vpack.c.b16 %v1562, %v1560
    %v2031 = vpack.c.b16 %v1563, %v1561
    %v2032 = vpack.c.b16 %v1566, %v1564
    %v2033 = vpack.c.b16 %v1567, %v1565
    %v2034 = vpack.c.b16 %v1570, %v1568
    %v2035 = vpack.c.b16 %v1571, %v1569
    %v2036 = vpack.c.b16 %v1574, %v1572
    %v2037 = vpack.c.b16 %v1575, %v1573
    %v2038 = vpack.c.b16 %v1578, %v1576
    %v2039 = vpack.c.b16 %v1579, %v1577
    %v2040 = vpack.c.b16 %v1582, %v1580
    %v2041 = vpack.c.b16 %v1583, %v1581
    %v2042 = vpack.c.b16 %v1586, %v1584
    %v2043 = vpack.c.b16 %v1587, %v1585
    %v2044 = vpack.c.b16 %v1590, %v1588
    %v2045 = vpack.c.b16 %v1591, %v1589
    %v2046 = vpack.c.b16 %v1594, %v1592
    %v2047 = vpack.c.b16 %v1595, %v1593
    %v2048 = vpack.c.b16 %v1598, %v1596
    %v2049 = vpack.c.b16 %v1599, %v1597
    %v2050 = vpack.c.b16 %v1602, %v1600
    %v2051 = vpack.c.b16 %v1603, %v1601
    %v2052 = vpack.c.b16 %v1606, %v1604
    %v2053 = vpack.c.b16 %v1607, %v1605
    %v2054 = vpack.c.b16 %v1610, %v1608
    %v2055 = vpack.c.b16 %v1611, %v1609
    %v2056 = vpack.c.b16 %v1614, %v1612
    %v2057 = vpack.c.b16 %v1615, %v1613
    %v2058 = vpack.c.b16 %v1618, %v1616
    %v2059 = vpack.c.b16 %v1619, %v1617
    %v2060 = vpack.c.b16 %v1622, %v1620
    %v2061 = vpack.c.b16 %v1623, %v1621
    %v2062 = vpack.c.b16 %v1626, %v1624
    %v2063 = vpack.c.b16 %v1627, %v1625
    %v2064 = vpack.c.b16 %v1630, %v1628
    %v2065 = vpack.c.b16 %v1631, %v1629
    %v2066 = vpack.c.b16 %v1634, %v1632
    %v2067 = vpack.c.b16 %v1635, %v1633
    %v2068 = vpack.c.b16 %v1638, %v1636
    %v2069 = vpack.c.b16 %v1639, %v1637
    %v2070 = vpack.c.b16 %v1642, %v1640
    %v2071 = vpack.c.b16 %v1643, %v1641
    %v2072 = vpack.c.b16 %v1646, %v1644
    %v2073 = vpack.c.b16 %v1647, %v1645
    %v2074 = vpack.c.b16 %v1650, %v1648
    %v2075 = vpack.c.b16 %v1651, %v1649
    %v2076 = vpack.c.b16 %v1654, %v1652
    %v2077 = vpack.c.b16 %v1655, %v1653
    %v2078 = vpack.c.b16 %v1658, %v1656
    %v2079 = vpack.c.b16 %v1659, %v1657
    %v2080 = vpack.c.b16 %v1662, %v1660
    %v2081 = vpack.c.b16 %v1663, %v1661
    %v2082 = vpack.c.b16 %v1666, %v1664
    %v2083 = vpack.c.b16 %v1667, %v1665
    %v2084 = vpack.c.b16 %v1670, %v1668
    %v2085 = vpack.c.b16 %v1671, %v1669
    %v2086 = vpack.c.b16 %v1674, %v1672
    %v2087 = vpack.c.b16 %v1675, %v1673
    %v2088 = vpack.c.b16 %v1678, %v1676
    %v2089 = vpack.c.b16 %v1679, %v1677
    %v2090 = vpack.c.b16 %v1682, %v1680
    %v2091 = vpack.c.b16 %v1683, %v1681
    %v2092 = vpack.c.b16 %v1686, %v1684
    %v2093 = vpack.c.b16 %v1687, %v1685
    %v2094 = vpack.c.b16 %v1690, %v1688
    %v2095 = vpack.c.b16 %v1691, %v1689
    %v2096 = vpack.c.b16 %v1694, %v1692
    %v2097 = vpack.c.b16 %v1695, %v1693
    %v2098 = vpack.c.b16 %v1698, %v1696
    %v2099 = vpack.c.b16 %v1699, %v1697
    %v2100 = vpack.c.b16 %v1702, %v1700
    %v2101 = vpack.c.b16 %v1703, %v1701
    %v2102 = vpack.c.b16 %v1706, %v1704
    %v2103 = vpack.c.b16 %v1707, %v1705
    %v2104 = vpack.c.b16 %v1710, %v1708
    %v2105 = vpack.c.b16 %v1711, %v1709
    %v2106 = vpack.c.b16 %v1714, %v1712
    %v2107 = vpack.c.b16 %v1715, %v1713
    %vm2500 = vcmask 523264
    %v2501 = vsel %vm2500, %v515, 0
    %2503 = vmatpush.bf16.msra.mxu0 %v1730
    %2504 = vmatpush.bf16.msra.mxu0 %v1728
    %2505 = vmatpush.bf16.msra.mxu0 %v1726
    %2506 = vmatpush.bf16.msra.mxu0 %v1724
    %2507 = vmatpush.bf16.msra.mxu0 %v1722
    %2508 = vmatpush.bf16.msra.mxu0 %v1720
    %2509 = vmatpush.bf16.msra.mxu0 %v1718
    %2510 = vmatpush.bf16.msra.mxu0 %v1716
    %2511 = vmatmul.bf16.gmra.mxu0 %v485
    %v2512 = vpop.f32.mrf.mxu0
    %v2513 = vadd.f32 %v479, %v2512
    %v2514 = vpop.f32.mrf.mxu0
    %2515 = vdwg.mxu0
    %2516 = vmatpush.bf16.msra.mxu0 %v1746
    %2517 = vmatpush.bf16.msra.mxu0 %v1744
    %2518 = vmatpush.bf16.msra.mxu0 %v1742
    %2519 = vmatpush.bf16.msra.mxu0 %v1740
    %2520 = vmatpush.bf16.msra.mxu0 %v1738
    %2521 = vmatpush.bf16.msra.mxu0 %v1736
    %2522 = vmatpush.bf16.msra.mxu0 %v1734
    %2523 = vmatpush.bf16.msra.mxu0 %v1732
    %2524 = vmatmul.bf16.gmra.mxu0 %v486
    %v2525 = vpop.f32.mrf.mxu0
    %v2526 = vadd.f32 %v2513, %v2525
    %v2527 = vpop.f32.mrf.mxu0
    %2528 = vdwg.mxu0
    %2529 = vmatpush.bf16.msra.mxu0 %v1762
    %2530 = vmatpush.bf16.msra.mxu0 %v1760
    %2531 = vmatpush.bf16.msra.mxu0 %v1758
    %2532 = vmatpush.bf16.msra.mxu0 %v1756
    %2533 = vmatpush.bf16.msra.mxu0 %v1754
    %2534 = vmatpush.bf16.msra.mxu0 %v1752
    %2535 = vmatpush.bf16.msra.mxu0 %v1750
    %2536 = vmatpush.bf16.msra.mxu0 %v1748
    %2537 = vmatmul.bf16.gmra.mxu0 %v487
    %v2538 = vpop.f32.mrf.mxu0
    %v2539 = vadd.f32 %v2526, %v2538
    %v2540 = vpop.f32.mrf.mxu0
    %2541 = vdwg.mxu0
    %2542 = vmatpush.bf16.msra.mxu0 %v1778
    %2543 = vmatpush.bf16.msra.mxu0 %v1776
    %2544 = vmatpush.bf16.msra.mxu0 %v1774
    %2545 = vmatpush.bf16.msra.mxu0 %v1772
    %2546 = vmatpush.bf16.msra.mxu0 %v1770
    %2547 = vmatpush.bf16.msra.mxu0 %v1768
    %2548 = vmatpush.bf16.msra.mxu0 %v1766
    %2549 = vmatpush.bf16.msra.mxu0 %v1764
    %2550 = vmatmul.bf16.gmra.mxu0 %v488
    %v2551 = vpop.f32.mrf.mxu0
    %v2552 = vadd.f32 %v2539, %v2551
    %v2553 = vpop.f32.mrf.mxu0
    %2554 = vdwg.mxu0
    %2555 = vmatpush.bf16.msra.mxu0 %v1794
    %2556 = vmatpush.bf16.msra.mxu0 %v1792
    %2557 = vmatpush.bf16.msra.mxu0 %v1790
    %2558 = vmatpush.bf16.msra.mxu0 %v1788
    %2559 = vmatpush.bf16.msra.mxu0 %v1786
    %2560 = vmatpush.bf16.msra.mxu0 %v1784
    %2561 = vmatpush.bf16.msra.mxu0 %v1782
    %2562 = vmatpush.bf16.msra.mxu0 %v1780
    %2563 = vmatmul.bf16.gmra.mxu0 %v489
    %v2564 = vpop.f32.mrf.mxu0
    %v2565 = vadd.f32 %v2552, %v2564
    %v2566 = vpop.f32.mrf.mxu0
    %2567 = vdwg.mxu0
    %2568 = vmatpush.bf16.msra.mxu0 %v1810
    %2569 = vmatpush.bf16.msra.mxu0 %v1808
    %2570 = vmatpush.bf16.msra.mxu0 %v1806
    %2571 = vmatpush.bf16.msra.mxu0 %v1804
    %2572 = vmatpush.bf16.msra.mxu0 %v1802
    %2573 = vmatpush.bf16.msra.mxu0 %v1800
    %2574 = vmatpush.bf16.msra.mxu0 %v1798
    %2575 = vmatpush.bf16.msra.mxu0 %v1796
    %2576 = vmatmul.bf16.gmra.mxu0 %v490
    %v2577 = vpop.f32.mrf.mxu0
    %v2578 = vadd.f32 %v2565, %v2577
    %v2579 = vpop.f32.mrf.mxu0
    %2580 = vdwg.mxu0
    %2581 = vmatpush.bf16.msra.mxu0 %v1826
    %2582 = vmatpush.bf16.msra.mxu0 %v1824
    %2583 = vmatpush.bf16.msra.mxu0 %v1822
    %2584 = vmatpush.bf16.msra.mxu0 %v1820
    %2585 = vmatpush.bf16.msra.mxu0 %v1818
    %2586 = vmatpush.bf16.msra.mxu0 %v1816
    %2587 = vmatpush.bf16.msra.mxu0 %v1814
    %2588 = vmatpush.bf16.msra.mxu0 %v1812
    %2589 = vmatmul.bf16.gmra.mxu0 %v491
    %v2590 = vpop.f32.mrf.mxu0
    %v2591 = vadd.f32 %v2578, %v2590
    %v2592 = vpop.f32.mrf.mxu0
    %2593 = vdwg.mxu0
    %2594 = vmatpush.bf16.msra.mxu0 %v1842
    %2595 = vmatpush.bf16.msra.mxu0 %v1840
    %2596 = vmatpush.bf16.msra.mxu0 %v1838
    %2597 = vmatpush.bf16.msra.mxu0 %v1836
    %2598 = vmatpush.bf16.msra.mxu0 %v1834
    %2599 = vmatpush.bf16.msra.mxu0 %v1832
    %2600 = vmatpush.bf16.msra.mxu0 %v1830
    %2601 = vmatpush.bf16.msra.mxu0 %v1828
    %2602 = vmatmul.bf16.gmra.mxu0 %v492
    %v2603 = vpop.f32.mrf.mxu0
    %v2604 = vadd.f32 %v2591, %v2603
    %v2605 = vpop.f32.mrf.mxu0
    %2606 = vdwg.mxu0
    %2607 = vmatpush.bf16.msra.mxu0 %v1858
    %2608 = vmatpush.bf16.msra.mxu0 %v1856
    %2609 = vmatpush.bf16.msra.mxu0 %v1854
    %2610 = vmatpush.bf16.msra.mxu0 %v1852
    %2611 = vmatpush.bf16.msra.mxu0 %v1850
    %2612 = vmatpush.bf16.msra.mxu0 %v1848
    %2613 = vmatpush.bf16.msra.mxu0 %v1846
    %2614 = vmatpush.bf16.msra.mxu0 %v1844
    %2615 = vmatmul.bf16.gmra.mxu0 %v495
    %v2616 = vpop.f32.mrf.mxu0
    %v2617 = vadd.f32 %v2604, %v2616
    %v2618 = vpop.f32.mrf.mxu0
    %2619 = vdwg.mxu0
    %2620 = vmatpush.bf16.msra.mxu0 %v1874
    %2621 = vmatpush.bf16.msra.mxu0 %v1872
    %2622 = vmatpush.bf16.msra.mxu0 %v1870
    %2623 = vmatpush.bf16.msra.mxu0 %v1868
    %2624 = vmatpush.bf16.msra.mxu0 %v1866
    %2625 = vmatpush.bf16.msra.mxu0 %v1864
    %2626 = vmatpush.bf16.msra.mxu0 %v1862
    %2627 = vmatpush.bf16.msra.mxu0 %v1860
    %2628 = vmatmul.bf16.gmra.mxu0 %v496
    %v2629 = vpop.f32.mrf.mxu0
    %v2630 = vadd.f32 %v2617, %v2629
    %v2631 = vpop.f32.mrf.mxu0
    %2632 = vdwg.mxu0
    %2633 = vmatpush.bf16.msra.mxu0 %v1890
    %2634 = vmatpush.bf16.msra.mxu0 %v1888
    %2635 = vmatpush.bf16.msra.mxu0 %v1886
    %2636 = vmatpush.bf16.msra.mxu0 %v1884
    %2637 = vmatpush.bf16.msra.mxu0 %v1882
    %2638 = vmatpush.bf16.msra.mxu0 %v1880
    %2639 = vmatpush.bf16.msra.mxu0 %v1878
    %2640 = vmatpush.bf16.msra.mxu0 %v1876
    %2641 = vmatmul.bf16.gmra.mxu0 %v497
    %v2642 = vpop.f32.mrf.mxu0
    %v2643 = vadd.f32 %v2630, %v2642
    %v2644 = vpop.f32.mrf.mxu0
    %2645 = vdwg.mxu0
    %2646 = vmatpush.bf16.msra.mxu0 %v1906
    %2647 = vmatpush.bf16.msra.mxu0 %v1904
    %2648 = vmatpush.bf16.msra.mxu0 %v1902
    %2649 = vmatpush.bf16.msra.mxu0 %v1900
    %2650 = vmatpush.bf16.msra.mxu0 %v1898
    %2651 = vmatpush.bf16.msra.mxu0 %v1896
    %2652 = vmatpush.bf16.msra.mxu0 %v1894
    %2653 = vmatpush.bf16.msra.mxu0 %v1892
    %2654 = vmatmul.bf16.gmra.mxu0 %v498
    %v2655 = vpop.f32.mrf.mxu0
    %v2656 = vadd.f32 %v2643, %v2655
    %v2657 = vpop.f32.mrf.mxu0
    %2658 = vdwg.mxu0
    %2659 = vmatpush.bf16.msra.mxu0 %v1922
    %2660 = vmatpush.bf16.msra.mxu0 %v1920
    %2661 = vmatpush.bf16.msra.mxu0 %v1918
    %2662 = vmatpush.bf16.msra.mxu0 %v1916
    %2663 = vmatpush.bf16.msra.mxu0 %v1914
    %2664 = vmatpush.bf16.msra.mxu0 %v1912
    %2665 = vmatpush.bf16.msra.mxu0 %v1910
    %2666 = vmatpush.bf16.msra.mxu0 %v1908
    %2667 = vmatmul.bf16.gmra.mxu0 %v499
    %v2668 = vpop.f32.mrf.mxu0
    %v2669 = vadd.f32 %v2656, %v2668
    %v2670 = vpop.f32.mrf.mxu0
    %2671 = vdwg.mxu0
    %2672 = vmatpush.bf16.msra.mxu0 %v1938
    %2673 = vmatpush.bf16.msra.mxu0 %v1936
    %2674 = vmatpush.bf16.msra.mxu0 %v1934
    %2675 = vmatpush.bf16.msra.mxu0 %v1932
    %2676 = vmatpush.bf16.msra.mxu0 %v1930
    %2677 = vmatpush.bf16.msra.mxu0 %v1928
    %2678 = vmatpush.bf16.msra.mxu0 %v1926
    %2679 = vmatpush.bf16.msra.mxu0 %v1924
    %2680 = vmatmul.bf16.gmra.mxu0 %v500
    %v2681 = vpop.f32.mrf.mxu0
    %v2682 = vadd.f32 %v2669, %v2681
    %v2683 = vpop.f32.mrf.mxu0
    %2684 = vdwg.mxu0
    %2685 = vmatpush.bf16.msra.mxu0 %v1954
    %2686 = vmatpush.bf16.msra.mxu0 %v1952
    %2687 = vmatpush.bf16.msra.mxu0 %v1950
    %2688 = vmatpush.bf16.msra.mxu0 %v1948
    %2689 = vmatpush.bf16.msra.mxu0 %v1946
    %2690 = vmatpush.bf16.msra.mxu0 %v1944
    %2691 = vmatpush.bf16.msra.mxu0 %v1942
    %2692 = vmatpush.bf16.msra.mxu0 %v1940
    %2693 = vmatmul.bf16.gmra.mxu0 %v501
    %v2694 = vpop.f32.mrf.mxu0
    %v2695 = vadd.f32 %v2682, %v2694
    %v2696 = vpop.f32.mrf.mxu0
    %2697 = vdwg.mxu0
    %2698 = vmatpush.bf16.msra.mxu0 %v1970
    %2699 = vmatpush.bf16.msra.mxu0 %v1968
    %2700 = vmatpush.bf16.msra.mxu0 %v1966
    %2701 = vmatpush.bf16.msra.mxu0 %v1964
    %2702 = vmatpush.bf16.msra.mxu0 %v1962
    %2703 = vmatpush.bf16.msra.mxu0 %v1960
    %2704 = vmatpush.bf16.msra.mxu0 %v1958
    %2705 = vmatpush.bf16.msra.mxu0 %v1956
    %2706 = vmatmul.bf16.gmra.mxu0 %v502
    %v2707 = vpop.f32.mrf.mxu0
    %v2708 = vadd.f32 %v2695, %v2707
    %v2709 = vpop.f32.mrf.mxu0
    %2710 = vdwg.mxu0
    %2711 = vmatpush.bf16.msra.mxu0 %v1986
    %2712 = vmatpush.bf16.msra.mxu0 %v1984
    %2713 = vmatpush.bf16.msra.mxu0 %v1982
    %2714 = vmatpush.bf16.msra.mxu0 %v1980
    %2715 = vmatpush.bf16.msra.mxu0 %v1978
    %2716 = vmatpush.bf16.msra.mxu0 %v1976
    %2717 = vmatpush.bf16.msra.mxu0 %v1974
    %2718 = vmatpush.bf16.msra.mxu0 %v1972
    %2719 = vmatmul.bf16.gmra.mxu0 %v505
    %v2720 = vpop.f32.mrf.mxu0
    %v2721 = vadd.f32 %v2708, %v2720
    %v2722 = vpop.f32.mrf.mxu0
    %2723 = vdwg.mxu0
    %2724 = vmatpush.bf16.msra.mxu0 %v2002
    %2725 = vmatpush.bf16.msra.mxu0 %v2000
    %2726 = vmatpush.bf16.msra.mxu0 %v1998
    %2727 = vmatpush.bf16.msra.mxu0 %v1996
    %2728 = vmatpush.bf16.msra.mxu0 %v1994
    %2729 = vmatpush.bf16.msra.mxu0 %v1992
    %2730 = vmatpush.bf16.msra.mxu0 %v1990
    %2731 = vmatpush.bf16.msra.mxu0 %v1988
    %2732 = vmatmul.bf16.gmra.mxu0 %v506
    %v2733 = vpop.f32.mrf.mxu0
    %v2734 = vadd.f32 %v2721, %v2733
    %v2735 = vpop.f32.mrf.mxu0
    %2736 = vdwg.mxu0
    %2737 = vmatpush.bf16.msra.mxu0 %v2018
    %2738 = vmatpush.bf16.msra.mxu0 %v2016
    %2739 = vmatpush.bf16.msra.mxu0 %v2014
    %2740 = vmatpush.bf16.msra.mxu0 %v2012
    %2741 = vmatpush.bf16.msra.mxu0 %v2010
    %2742 = vmatpush.bf16.msra.mxu0 %v2008
    %2743 = vmatpush.bf16.msra.mxu0 %v2006
    %2744 = vmatpush.bf16.msra.mxu0 %v2004
    %2745 = vmatmul.bf16.gmra.mxu0 %v507
    %v2746 = vpop.f32.mrf.mxu0
    %v2747 = vadd.f32 %v2734, %v2746
    %v2748 = vpop.f32.mrf.mxu0
    %2749 = vdwg.mxu0
    %2750 = vmatpush.bf16.msra.mxu0 %v2034
    %2751 = vmatpush.bf16.msra.mxu0 %v2032
    %2752 = vmatpush.bf16.msra.mxu0 %v2030
    %2753 = vmatpush.bf16.msra.mxu0 %v2028
    %2754 = vmatpush.bf16.msra.mxu0 %v2026
    %2755 = vmatpush.bf16.msra.mxu0 %v2024
    %2756 = vmatpush.bf16.msra.mxu0 %v2022
    %2757 = vmatpush.bf16.msra.mxu0 %v2020
    %2758 = vmatmul.bf16.gmra.mxu0 %v508
    %v2759 = vpop.f32.mrf.mxu0
    %v2760 = vadd.f32 %v2747, %v2759
    %v2761 = vpop.f32.mrf.mxu0
    %2762 = vdwg.mxu0
    %2763 = vmatpush.bf16.msra.mxu0 %v2050
    %2764 = vmatpush.bf16.msra.mxu0 %v2048
    %2765 = vmatpush.bf16.msra.mxu0 %v2046
    %2766 = vmatpush.bf16.msra.mxu0 %v2044
    %2767 = vmatpush.bf16.msra.mxu0 %v2042
    %2768 = vmatpush.bf16.msra.mxu0 %v2040
    %2769 = vmatpush.bf16.msra.mxu0 %v2038
    %2770 = vmatpush.bf16.msra.mxu0 %v2036
    %2771 = vmatmul.bf16.gmra.mxu0 %v509
    %v2772 = vpop.f32.mrf.mxu0
    %v2773 = vadd.f32 %v2760, %v2772
    %v2774 = vpop.f32.mrf.mxu0
    %2775 = vdwg.mxu0
    %2776 = vmatpush.bf16.msra.mxu0 %v2066
    %2777 = vmatpush.bf16.msra.mxu0 %v2064
    %2778 = vmatpush.bf16.msra.mxu0 %v2062
    %2779 = vmatpush.bf16.msra.mxu0 %v2060
    %2780 = vmatpush.bf16.msra.mxu0 %v2058
    %2781 = vmatpush.bf16.msra.mxu0 %v2056
    %2782 = vmatpush.bf16.msra.mxu0 %v2054
    %2783 = vmatpush.bf16.msra.mxu0 %v2052
    %2784 = vmatmul.bf16.gmra.mxu0 %v510
    %v2785 = vpop.f32.mrf.mxu0
    %v2786 = vadd.f32 %v2773, %v2785
    %v2787 = vpop.f32.mrf.mxu0
    %2788 = vdwg.mxu0
    %2789 = vmatpush.bf16.msra.mxu0 %v2082
    %2790 = vmatpush.bf16.msra.mxu0 %v2080
    %2791 = vmatpush.bf16.msra.mxu0 %v2078
    %2792 = vmatpush.bf16.msra.mxu0 %v2076
    %2793 = vmatpush.bf16.msra.mxu0 %v2074
    %2794 = vmatpush.bf16.msra.mxu0 %v2072
    %2795 = vmatpush.bf16.msra.mxu0 %v2070
    %2796 = vmatpush.bf16.msra.mxu0 %v2068
    %2797 = vmatmul.bf16.gmra.mxu0 %v511
    %v2798 = vpop.f32.mrf.mxu0
    %v2799 = vadd.f32 %v2786, %v2798
    %v2800 = vpop.f32.mrf.mxu0
    %2801 = vdwg.mxu0
    %2802 = vmatpush.bf16.msra.mxu0 %v2098
    %2803 = vmatpush.bf16.msra.mxu0 %v2096
    %2804 = vmatpush.bf16.msra.mxu0 %v2094
    %2805 = vmatpush.bf16.msra.mxu0 %v2092
    %2806 = vmatpush.bf16.msra.mxu0 %v2090
    %2807 = vmatpush.bf16.msra.mxu0 %v2088
    %2808 = vmatpush.bf16.msra.mxu0 %v2086
    %2809 = vmatpush.bf16.msra.mxu0 %v2084
    %2810 = vmatmul.bf16.gmra.mxu0 %v512
    %v2811 = vpop.f32.mrf.mxu0
    %v2812 = vadd.f32 %v2799, %v2811
    %v2813 = vpop.f32.mrf.mxu0
    %2814 = vdwg.mxu0
    %2815 = vmatpush.bf16.msra.mxu0 0
    %2816 = vmatpush.bf16.msra.mxu0 0
    %2817 = vmatpush.bf16.msra.mxu0 0
    %2818 = vmatpush.bf16.msra.mxu0 0
    %2819 = vmatpush.bf16.msra.mxu0 %v2106
    %2820 = vmatpush.bf16.msra.mxu0 %v2104
    %2821 = vmatpush.bf16.msra.mxu0 %v2102
    %2822 = vmatpush.bf16.msra.mxu0 %v2100
    %2823 = vmatmul.bf16.gmra.mxu0 %v2501
    %v2824 = vpop.f32.mrf.mxu0
    %v2825 = vadd.f32 %v2812, %v2824
    %v2826 = vpop.f32.mrf.mxu0
    %2827 = vdwg.mxu0
    %2828 = vmatpush.bf16.msra.mxu0 %v1731
    %2829 = vmatpush.bf16.msra.mxu0 %v1729
    %2830 = vmatpush.bf16.msra.mxu0 %v1727
    %2831 = vmatpush.bf16.msra.mxu0 %v1725
    %2832 = vmatpush.bf16.msra.mxu0 %v1723
    %2833 = vmatpush.bf16.msra.mxu0 %v1721
    %2834 = vmatpush.bf16.msra.mxu0 %v1719
    %2835 = vmatpush.bf16.msra.mxu0 %v1717
    %2836 = vmatmul.bf16.gmra.mxu0 %v485
    %v2837 = vpop.f32.mrf.mxu0
    %v2838 = vadd.f32 %v480, %v2837
    %v2839 = vpop.f32.mrf.mxu0
    %2840 = vdwg.mxu0
    %2841 = vmatpush.bf16.msra.mxu0 %v1747
    %2842 = vmatpush.bf16.msra.mxu0 %v1745
    %2843 = vmatpush.bf16.msra.mxu0 %v1743
    %2844 = vmatpush.bf16.msra.mxu0 %v1741
    %2845 = vmatpush.bf16.msra.mxu0 %v1739
    %2846 = vmatpush.bf16.msra.mxu0 %v1737
    %2847 = vmatpush.bf16.msra.mxu0 %v1735
    %2848 = vmatpush.bf16.msra.mxu0 %v1733
    %2849 = vmatmul.bf16.gmra.mxu0 %v486
    %v2850 = vpop.f32.mrf.mxu0
    %v2851 = vadd.f32 %v2838, %v2850
    %v2852 = vpop.f32.mrf.mxu0
    %2853 = vdwg.mxu0
    %2854 = vmatpush.bf16.msra.mxu0 %v1763
    %2855 = vmatpush.bf16.msra.mxu0 %v1761
    %2856 = vmatpush.bf16.msra.mxu0 %v1759
    %2857 = vmatpush.bf16.msra.mxu0 %v1757
    %2858 = vmatpush.bf16.msra.mxu0 %v1755
    %2859 = vmatpush.bf16.msra.mxu0 %v1753
    %2860 = vmatpush.bf16.msra.mxu0 %v1751
    %2861 = vmatpush.bf16.msra.mxu0 %v1749
    %2862 = vmatmul.bf16.gmra.mxu0 %v487
    %v2863 = vpop.f32.mrf.mxu0
    %v2864 = vadd.f32 %v2851, %v2863
    %v2865 = vpop.f32.mrf.mxu0
    %2866 = vdwg.mxu0
    %2867 = vmatpush.bf16.msra.mxu0 %v1779
    %2868 = vmatpush.bf16.msra.mxu0 %v1777
    %2869 = vmatpush.bf16.msra.mxu0 %v1775
    %2870 = vmatpush.bf16.msra.mxu0 %v1773
    %2871 = vmatpush.bf16.msra.mxu0 %v1771
    %2872 = vmatpush.bf16.msra.mxu0 %v1769
    %2873 = vmatpush.bf16.msra.mxu0 %v1767
    %2874 = vmatpush.bf16.msra.mxu0 %v1765
    %2875 = vmatmul.bf16.gmra.mxu0 %v488
    %v2876 = vpop.f32.mrf.mxu0
    %v2877 = vadd.f32 %v2864, %v2876
    %v2878 = vpop.f32.mrf.mxu0
    %2879 = vdwg.mxu0
    %2880 = vmatpush.bf16.msra.mxu0 %v1795
    %2881 = vmatpush.bf16.msra.mxu0 %v1793
    %2882 = vmatpush.bf16.msra.mxu0 %v1791
    %2883 = vmatpush.bf16.msra.mxu0 %v1789
    %2884 = vmatpush.bf16.msra.mxu0 %v1787
    %2885 = vmatpush.bf16.msra.mxu0 %v1785
    %2886 = vmatpush.bf16.msra.mxu0 %v1783
    %2887 = vmatpush.bf16.msra.mxu0 %v1781
    %2888 = vmatmul.bf16.gmra.mxu0 %v489
    %v2889 = vpop.f32.mrf.mxu0
    %v2890 = vadd.f32 %v2877, %v2889
    %v2891 = vpop.f32.mrf.mxu0
    %2892 = vdwg.mxu0
    %2893 = vmatpush.bf16.msra.mxu0 %v1811
    %2894 = vmatpush.bf16.msra.mxu0 %v1809
    %2895 = vmatpush.bf16.msra.mxu0 %v1807
    %2896 = vmatpush.bf16.msra.mxu0 %v1805
    %2897 = vmatpush.bf16.msra.mxu0 %v1803
    %2898 = vmatpush.bf16.msra.mxu0 %v1801
    %2899 = vmatpush.bf16.msra.mxu0 %v1799
    %2900 = vmatpush.bf16.msra.mxu0 %v1797
    %2901 = vmatmul.bf16.gmra.mxu0 %v490
    %v2902 = vpop.f32.mrf.mxu0
    %v2903 = vadd.f32 %v2890, %v2902
    %v2904 = vpop.f32.mrf.mxu0
    %2905 = vdwg.mxu0
    %2906 = vmatpush.bf16.msra.mxu0 %v1827
    %2907 = vmatpush.bf16.msra.mxu0 %v1825
    %2908 = vmatpush.bf16.msra.mxu0 %v1823
    %2909 = vmatpush.bf16.msra.mxu0 %v1821
    %2910 = vmatpush.bf16.msra.mxu0 %v1819
    %2911 = vmatpush.bf16.msra.mxu0 %v1817
    %2912 = vmatpush.bf16.msra.mxu0 %v1815
    %2913 = vmatpush.bf16.msra.mxu0 %v1813
    %2914 = vmatmul.bf16.gmra.mxu0 %v491
    %v2915 = vpop.f32.mrf.mxu0
    %v2916 = vadd.f32 %v2903, %v2915
    %v2917 = vpop.f32.mrf.mxu0
    %2918 = vdwg.mxu0
    %2919 = vmatpush.bf16.msra.mxu0 %v1843
    %2920 = vmatpush.bf16.msra.mxu0 %v1841
    %2921 = vmatpush.bf16.msra.mxu0 %v1839
    %2922 = vmatpush.bf16.msra.mxu0 %v1837
    %2923 = vmatpush.bf16.msra.mxu0 %v1835
    %2924 = vmatpush.bf16.msra.mxu0 %v1833
    %2925 = vmatpush.bf16.msra.mxu0 %v1831
    %2926 = vmatpush.bf16.msra.mxu0 %v1829
    %2927 = vmatmul.bf16.gmra.mxu0 %v492
    %v2928 = vpop.f32.mrf.mxu0
    %v2929 = vadd.f32 %v2916, %v2928
    %v2930 = vpop.f32.mrf.mxu0
    %2931 = vdwg.mxu0
    %2932 = vmatpush.bf16.msra.mxu0 %v1859
    %2933 = vmatpush.bf16.msra.mxu0 %v1857
    %2934 = vmatpush.bf16.msra.mxu0 %v1855
    %2935 = vmatpush.bf16.msra.mxu0 %v1853
    %2936 = vmatpush.bf16.msra.mxu0 %v1851
    %2937 = vmatpush.bf16.msra.mxu0 %v1849
    %2938 = vmatpush.bf16.msra.mxu0 %v1847
    %2939 = vmatpush.bf16.msra.mxu0 %v1845
    %2940 = vmatmul.bf16.gmra.mxu0 %v495
    %v2941 = vpop.f32.mrf.mxu0
    %v2942 = vadd.f32 %v2929, %v2941
    %v2943 = vpop.f32.mrf.mxu0
    %2944 = vdwg.mxu0
    %2945 = vmatpush.bf16.msra.mxu0 %v1875
    %2946 = vmatpush.bf16.msra.mxu0 %v1873
    %2947 = vmatpush.bf16.msra.mxu0 %v1871
    %2948 = vmatpush.bf16.msra.mxu0 %v1869
    %2949 = vmatpush.bf16.msra.mxu0 %v1867
    %2950 = vmatpush.bf16.msra.mxu0 %v1865
    %2951 = vmatpush.bf16.msra.mxu0 %v1863
    %2952 = vmatpush.bf16.msra.mxu0 %v1861
    %2953 = vmatmul.bf16.gmra.mxu0 %v496
    %v2954 = vpop.f32.mrf.mxu0
    %v2955 = vadd.f32 %v2942, %v2954
    %v2956 = vpop.f32.mrf.mxu0
    %2957 = vdwg.mxu0
    %2958 = vmatpush.bf16.msra.mxu0 %v1891
    %2959 = vmatpush.bf16.msra.mxu0 %v1889
    %2960 = vmatpush.bf16.msra.mxu0 %v1887
    %2961 = vmatpush.bf16.msra.mxu0 %v1885
    %2962 = vmatpush.bf16.msra.mxu0 %v1883
    %2963 = vmatpush.bf16.msra.mxu0 %v1881
    %2964 = vmatpush.bf16.msra.mxu0 %v1879
    %2965 = vmatpush.bf16.msra.mxu0 %v1877
    %2966 = vmatmul.bf16.gmra.mxu0 %v497
    %v2967 = vpop.f32.mrf.mxu0
    %v2968 = vadd.f32 %v2955, %v2967
    %v2969 = vpop.f32.mrf.mxu0
    %2970 = vdwg.mxu0
    %2971 = vmatpush.bf16.msra.mxu0 %v1907
    %2972 = vmatpush.bf16.msra.mxu0 %v1905
    %2973 = vmatpush.bf16.msra.mxu0 %v1903
    %2974 = vmatpush.bf16.msra.mxu0 %v1901
    %2975 = vmatpush.bf16.msra.mxu0 %v1899
    %2976 = vmatpush.bf16.msra.mxu0 %v1897
    %2977 = vmatpush.bf16.msra.mxu0 %v1895
    %2978 = vmatpush.bf16.msra.mxu0 %v1893
    %2979 = vmatmul.bf16.gmra.mxu0 %v498
    %v2980 = vpop.f32.mrf.mxu0
    %v2981 = vadd.f32 %v2968, %v2980
    %v2982 = vpop.f32.mrf.mxu0
    %2983 = vdwg.mxu0
    %2984 = vmatpush.bf16.msra.mxu0 %v1923
    %2985 = vmatpush.bf16.msra.mxu0 %v1921
    %2986 = vmatpush.bf16.msra.mxu0 %v1919
    %2987 = vmatpush.bf16.msra.mxu0 %v1917
    %2988 = vmatpush.bf16.msra.mxu0 %v1915
    %2989 = vmatpush.bf16.msra.mxu0 %v1913
    %2990 = vmatpush.bf16.msra.mxu0 %v1911
    %2991 = vmatpush.bf16.msra.mxu0 %v1909
    %2992 = vmatmul.bf16.gmra.mxu0 %v499
    %v2993 = vpop.f32.mrf.mxu0
    %v2994 = vadd.f32 %v2981, %v2993
    %v2995 = vpop.f32.mrf.mxu0
    %2996 = vdwg.mxu0
    %2997 = vmatpush.bf16.msra.mxu0 %v1939
    %2998 = vmatpush.bf16.msra.mxu0 %v1937
    %2999 = vmatpush.bf16.msra.mxu0 %v1935
    %3000 = vmatpush.bf16.msra.mxu0 %v1933
    %3001 = vmatpush.bf16.msra.mxu0 %v1931
    %3002 = vmatpush.bf16.msra.mxu0 %v1929
    %3003 = vmatpush.bf16.msra.mxu0 %v1927
    %3004 = vmatpush.bf16.msra.mxu0 %v1925
    %3005 = vmatmul.bf16.gmra.mxu0 %v500
    %v3006 = vpop.f32.mrf.mxu0
    %v3007 = vadd.f32 %v2994, %v3006
    %v3008 = vpop.f32.mrf.mxu0
    %3009 = vdwg.mxu0
    %3010 = vmatpush.bf16.msra.mxu0 %v1955
    %3011 = vmatpush.bf16.msra.mxu0 %v1953
    %3012 = vmatpush.bf16.msra.mxu0 %v1951
    %3013 = vmatpush.bf16.msra.mxu0 %v1949
    %3014 = vmatpush.bf16.msra.mxu0 %v1947
    %3015 = vmatpush.bf16.msra.mxu0 %v1945
    %3016 = vmatpush.bf16.msra.mxu0 %v1943
    %3017 = vmatpush.bf16.msra.mxu0 %v1941
    %3018 = vmatmul.bf16.gmra.mxu0 %v501
    %v3019 = vpop.f32.mrf.mxu0
    %v3020 = vadd.f32 %v3007, %v3019
    %v3021 = vpop.f32.mrf.mxu0
    %3022 = vdwg.mxu0
    %3023 = vmatpush.bf16.msra.mxu0 %v1971
    %3024 = vmatpush.bf16.msra.mxu0 %v1969
    %3025 = vmatpush.bf16.msra.mxu0 %v1967
    %3026 = vmatpush.bf16.msra.mxu0 %v1965
    %3027 = vmatpush.bf16.msra.mxu0 %v1963
    %3028 = vmatpush.bf16.msra.mxu0 %v1961
    %3029 = vmatpush.bf16.msra.mxu0 %v1959
    %3030 = vmatpush.bf16.msra.mxu0 %v1957
    %3031 = vmatmul.bf16.gmra.mxu0 %v502
    %v3032 = vpop.f32.mrf.mxu0
    %v3033 = vadd.f32 %v3020, %v3032
    %v3034 = vpop.f32.mrf.mxu0
    %3035 = vdwg.mxu0
    %3036 = vmatpush.bf16.msra.mxu0 %v1987
    %3037 = vmatpush.bf16.msra.mxu0 %v1985
    %3038 = vmatpush.bf16.msra.mxu0 %v1983
    %3039 = vmatpush.bf16.msra.mxu0 %v1981
    %3040 = vmatpush.bf16.msra.mxu0 %v1979
    %3041 = vmatpush.bf16.msra.mxu0 %v1977
    %3042 = vmatpush.bf16.msra.mxu0 %v1975
    %3043 = vmatpush.bf16.msra.mxu0 %v1973
    %3044 = vmatmul.bf16.gmra.mxu0 %v505
    %v3045 = vpop.f32.mrf.mxu0
    %v3046 = vadd.f32 %v3033, %v3045
    %v3047 = vpop.f32.mrf.mxu0
    %3048 = vdwg.mxu0
    %3049 = vmatpush.bf16.msra.mxu0 %v2003
    %3050 = vmatpush.bf16.msra.mxu0 %v2001
    %3051 = vmatpush.bf16.msra.mxu0 %v1999
    %3052 = vmatpush.bf16.msra.mxu0 %v1997
    %3053 = vmatpush.bf16.msra.mxu0 %v1995
    %3054 = vmatpush.bf16.msra.mxu0 %v1993
    %3055 = vmatpush.bf16.msra.mxu0 %v1991
    %3056 = vmatpush.bf16.msra.mxu0 %v1989
    %3057 = vmatmul.bf16.gmra.mxu0 %v506
    %v3058 = vpop.f32.mrf.mxu0
    %v3059 = vadd.f32 %v3046, %v3058
    %v3060 = vpop.f32.mrf.mxu0
    %3061 = vdwg.mxu0
    %3062 = vmatpush.bf16.msra.mxu0 %v2019
    %3063 = vmatpush.bf16.msra.mxu0 %v2017
    %3064 = vmatpush.bf16.msra.mxu0 %v2015
    %3065 = vmatpush.bf16.msra.mxu0 %v2013
    %3066 = vmatpush.bf16.msra.mxu0 %v2011
    %3067 = vmatpush.bf16.msra.mxu0 %v2009
    %3068 = vmatpush.bf16.msra.mxu0 %v2007
    %3069 = vmatpush.bf16.msra.mxu0 %v2005
    %3070 = vmatmul.bf16.gmra.mxu0 %v507
    %v3071 = vpop.f32.mrf.mxu0
    %v3072 = vadd.f32 %v3059, %v3071
    %v3073 = vpop.f32.mrf.mxu0
    %3074 = vdwg.mxu0
    %3075 = vmatpush.bf16.msra.mxu0 %v2035
    %3076 = vmatpush.bf16.msra.mxu0 %v2033
    %3077 = vmatpush.bf16.msra.mxu0 %v2031
    %3078 = vmatpush.bf16.msra.mxu0 %v2029
    %3079 = vmatpush.bf16.msra.mxu0 %v2027
    %3080 = vmatpush.bf16.msra.mxu0 %v2025
    %3081 = vmatpush.bf16.msra.mxu0 %v2023
    %3082 = vmatpush.bf16.msra.mxu0 %v2021
    %3083 = vmatmul.bf16.gmra.mxu0 %v508
    %v3084 = vpop.f32.mrf.mxu0
    %v3085 = vadd.f32 %v3072, %v3084
    %v3086 = vpop.f32.mrf.mxu0
    %3087 = vdwg.mxu0
    %3088 = vmatpush.bf16.msra.mxu0 %v2051
    %3089 = vmatpush.bf16.msra.mxu0 %v2049
    %3090 = vmatpush.bf16.msra.mxu0 %v2047
    %3091 = vmatpush.bf16.msra.mxu0 %v2045
    %3092 = vmatpush.bf16.msra.mxu0 %v2043
    %3093 = vmatpush.bf16.msra.mxu0 %v2041
    %3094 = vmatpush.bf16.msra.mxu0 %v2039
    %3095 = vmatpush.bf16.msra.mxu0 %v2037
    %3096 = vmatmul.bf16.gmra.mxu0 %v509
    %v3097 = vpop.f32.mrf.mxu0
    %v3098 = vadd.f32 %v3085, %v3097
    %v3099 = vpop.f32.mrf.mxu0
    %3100 = vdwg.mxu0
    %3101 = vmatpush.bf16.msra.mxu0 %v2067
    %3102 = vmatpush.bf16.msra.mxu0 %v2065
    %3103 = vmatpush.bf16.msra.mxu0 %v2063
    %3104 = vmatpush.bf16.msra.mxu0 %v2061
    %3105 = vmatpush.bf16.msra.mxu0 %v2059
    %3106 = vmatpush.bf16.msra.mxu0 %v2057
    %3107 = vmatpush.bf16.msra.mxu0 %v2055
    %3108 = vmatpush.bf16.msra.mxu0 %v2053
    %3109 = vmatmul.bf16.gmra.mxu0 %v510
    %v3110 = vpop.f32.mrf.mxu0
    %v3111 = vadd.f32 %v3098, %v3110
    %v3112 = vpop.f32.mrf.mxu0
    %3113 = vdwg.mxu0
    %3114 = vmatpush.bf16.msra.mxu0 %v2083
    %3115 = vmatpush.bf16.msra.mxu0 %v2081
    %3116 = vmatpush.bf16.msra.mxu0 %v2079
    %3117 = vmatpush.bf16.msra.mxu0 %v2077
    %3118 = vmatpush.bf16.msra.mxu0 %v2075
    %3119 = vmatpush.bf16.msra.mxu0 %v2073
    %3120 = vmatpush.bf16.msra.mxu0 %v2071
    %3121 = vmatpush.bf16.msra.mxu0 %v2069
    %3122 = vmatmul.bf16.gmra.mxu0 %v511
    %v3123 = vpop.f32.mrf.mxu0
    %v3124 = vadd.f32 %v3111, %v3123
    %v3125 = vpop.f32.mrf.mxu0
    %3126 = vdwg.mxu0
    %3127 = vmatpush.bf16.msra.mxu0 %v2099
    %3128 = vmatpush.bf16.msra.mxu0 %v2097
    %3129 = vmatpush.bf16.msra.mxu0 %v2095
    %3130 = vmatpush.bf16.msra.mxu0 %v2093
    %3131 = vmatpush.bf16.msra.mxu0 %v2091
    %3132 = vmatpush.bf16.msra.mxu0 %v2089
    %3133 = vmatpush.bf16.msra.mxu0 %v2087
    %3134 = vmatpush.bf16.msra.mxu0 %v2085
    %3135 = vmatmul.bf16.gmra.mxu0 %v512
    %v3136 = vpop.f32.mrf.mxu0
    %v3137 = vadd.f32 %v3124, %v3136
    %v3138 = vpop.f32.mrf.mxu0
    %3139 = vdwg.mxu0
    %3140 = vmatpush.bf16.msra.mxu0 0
    %3141 = vmatpush.bf16.msra.mxu0 0
    %3142 = vmatpush.bf16.msra.mxu0 0
    %3143 = vmatpush.bf16.msra.mxu0 0
    %3144 = vmatpush.bf16.msra.mxu0 %v2107
    %3145 = vmatpush.bf16.msra.mxu0 %v2105
    %3146 = vmatpush.bf16.msra.mxu0 %v2103
    %3147 = vmatpush.bf16.msra.mxu0 %v2101
    %3148 = vmatmul.bf16.gmra.mxu0 %v2501
    %v3149 = vpop.f32.mrf.mxu0
    %v3150 = vadd.f32 %v3137, %v3149
    %v3151 = vpop.f32.mrf.mxu0
    %3152 = vdwg.mxu0
    %v3153 = vmax.f32 %v2825, 0.0
    %v3154 = vmax.f32 %v3150, 0.0
    %v3155 = vpack.c.bf16 %v3153, %v3153
    %v3156 = vpack.c.bf16 %v3154, %v3154
    %v3157 = vld [vmem:[#allocation7] sm:$0xf]
    %v3158 = vld [vmem:[#allocation7 + $0x4] sm:$0xf]
    %v3159 = vld [vmem:[#allocation7 + $0x8] sm:$0xf]
    %v3160 = vld [vmem:[#allocation7 + $0xc] sm:$0xf]
    %v3161 = vld [vmem:[#allocation7 + $0x10] sm:$0xf]
    %v3162 = vld [vmem:[#allocation7 + $0x14] sm:$0xf]
    %v3163 = vld [vmem:[#allocation7 + $0x18] sm:$0xf]
    %v3164 = vld [vmem:[#allocation7 + $0x1c] sm:$0xf]
    %v3165 = vld [vmem:[#allocation7 + $0x20] sm:$0xf]
    %v3166 = vld [vmem:[#allocation7 + $0x24] sm:$0xf]
    %v3167 = vld [vmem:[#allocation7 + $0x28] sm:$0xf]
    %v3168 = vld [vmem:[#allocation7 + $0x2c] sm:$0xf]
    %v3169 = vld [vmem:[#allocation7 + $0x30] sm:$0xf]
    %v3170 = vld [vmem:[#allocation7 + $0x34] sm:$0xf]
    %v3171 = vld [vmem:[#allocation7 + $0x38] sm:$0xf]
    %v3172 = vld [vmem:[#allocation7 + $0x3c] sm:$0xf]
    %v3173 = vld [vmem:[#allocation7 + $0x40] sm:$0xf]
    %v3174 = vld [vmem:[#allocation7 + $0x44] sm:$0xf]
    %v3175 = vld [vmem:[#allocation7 + $0x48] sm:$0xf]
    %v3176 = vld [vmem:[#allocation7 + $0x4c] sm:$0xf]
    %v3177 = vld [vmem:[#allocation7 + $0x50] sm:$0xf]
    %v3178 = vld [vmem:[#allocation7 + $0x54] sm:$0xf]
    %v3179 = vld [vmem:[#allocation7 + $0x58] sm:$0xf]
    %v3180 = vld [vmem:[#allocation7 + $0x5c] sm:$0xf]
    %v3181 = vld [vmem:[#allocation7 + $0x60] sm:$0xf]
    %v3182 = vld [vmem:[#allocation7 + $0x64] sm:$0xf]
    %v3183 = vld [vmem:[#allocation7 + $0x68] sm:$0xf]
    %v3184 = vld [vmem:[#allocation7 + $0x6c] sm:$0xf]
    %v3185 = vld [vmem:[#allocation7 + $0x70] sm:$0xf]
    %v3186 = vld [vmem:[#allocation7 + $0x74] sm:$0xf]
    %v3187 = vld [vmem:[#allocation7 + $0x78] sm:$0xf]
    %v3188 = vld [vmem:[#allocation7 + $0x7c] sm:$0xf]
    %v3189 = vld [vmem:[#allocation8] sm:$0x1]
    %v3191 = vperm.slane %v3189, 0
    %v3225 = vunpack.c.l.b16 %v3157
    %v3226 = vunpack.c.l.b16 %v3158
    %v3227 = vunpack.c.l.b16 %v3159
    %v3228 = vunpack.c.l.b16 %v3160
    %v3229 = vunpack.c.l.b16 %v3161
    %v3230 = vunpack.c.l.b16 %v3162
    %v3231 = vunpack.c.l.b16 %v3163
    %v3232 = vunpack.c.l.b16 %v3164
    %v3233 = vunpack.c.l.b16 %v3165
    %v3234 = vunpack.c.l.b16 %v3166
    %v3235 = vunpack.c.l.b16 %v3167
    %v3236 = vunpack.c.l.b16 %v3168
    %v3237 = vunpack.c.l.b16 %v3169
    %v3238 = vunpack.c.l.b16 %v3170
    %v3239 = vunpack.c.l.b16 %v3171
    %v3240 = vunpack.c.l.b16 %v3172
    %v3241 = vunpack.c.l.b16 %v3173
    %v3242 = vunpack.c.l.b16 %v3174
    %v3243 = vunpack.c.l.b16 %v3175
    %v3244 = vunpack.c.l.b16 %v3176
    %v3245 = vunpack.c.l.b16 %v3177
    %v3246 = vunpack.c.l.b16 %v3178
    %v3247 = vunpack.c.l.b16 %v3179
    %v3248 = vunpack.c.l.b16 %v3180
    %v3249 = vunpack.c.l.b16 %v3181
    %v3250 = vunpack.c.l.b16 %v3182
    %v3251 = vunpack.c.l.b16 %v3183
    %v3252 = vunpack.c.l.b16 %v3184
    %v3253 = vunpack.c.l.b16 %v3185
    %v3254 = vunpack.c.l.b16 %v3186
    %v3255 = vunpack.c.l.b16 %v3187
    %v3256 = vunpack.c.l.b16 %v3188
    %v3257 = vpack.c.b16 %v3226, %v3225
    %v3258 = vpack.c.b16 %v3228, %v3227
    %v3259 = vpack.c.b16 %v3230, %v3229
    %v3260 = vpack.c.b16 %v3232, %v3231
    %v3261 = vpack.c.b16 %v3234, %v3233
    %v3262 = vpack.c.b16 %v3236, %v3235
    %v3263 = vpack.c.b16 %v3238, %v3237
    %v3264 = vpack.c.b16 %v3240, %v3239
    %v3265 = vpack.c.b16 %v3242, %v3241
    %v3266 = vpack.c.b16 %v3244, %v3243
    %v3267 = vpack.c.b16 %v3246, %v3245
    %v3268 = vpack.c.b16 %v3248, %v3247
    %v3269 = vpack.c.b16 %v3250, %v3249
    %v3270 = vpack.c.b16 %v3252, %v3251
    %v3271 = vpack.c.b16 %v3254, %v3253
    %v3272 = vpack.c.b16 %v3256, %v3255
    %3289 = vmatpush.bf16.msra.mxu0 %v3264
    %3290 = vmatpush.bf16.msra.mxu0 %v3263
    %3291 = vmatpush.bf16.msra.mxu0 %v3262
    %3292 = vmatpush.bf16.msra.mxu0 %v3261
    %3293 = vmatpush.bf16.msra.mxu0 %v3260
    %3294 = vmatpush.bf16.msra.mxu0 %v3259
    %3295 = vmatpush.bf16.msra.mxu0 %v3258
    %3296 = vmatpush.bf16.msra.mxu0 %v3257
    %3297 = vmatmul.bf16.gmra.mxu0 %v3155
    %v3298 = vpop.f32.mrf.mxu0
    %v3299 = vadd.f32 %v3191, %v3298
    %v3300 = vpop.f32.mrf.mxu0
    %3301 = vdwg.mxu0
    %3302 = vmatpush.bf16.msra.mxu0 %v3272
    %3303 = vmatpush.bf16.msra.mxu0 %v3271
    %3304 = vmatpush.bf16.msra.mxu0 %v3270
    %3305 = vmatpush.bf16.msra.mxu0 %v3269
    %3306 = vmatpush.bf16.msra.mxu0 %v3268
    %3307 = vmatpush.bf16.msra.mxu0 %v3267
    %3308 = vmatpush.bf16.msra.mxu0 %v3266
    %3309 = vmatpush.bf16.msra.mxu0 %v3265
    %3310 = vmatmul.bf16.gmra.mxu0 %v3156
    %v3311 = vpop.f32.mrf.mxu0
    %v3312 = vadd.f32 %v3299, %v3311
    %v3313 = vpop.f32.mrf.mxu0
    %3314 = vdwg.mxu0
    %3315 = vst [vmem:[#allocation10] sm:$0x3] %v3312
    // Predicated region
    $region38: #{cnn_encoder.3} parent=1 // pred_check
      _
    $region39: #{cnn_encoder.3} parent=1 // pred_check_branch
      %3317 = sbr.rel (0) target = $region41
    $region40: #{cnn_encoder.3} parent=1 // pred_region
      %3319 = vsyncadd [#allocation4], 0
      %s3321 = sshll.u32 [#allocation10], 4
      %s3322 = int_to_ptr.vmem [resolvable:$true] %s3321
      %s3323 = sshll.u32 %s5, 4
      %s3324 = int_to_ptr.hbm [resolvable:$true] %s3323
      %3326 = dma.vmem_to_hbm [thread:$0]  %s3322, 32, %s3324, [#allocation4]
    $region41: #{cnn_encoder.3} parent=1 // pred_fallthru
      _
    // Predicated region
    $region42: #{cnn_encoder.3} parent=1 // pred_check
      _
    $region43: #{cnn_encoder.3} parent=1 // pred_check_branch
      %3328 = sbr.rel (0) target = $region45
    $region44: #{cnn_encoder.3} parent=1 // pred_region
      %3330 = dma.done [#allocation4], 32
    $region45: #{cnn_encoder.3} parent=1 // pred_fallthru
      _
    %3331 = vsyncpa [#allocation3], 1
    %3332 = vsyncpa [#allocation6], 1
    %3333 = vsyncpa [#allocation9], 1
    %3334 = vsyncpa [#allocation4], 1

</llo_original>
